<compile_context>
chip_gen: v6e
topology: v6e:2x2x1
jax: 0.10.0
libtpu: 0.0.40
codegen_flags: <defaults>
</compile_context>

<pallas_src>
import functools
import numpy as np
import jax
import jax.numpy as jnp
from jax.experimental import pallas as pl
from jax.experimental.pallas import tpu as pltpu

EPS = 1e-5              # FP32LayerNorm eps
NUM_HEADS = 4           # small synthetic config
MXU_DTYPE = jnp.bfloat16   # matmul-operand dtype (fp32 accumulate everywhere)


def _ln(t):
    # FP32 LayerNorm (no affine), reduction over the last axis.
    m = jnp.mean(t, axis=-1, keepdims=True)
    v = jnp.mean((t - m) ** 2, axis=-1, keepdims=True)
    return (t - m) * jax.lax.rsqrt(v + EPS)


def _mm(a, b):
    # bf16-operand MXU matmul with fp32 accumulation.
    return jnp.dot(a.astype(MXU_DTYPE), b.astype(MXU_DTYPE),
                   preferred_element_type=jnp.float32)


# ----------------------------- fused TransformerBlock kernel -----------------------------

def _block_kernel(x_ref, mod_ref,
                  wqkv_ref, bqkv_ref, wo3_ref, bo_ref,
                  rot_ref, cos_ref, sin_ref,
                  w1_ref, b1_ref, w2_ref, b2_ref,
                  out_ref, *, s_txt):
    S, D = x_ref.shape[1], x_ref.shape[2]
    H, hd = wo3_ref.shape[0], wo3_ref.shape[1]

    x = x_ref[0]                      # (S, D) fp32 residual stream, rows [0, s_txt) = text
    mod = mod_ref[0]                  # (12, D) fp32 AdaLN-Zero chunks (img/cond interleaved)

    # ---- per-row (text vs image) modulation: static row mask + VPU select, no concats ----
    is_txt = jax.lax.broadcasted_iota(jnp.int32, (S, D), 0) < s_txt

    def mod_row(img_idx):             # img chunk at img_idx, matching cond chunk at img_idx+1
        return jnp.where(is_txt, mod[img_idx + 1:img_idx + 2, :], mod[img_idx:img_idx + 1, :])

    shift_msa, scale_msa, gate_msa = mod_row(0), mod_row(2), mod_row(4)
    shift_mlp, scale_mlp, gate_mlp = mod_row(6), mod_row(8), mod_row(10)

    # ---- attention branch: FP32 LN + AdaLN modulate ----
    xm = _ln(x) * (1.0 + scale_msa) + shift_msa            # (S, D)

    # ---- fused QKV projection: one (S, D) @ (D, 3D) bf16 matmul ----
    qkv = _mm(xm, wqkv_ref[...]) + bqkv_ref[...]           # (S, 3D) fp32

    # ---- head-stacked (H*S, hd) views: one-time split, everything below is head-batched ----
    def stack_heads(base):
        return jnp.concatenate(
            [qkv[:, base + h * hd: base + (h + 1) * hd] for h in range(H)], axis=0)

    q2 = stack_heads(0)               # (H*S, hd)
    k2 = stack_heads(D)
    v2 = stack_heads(2 * D)

    # ---- qk FP32 LayerNorm over head_dim: ONE reduction pass for all heads ----
    q2 = _ln(q2)
    k2 = _ln(k2)

    # ---- RoPE: rotate-half as an exact fp32 signed-permutation matmul (identity on text rows) ----
    cos = cos_ref[...]                # (H*S, hd)
    sin = sin_ref[...]                # (H*S, hd)
    rot = rot_ref[...]                # (hd, hd) signed permutation, fp32 (exact)
    q2 = q2 * cos + jnp.dot(q2, rot, preferred_element_type=jnp.float32) * sin
    k2 = k2 * cos + jnp.dot(k2, rot, preferred_element_type=jnp.float32) * sin

    # ---- head-batched attention: a single dot_general per stage ----
    scale = jnp.float32(1.0 / np.sqrt(hd))
    q3 = (q2 * scale).reshape(H, S, hd).astype(MXU_DTYPE)   # fold softmax scale into q
    k3 = k2.reshape(H, S, hd).astype(MXU_DTYPE)
    v3 = v2.reshape(H, S, hd).astype(MXU_DTYPE)

    s = jnp.einsum('hqd,hkd->hqk', q3, k3,
                   preferred_element_type=jnp.float32)      # (H, S, S)
    s = s - jnp.max(s, axis=-1, keepdims=True)
    p = jnp.exp(s)
    p = p * pl.reciprocal(jnp.sum(p, axis=-1, keepdims=True), approx=True)
    o3 = jnp.einsum('hqk,hkd->hqd', p.astype(MXU_DTYPE), v3,
                    preferred_element_type=jnp.float32)     # (H, S, hd)

    # ---- output projection folded over heads (no head concat): attn = sum_h o_h @ Wo[h] ----
    attn = jnp.zeros((S, D), jnp.float32)
    for h in range(H):                 # H=4 static unroll; fp32 accumulation
        attn = attn + jnp.dot(o3[h].astype(MXU_DTYPE), wo3_ref[h],
                              preferred_element_type=jnp.float32)
    attn = attn + bo_ref[...]

    # ---- gated attention residual ----
    x1 = x + attn * gate_msa

    # ---- MLP branch: FP32 LN + modulate + FeedForward (gelu-tanh) + gated residual ----
    xm2 = _ln(x1) * (1.0 + scale_mlp) + shift_mlp
    hmid = jax.nn.gelu(_mm(xm2, w1_ref[...]) + b1_ref[...], approximate=True)
    y = _mm(hmid, w2_ref[...]) + b2_ref[...]                # (S, D)

    out_ref[0] = x1 + y * gate_mlp


# ----------------------------- host-side wrapper -----------------------------

def prepare_params(params):
    """One-time (outside jit) weight fusion + dtype prep for the kernel."""
    D = params["wq"].shape[0]
    H = NUM_HEADS
    hd = D // H
    DI = params["w1"].shape[1]
    return {
        "ada_w": params["ada_w"].astype(jnp.float32),
        "ada_b": params["ada_b"].astype(jnp.float32),
        "wqkv": jnp.concatenate([params["wq"], params["wk"], params["wv"]],
                                axis=1).astype(MXU_DTYPE),
        "bqkv": jnp.concatenate([params["bq"], params["bk"], params["bv"]]
                                ).reshape(1, 3 * D).astype(jnp.float32),
        "wo3": params["wo"].reshape(H, hd, D).astype(MXU_DTYPE),   # heads-major Wo
        "bo": params["bo"].reshape(1, D).astype(jnp.float32),
        "w1": params["w1"].astype(MXU_DTYPE),
        "b1": params["b1"].reshape(1, DI).astype(jnp.float32),
        "w2": params["w2"].astype(MXU_DTYPE),
        "b2": params["b2"].reshape(1, D).astype(jnp.float32),
    }


def transformer_block(p, hidden_states, encoder_hidden_states, time_embed,
                      rope_cos, rope_sin):
    f32 = jnp.float32
    B, s_img, D = hidden_states.shape
    s_txt = encoder_hidden_states.shape[1]
    S = s_txt + s_img
    H = NUM_HEADS
    hd = D // H
    half = hd // 2
    DI = p["w1"].shape[1]

    # AdaLN-Zero projection in plain XLA (tiny GEMV; keeps the (T, 12D) weight out of VMEM).
    emb = time_embed.astype(f32) @ p["ada_w"] + p["ada_b"][None, :]       # (B, 12D)
    mod = emb.reshape(B, 12, D)

    # Single concatenated [text ; image] residual stream.
    x = jnp.concatenate([encoder_hidden_states, hidden_states], axis=1).astype(f32)

    # RoPE tables on the concatenated sequence (text rows = identity rotation),
    # tiled to the head-stacked (H*S, hd) layout used inside the kernel.
    cos_seq = jnp.concatenate([jnp.ones((s_txt, hd), f32), rope_cos.astype(f32)], axis=0)
    sin_seq = jnp.concatenate([jnp.zeros((s_txt, hd), f32), rope_sin.astype(f32)], axis=0)
    cos_hs = jnp.tile(cos_seq, (H, 1))            # (H*S, hd)
    sin_hs = jnp.tile(sin_seq, (H, 1))

    # rotate-half as a signed permutation matrix: rotated = x @ rot == [-imag, real]
    rot_np = np.zeros((hd, hd), np.float32)
    rot_np[np.arange(half) + half, np.arange(half)] = -1.0
    rot_np[np.arange(half), np.arange(half) + half] = 1.0
    rot = jnp.asarray(rot_np)

    def batched(shape):
        zeros = (0,) * (len(shape) - 1)
        return pl.BlockSpec(shape, lambda b, _z=zeros: (b,) + _z)

    def shared(shape):
        zeros = (0,) * len(shape)
        return pl.BlockSpec(shape, lambda b, _z=zeros: _z)

    in_specs = [
        batched((1, S, D)),            # x (concatenated residual stream)
        batched((1, 12, D)),           # AdaLN-Zero modulation chunks
        shared((D, 3 * D)), shared((1, 3 * D)),      # fused QKV weight / bias
        shared((H, hd, D)), shared((1, D)),          # heads-major Wo / bias
        shared((hd, hd)),                            # rotate-half permutation
        shared((H * S, hd)), shared((H * S, hd)),    # cos / sin tables
        shared((D, DI)), shared((1, DI)),            # FF in
        shared((DI, D)), shared((1, D)),             # FF out
    ]
    out_specs = batched((1, S, D))

    # Advisory cost hint for the fused custom call.
    flops = B * (2 * S * D * 3 * D            # QKV
                 + 2 * 2 * (H * S) * hd * hd  # RoPE rotations
                 + 2 * 2 * H * S * S * hd     # QK^T + PV
                 + 2 * S * D * D              # output projection
                 + 2 * 2 * S * D * DI)        # FeedForward
    transcendentals = B * (H * S * S + S * DI + 4 * S)
    bytes_accessed = (2 * B * S * D * 4 + B * 12 * D * 4
                      + (D * 3 * D + H * hd * D + D * DI + DI * D) * 2
                      + (3 * D + 2 * D + DI) * 4
                      + 2 * H * S * hd * 4 + hd * hd * 4)

    out = pl.pallas_call(
        functools.partial(_block_kernel, s_txt=s_txt),
        grid=(B,),
        in_specs=in_specs,
        out_specs=out_specs,
        out_shape=jax.ShapeDtypeStruct((B, S, D), f32),
        compiler_params=pltpu.CompilerParams(
            # NOTE: add a second parallel axis (S-tiles / head groups) for v7x's 2 TCs
            # once sequence tiling exists; at B>=2 even, batch already feeds both cores.
            dimension_semantics=("parallel",),
            vmem_limit_bytes=32 * 1024 * 1024,
        ),
        cost_estimate=pl.CostEstimate(flops=flops,
                                      transcendentals=transcendentals,
                                      bytes_accessed=bytes_accessed),
    )(x, mod, p["wqkv"], p["bqkv"], p["wo3"], p["bo"],
      rot, cos_hs, sin_hs, p["w1"], p["b1"], p["w2"], p["b2"])

    # split back into (image hidden_states, encoder_hidden_states) -- cheap XLA slices
    return out[:, s_txt:], out[:, :s_txt]


# ----------------------------- pure-JAX fp32 reference (verification) -----------------------------

def reference(params, hs, ehs, temb, rope_cos, rope_sin):
    def ln(x):
        m = x.mean(-1, keepdims=True)
        v = ((x - m) ** 2).mean(-1, keepdims=True)
        return (x - m) / jnp.sqrt(v + EPS)

    B, s_img, D = hs.shape
    s_txt = ehs.shape[1]
    S = s_txt + s_img
    H = NUM_HEADS
    hd = D // H

    emb = temb @ params["ada_w"] + params["ada_b"]
    (shift_msa, c_shift_msa, scale_msa, c_scale_msa, gate_msa, c_gate_msa,
     shift_mlp, c_shift_mlp, scale_mlp, c_scale_mlp,
     gate_mlp, c_gate_mlp) = jnp.split(emb, 12, axis=1)

    nh = ln(hs) * (1 + scale_msa[:, None]) + shift_msa[:, None]
    ne = ln(ehs) * (1 + c_scale_msa[:, None]) + c_shift_msa[:, None]

    x = jnp.concatenate([ne, nh], axis=1)
    q = (x @ params["wq"] + params["bq"]).reshape(B, S, H, hd).transpose(0, 2, 1, 3)
    k = (x @ params["wk"] + params["bk"]).reshape(B, S, H, hd).transpose(0, 2, 1, 3)
    v = (x @ params["wv"] + params["bv"]).reshape(B, S, H, hd).transpose(0, 2, 1, 3)
    q, k = ln(q), ln(k)

    def rope(t):
        real, imag = t[..., :hd // 2], t[..., hd // 2:]
        rot = jnp.concatenate([-imag, real], axis=-1)
        return t * rope_cos[None, None] + rot * rope_sin[None, None]

    q = q.at[:, :, s_txt:].set(rope(q[:, :, s_txt:]))
    k = k.at[:, :, s_txt:].set(rope(k[:, :, s_txt:]))

    s = jnp.einsum("bhqd,bhkd->bhqk", q, k) / jnp.sqrt(jnp.float32(hd))
    p = jax.nn.softmax(s, axis=-1)
    o = jnp.einsum("bhqk,bhkd->bhqd", p, v).transpose(0, 2, 1, 3).reshape(B, S, D)
    o = o @ params["wo"] + params["bo"]
    ae, ah = o[:, :s_txt], o[:, s_txt:]

    hs2 = hs + ah * gate_msa[:, None]
    ehs2 = ehs + ae * c_gate_msa[:, None]

    nh = ln(hs2) * (1 + scale_mlp[:, None]) + shift_mlp[:, None]
    ne = ln(ehs2) * (1 + c_scale_mlp[:, None]) + c_shift_mlp[:, None]

    def ff(t):
        h = jax.nn.gelu(t @ params["w1"] + params["b1"], approximate=True)
        return h @ params["w2"] + params["b2"]

    hs3 = hs2 + ff(nh) * gate_mlp[:, None]
    ehs3 = ehs2 + ff(ne) * c_gate_mlp[:, None]
    return hs3, ehs3


# ----------------------------- main -----------------------------

if __name__ == "__main__":
    B, S_IMG, S_TXT = 2, 16, 8
    D, T_DIM = 32, 16
    H = NUM_HEADS
    HD = D // H
    DI = 4 * D

    key = jax.random.PRNGKey(0)
    ks = jax.random.split(key, 20)

    def init(k, shape, scale=0.02):
        return (jax.random.normal(k, shape, jnp.float32) * scale).astype(jnp.float32)

    params = {
        "ada_w": init(ks[0], (T_DIM, 12 * D)), "ada_b": init(ks[1], (12 * D,)),
        "wq": init(ks[2], (D, D)), "bq": init(ks[3], (D,)),
        "wk": init(ks[4], (D, D)), "bk": init(ks[5], (D,)),
        "wv": init(ks[6], (D, D)), "bv": init(ks[7], (D,)),
        "wo": init(ks[8], (D, D)), "bo": init(ks[9], (D,)),
        "w1": init(ks[10], (D, DI)), "b1": init(ks[11], (DI,)),
        "w2": init(ks[12], (DI, D)), "b2": init(ks[13], (D,)),
    }

    hidden_states = jax.random.normal(ks[14], (B, S_IMG, D), jnp.float32)
    encoder_hidden_states = jax.random.normal(ks[15], (B, S_TXT, D), jnp.float32)
    time_embed = jax.random.normal(ks[16], (B, T_DIM), jnp.float32)

    # rotary embeddings for image tokens: (S_IMG, head_dim) cos / sin tables
    half = HD // 2
    freqs = 1.0 / (10000.0 ** (jnp.arange(half, dtype=jnp.float32) / half))
    angles = jnp.arange(S_IMG, dtype=jnp.float32)[:, None] * freqs[None, :]
    rope_cos = jnp.concatenate([jnp.cos(angles), jnp.cos(angles)], axis=-1)
    rope_sin = jnp.concatenate([jnp.sin(angles), jnp.sin(angles)], axis=-1)

    prepared = prepare_params(params)          # weight fusion + bf16 cast, outside jit
    run = jax.jit(transformer_block)
    out_h, out_e = run(prepared, hidden_states, encoder_hidden_states,
                       time_embed, rope_cos, rope_sin)
    jax.block_until_ready((out_h, out_e))

    ref_h, ref_e = reference(params, hidden_states, encoder_hidden_states,
                             time_embed, rope_cos, rope_sin)
    # bf16 MXU operands vs fp32 reference -> modest tolerance (observed error << 1e-3).
    np.testing.assert_allclose(np.asarray(out_h), np.asarray(ref_h), rtol=1e-3, atol=1e-3)
    np.testing.assert_allclose(np.asarray(out_e), np.asarray(ref_e), rtol=1e-3, atol=1e-3)

    print("KERNEL_OK")
</pallas_src>

<mosaic_0001>
module attributes {stable_mosaic.version = 11 : i64} {
  func.func @_block_kernel(%arg0: i32, %arg1: memref<1x24x32xf32, #tpu.memory_space<vmem>>, %arg2: memref<1x12x32xf32, #tpu.memory_space<vmem>>, %arg3: memref<32x96xbf16, #tpu.memory_space<vmem>>, %arg4: memref<1x96xf32, #tpu.memory_space<vmem>>, %arg5: memref<4x8x32xbf16, #tpu.memory_space<vmem>>, %arg6: memref<1x32xf32, #tpu.memory_space<vmem>>, %arg7: memref<8x8xf32, #tpu.memory_space<vmem>>, %arg8: memref<96x8xf32, #tpu.memory_space<vmem>>, %arg9: memref<96x8xf32, #tpu.memory_space<vmem>>, %arg10: memref<32x128xbf16, #tpu.memory_space<vmem>>, %arg11: memref<1x128xf32, #tpu.memory_space<vmem>>, %arg12: memref<128x32xbf16, #tpu.memory_space<vmem>>, %arg13: memref<1x32xf32, #tpu.memory_space<vmem>>, %arg14: memref<1x24x32xf32, #tpu.memory_space<vmem>>) attributes {dimension_semantics = [#tpu.dimension_semantics<parallel>], iteration_bounds = array<i64: 2>, scalar_prefetch = 0 : i64, scratch_operands = 0 : i64, tpu.core_type = #tpu.core_type<tc>, window_params = [{transform_indices = @transform_0, window_bounds = array<i64: 1, 24, 32>}, {transform_indices = @transform_1, window_bounds = array<i64: 1, 12, 32>}, {pipeline_mode = #tpu.pipeline_mode<synchronous>, transform_indices = @transform_2, window_bounds = array<i64: 32, 96>}, {pipeline_mode = #tpu.pipeline_mode<synchronous>, transform_indices = @transform_3, window_bounds = array<i64: 1, 96>}, {pipeline_mode = #tpu.pipeline_mode<synchronous>, transform_indices = @transform_4, window_bounds = array<i64: 4, 8, 32>}, {pipeline_mode = #tpu.pipeline_mode<synchronous>, transform_indices = @transform_5, window_bounds = array<i64: 1, 32>}, {pipeline_mode = #tpu.pipeline_mode<synchronous>, transform_indices = @transform_6, window_bounds = array<i64: 8, 8>}, {pipeline_mode = #tpu.pipeline_mode<synchronous>, transform_indices = @transform_7, window_bounds = array<i64: 96, 8>}, {pipeline_mode = #tpu.pipeline_mode<synchronous>, transform_indices = @transform_8, window_bounds = array<i64: 96, 8>}, {pipeline_mode = #tpu.pipeline_mode<synchronous>, transform_indices = @transform_9, window_bounds = array<i64: 32, 128>}, {pipeline_mode = #tpu.pipeline_mode<synchronous>, transform_indices = @transform_10, window_bounds = array<i64: 1, 128>}, {pipeline_mode = #tpu.pipeline_mode<synchronous>, transform_indices = @transform_11, window_bounds = array<i64: 128, 32>}, {pipeline_mode = #tpu.pipeline_mode<synchronous>, transform_indices = @transform_12, window_bounds = array<i64: 1, 32>}, {transform_indices = @transform_13, window_bounds = array<i64: 1, 24, 32>}]} {
    %c0 = arith.constant 0 : index
    %c0_0 = arith.constant 0 : index
    %c0_1 = arith.constant 0 : index
    %0 = vector.load %arg1[%c0, %c0_0, %c0_1] : memref<1x24x32xf32, #tpu.memory_space<vmem>>, vector<1x24x32xf32>
    %1 = vector.shape_cast %0 : vector<1x24x32xf32> to vector<24x32xf32>
    %c0_2 = arith.constant 0 : index
    %c0_3 = arith.constant 0 : index
    %c0_4 = arith.constant 0 : index
    %2 = vector.load %arg2[%c0_2, %c0_3, %c0_4] : memref<1x12x32xf32, #tpu.memory_space<vmem>>, vector<1x12x32xf32>
    %3 = vector.shape_cast %2 : vector<1x12x32xf32> to vector<12x32xf32>
    %4 = tpu.iota {dimensions = array<i32: 0>} : vector<24x32xi32>
    %c8_i32 = arith.constant 8 : i32
    %5 = vector.broadcast %c8_i32 : i32 to vector<24x32xi32>
    %6 = arith.cmpi slt, %4, %5 : vector<24x32xi32>
    %7 = vector.extract_strided_slice %3 {offsets = [1, 0], sizes = [1, 32], strides = [1, 1]} : vector<12x32xf32> to vector<1x32xf32>
    %8 = vector.extract_strided_slice %3 {offsets = [0, 0], sizes = [1, 32], strides = [1, 1]} : vector<12x32xf32> to vector<1x32xf32>
    %9 = vector.shape_cast %7 : vector<1x32xf32> to vector<1x32xf32>
    %10 = vector.broadcast %9 : vector<1x32xf32> to vector<24x32xf32>
    %11 = vector.shape_cast %8 : vector<1x32xf32> to vector<1x32xf32>
    %12 = vector.broadcast %11 : vector<1x32xf32> to vector<24x32xf32>
    %13 = arith.select %6, %10, %12 : vector<24x32xi1>, vector<24x32xf32>
    %14 = vector.extract_strided_slice %3 {offsets = [3, 0], sizes = [1, 32], strides = [1, 1]} : vector<12x32xf32> to vector<1x32xf32>
    %15 = vector.extract_strided_slice %3 {offsets = [2, 0], sizes = [1, 32], strides = [1, 1]} : vector<12x32xf32> to vector<1x32xf32>
    %16 = vector.shape_cast %14 : vector<1x32xf32> to vector<1x32xf32>
    %17 = vector.broadcast %16 : vector<1x32xf32> to vector<24x32xf32>
    %18 = vector.shape_cast %15 : vector<1x32xf32> to vector<1x32xf32>
    %19 = vector.broadcast %18 : vector<1x32xf32> to vector<24x32xf32>
    %20 = arith.select %6, %17, %19 : vector<24x32xi1>, vector<24x32xf32>
    %21 = vector.extract_strided_slice %3 {offsets = [5, 0], sizes = [1, 32], strides = [1, 1]} : vector<12x32xf32> to vector<1x32xf32>
    %22 = vector.extract_strided_slice %3 {offsets = [4, 0], sizes = [1, 32], strides = [1, 1]} : vector<12x32xf32> to vector<1x32xf32>
    %23 = vector.shape_cast %21 : vector<1x32xf32> to vector<1x32xf32>
    %24 = vector.broadcast %23 : vector<1x32xf32> to vector<24x32xf32>
    %25 = vector.shape_cast %22 : vector<1x32xf32> to vector<1x32xf32>
    %26 = vector.broadcast %25 : vector<1x32xf32> to vector<24x32xf32>
    %27 = arith.select %6, %24, %26 : vector<24x32xi1>, vector<24x32xf32>
    %28 = vector.extract_strided_slice %3 {offsets = [7, 0], sizes = [1, 32], strides = [1, 1]} : vector<12x32xf32> to vector<1x32xf32>
    %29 = vector.extract_strided_slice %3 {offsets = [6, 0], sizes = [1, 32], strides = [1, 1]} : vector<12x32xf32> to vector<1x32xf32>
    %30 = vector.shape_cast %28 : vector<1x32xf32> to vector<1x32xf32>
    %31 = vector.broadcast %30 : vector<1x32xf32> to vector<24x32xf32>
    %32 = vector.shape_cast %29 : vector<1x32xf32> to vector<1x32xf32>
    %33 = vector.broadcast %32 : vector<1x32xf32> to vector<24x32xf32>
    %34 = arith.select %6, %31, %33 : vector<24x32xi1>, vector<24x32xf32>
    %35 = vector.extract_strided_slice %3 {offsets = [9, 0], sizes = [1, 32], strides = [1, 1]} : vector<12x32xf32> to vector<1x32xf32>
    %36 = vector.extract_strided_slice %3 {offsets = [8, 0], sizes = [1, 32], strides = [1, 1]} : vector<12x32xf32> to vector<1x32xf32>
    %37 = vector.shape_cast %35 : vector<1x32xf32> to vector<1x32xf32>
    %38 = vector.broadcast %37 : vector<1x32xf32> to vector<24x32xf32>
    %39 = vector.shape_cast %36 : vector<1x32xf32> to vector<1x32xf32>
    %40 = vector.broadcast %39 : vector<1x32xf32> to vector<24x32xf32>
    %41 = arith.select %6, %38, %40 : vector<24x32xi1>, vector<24x32xf32>
    %42 = vector.extract_strided_slice %3 {offsets = [11, 0], sizes = [1, 32], strides = [1, 1]} : vector<12x32xf32> to vector<1x32xf32>
    %43 = vector.extract_strided_slice %3 {offsets = [10, 0], sizes = [1, 32], strides = [1, 1]} : vector<12x32xf32> to vector<1x32xf32>
    %44 = vector.shape_cast %42 : vector<1x32xf32> to vector<1x32xf32>
    %45 = vector.broadcast %44 : vector<1x32xf32> to vector<24x32xf32>
    %46 = vector.shape_cast %43 : vector<1x32xf32> to vector<1x32xf32>
    %47 = vector.broadcast %46 : vector<1x32xf32> to vector<24x32xf32>
    %48 = arith.select %6, %45, %47 : vector<24x32xi1>, vector<24x32xf32>
    %cst = arith.constant dense<0.000000e+00> : vector<24xf32>
    %49 = vector.multi_reduction <add>, %1, %cst [1] : vector<24x32xf32> to vector<24xf32>
    %50 = vector.shape_cast %49 : vector<24xf32> to vector<24x1xf32>
    %cst_5 = arith.constant 3.200000e+01 : f32
    %51 = vector.broadcast %cst_5 : f32 to vector<24x1xf32>
    %52 = arith.divf %50, %51 : vector<24x1xf32>
    %53 = vector.broadcast %52 : vector<24x1xf32> to vector<24x32xf32>
    %54 = arith.subf %1, %53 : vector<24x32xf32>
    %55 = arith.mulf %54, %54 : vector<24x32xf32>
    %cst_6 = arith.constant dense<0.000000e+00> : vector<24xf32>
    %56 = vector.multi_reduction <add>, %55, %cst_6 [1] : vector<24x32xf32> to vector<24xf32>
    %57 = vector.shape_cast %56 : vector<24xf32> to vector<24x1xf32>
    %cst_7 = arith.constant 3.200000e+01 : f32
    %58 = vector.broadcast %cst_7 : f32 to vector<24x1xf32>
    %59 = arith.divf %57, %58 : vector<24x1xf32>
    %60 = vector.broadcast %52 : vector<24x1xf32> to vector<24x32xf32>
    %61 = arith.subf %1, %60 : vector<24x32xf32>
    %cst_8 = arith.constant 9.99999974E-6 : f32
    %62 = vector.broadcast %cst_8 : f32 to vector<24x1xf32>
    %63 = arith.addf %59, %62 : vector<24x1xf32>
    %64 = math.rsqrt %63 : vector<24x1xf32>
    %65 = vector.broadcast %64 : vector<24x1xf32> to vector<24x32xf32>
    %66 = arith.mulf %61, %65 : vector<24x32xf32>
    %cst_9 = arith.constant 1.000000e+00 : f32
    %67 = vector.broadcast %cst_9 : f32 to vector<24x32xf32>
    %68 = arith.addf %67, %20 : vector<24x32xf32>
    %69 = arith.mulf %66, %68 : vector<24x32xf32>
    %70 = arith.addf %69, %13 : vector<24x32xf32>
    %c0_10 = arith.constant 0 : index
    %c0_11 = arith.constant 0 : index
    %71 = vector.load %arg3[%c0_10, %c0_11] : memref<32x96xbf16, #tpu.memory_space<vmem>>, vector<32x96xbf16>
    %72 = arith.truncf %70 : vector<24x32xf32> to vector<24x32xbf16>
    %cst_12 = arith.constant dense<0.000000e+00> : vector<24x96xf32>
    %73 = tpu.matmul %72, %71, %cst_12 {dimension_numbers = #tpu.dot_dimension_numbers<[1], [0], [0], [1], [0, 0, 1, 1], [], []>} : vector<24x32xbf16>, vector<32x96xbf16>, vector<24x96xf32> -> vector<24x96xf32>
    %c0_13 = arith.constant 0 : index
    %c0_14 = arith.constant 0 : index
    %74 = vector.load %arg4[%c0_13, %c0_14] : memref<1x96xf32, #tpu.memory_space<vmem>>, vector<1x96xf32>
    %75 = vector.broadcast %74 : vector<1x96xf32> to vector<24x96xf32>
    %76 = arith.addf %73, %75 : vector<24x96xf32>
    %77 = vector.extract_strided_slice %76 {offsets = [0, 0], sizes = [24, 8], strides = [1, 1]} : vector<24x96xf32> to vector<24x8xf32>
    %78 = vector.extract_strided_slice %76 {offsets = [0, 8], sizes = [24, 8], strides = [1, 1]} : vector<24x96xf32> to vector<24x8xf32>
    %79 = vector.extract_strided_slice %76 {offsets = [0, 16], sizes = [24, 8], strides = [1, 1]} : vector<24x96xf32> to vector<24x8xf32>
    %80 = vector.extract_strided_slice %76 {offsets = [0, 24], sizes = [24, 8], strides = [1, 1]} : vector<24x96xf32> to vector<24x8xf32>
    %81 = tpu.concatenate %77, %78, %79, %80 in 0 : vector<24x8xf32>, vector<24x8xf32>, vector<24x8xf32>, vector<24x8xf32> -> vector<96x8xf32>
    %82 = vector.extract_strided_slice %76 {offsets = [0, 32], sizes = [24, 8], strides = [1, 1]} : vector<24x96xf32> to vector<24x8xf32>
    %83 = vector.extract_strided_slice %76 {offsets = [0, 40], sizes = [24, 8], strides = [1, 1]} : vector<24x96xf32> to vector<24x8xf32>
    %84 = vector.extract_strided_slice %76 {offsets = [0, 48], sizes = [24, 8], strides = [1, 1]} : vector<24x96xf32> to vector<24x8xf32>
    %85 = vector.extract_strided_slice %76 {offsets = [0, 56], sizes = [24, 8], strides = [1, 1]} : vector<24x96xf32> to vector<24x8xf32>
    %86 = tpu.concatenate %82, %83, %84, %85 in 0 : vector<24x8xf32>, vector<24x8xf32>, vector<24x8xf32>, vector<24x8xf32> -> vector<96x8xf32>
    %87 = vector.extract_strided_slice %76 {offsets = [0, 64], sizes = [24, 8], strides = [1, 1]} : vector<24x96xf32> to vector<24x8xf32>
    %88 = vector.extract_strided_slice %76 {offsets = [0, 72], sizes = [24, 8], strides = [1, 1]} : vector<24x96xf32> to vector<24x8xf32>
    %89 = vector.extract_strided_slice %76 {offsets = [0, 80], sizes = [24, 8], strides = [1, 1]} : vector<24x96xf32> to vector<24x8xf32>
    %90 = vector.extract_strided_slice %76 {offsets = [0, 88], sizes = [24, 8], strides = [1, 1]} : vector<24x96xf32> to vector<24x8xf32>
    %91 = tpu.concatenate %87, %88, %89, %90 in 0 : vector<24x8xf32>, vector<24x8xf32>, vector<24x8xf32>, vector<24x8xf32> -> vector<96x8xf32>
    %cst_15 = arith.constant dense<0.000000e+00> : vector<96xf32>
    %92 = vector.multi_reduction <add>, %81, %cst_15 [1] : vector<96x8xf32> to vector<96xf32>
    %93 = vector.shape_cast %92 : vector<96xf32> to vector<96x1xf32>
    %cst_16 = arith.constant 8.000000e+00 : f32
    %94 = vector.broadcast %cst_16 : f32 to vector<96x1xf32>
    %95 = arith.divf %93, %94 : vector<96x1xf32>
    %96 = vector.broadcast %95 : vector<96x1xf32> to vector<96x8xf32>
    %97 = arith.subf %81, %96 : vector<96x8xf32>
    %98 = arith.mulf %97, %97 : vector<96x8xf32>
    %cst_17 = arith.constant dense<0.000000e+00> : vector<96xf32>
    %99 = vector.multi_reduction <add>, %98, %cst_17 [1] : vector<96x8xf32> to vector<96xf32>
    %100 = vector.shape_cast %99 : vector<96xf32> to vector<96x1xf32>
    %cst_18 = arith.constant 8.000000e+00 : f32
    %101 = vector.broadcast %cst_18 : f32 to vector<96x1xf32>
    %102 = arith.divf %100, %101 : vector<96x1xf32>
    %103 = vector.broadcast %95 : vector<96x1xf32> to vector<96x8xf32>
    %104 = arith.subf %81, %103 : vector<96x8xf32>
    %cst_19 = arith.constant 9.99999974E-6 : f32
    %105 = vector.broadcast %cst_19 : f32 to vector<96x1xf32>
    %106 = arith.addf %102, %105 : vector<96x1xf32>
    %107 = math.rsqrt %106 : vector<96x1xf32>
    %108 = vector.broadcast %107 : vector<96x1xf32> to vector<96x8xf32>
    %109 = arith.mulf %104, %108 : vector<96x8xf32>
    %cst_20 = arith.constant dense<0.000000e+00> : vector<96xf32>
    %110 = vector.multi_reduction <add>, %86, %cst_20 [1] : vector<96x8xf32> to vector<96xf32>
    %111 = vector.shape_cast %110 : vector<96xf32> to vector<96x1xf32>
    %cst_21 = arith.constant 8.000000e+00 : f32
    %112 = vector.broadcast %cst_21 : f32 to vector<96x1xf32>
    %113 = arith.divf %111, %112 : vector<96x1xf32>
    %114 = vector.broadcast %113 : vector<96x1xf32> to vector<96x8xf32>
    %115 = arith.subf %86, %114 : vector<96x8xf32>
    %116 = arith.mulf %115, %115 : vector<96x8xf32>
    %cst_22 = arith.constant dense<0.000000e+00> : vector<96xf32>
    %117 = vector.multi_reduction <add>, %116, %cst_22 [1] : vector<96x8xf32> to vector<96xf32>
    %118 = vector.shape_cast %117 : vector<96xf32> to vector<96x1xf32>
    %cst_23 = arith.constant 8.000000e+00 : f32
    %119 = vector.broadcast %cst_23 : f32 to vector<96x1xf32>
    %120 = arith.divf %118, %119 : vector<96x1xf32>
    %121 = vector.broadcast %113 : vector<96x1xf32> to vector<96x8xf32>
    %122 = arith.subf %86, %121 : vector<96x8xf32>
    %cst_24 = arith.constant 9.99999974E-6 : f32
    %123 = vector.broadcast %cst_24 : f32 to vector<96x1xf32>
    %124 = arith.addf %120, %123 : vector<96x1xf32>
    %125 = math.rsqrt %124 : vector<96x1xf32>
    %126 = vector.broadcast %125 : vector<96x1xf32> to vector<96x8xf32>
    %127 = arith.mulf %122, %126 : vector<96x8xf32>
    %c0_25 = arith.constant 0 : index
    %c0_26 = arith.constant 0 : index
    %128 = vector.load %arg8[%c0_25, %c0_26] : memref<96x8xf32, #tpu.memory_space<vmem>>, vector<96x8xf32>
    %c0_27 = arith.constant 0 : index
    %c0_28 = arith.constant 0 : index
    %129 = vector.load %arg9[%c0_27, %c0_28] : memref<96x8xf32, #tpu.memory_space<vmem>>, vector<96x8xf32>
    %c0_29 = arith.constant 0 : index
    %c0_30 = arith.constant 0 : index
    %130 = vector.load %arg7[%c0_29, %c0_30] : memref<8x8xf32, #tpu.memory_space<vmem>>, vector<8x8xf32>
    %131 = arith.mulf %109, %128 : vector<96x8xf32>
    %cst_31 = arith.constant dense<0.000000e+00> : vector<96x8xf32>
    %132 = tpu.matmul %109, %130, %cst_31 {dimension_numbers = #tpu.dot_dimension_numbers<[1], [0], [0], [1], [0, 0, 1, 1], [], []>} : vector<96x8xf32>, vector<8x8xf32>, vector<96x8xf32> -> vector<96x8xf32>
    %133 = arith.mulf %132, %129 : vector<96x8xf32>
    %134 = arith.addf %131, %133 : vector<96x8xf32>
    %135 = arith.mulf %127, %128 : vector<96x8xf32>
    %cst_32 = arith.constant dense<0.000000e+00> : vector<96x8xf32>
    %136 = tpu.matmul %127, %130, %cst_32 {dimension_numbers = #tpu.dot_dimension_numbers<[1], [0], [0], [1], [0, 0, 1, 1], [], []>} : vector<96x8xf32>, vector<8x8xf32>, vector<96x8xf32> -> vector<96x8xf32>
    %137 = arith.mulf %136, %129 : vector<96x8xf32>
    %138 = arith.addf %135, %137 : vector<96x8xf32>
    %cst_33 = arith.constant 0.353553385 : f32
    %139 = vector.broadcast %cst_33 : f32 to vector<96x8xf32>
    %140 = arith.mulf %134, %139 : vector<96x8xf32>
    %141 = vector.shape_cast %140 : vector<96x8xf32> to vector<4x24x8xf32>
    %142 = arith.truncf %141 : vector<4x24x8xf32> to vector<4x24x8xbf16>
    %143 = vector.shape_cast %138 : vector<96x8xf32> to vector<4x24x8xf32>
    %144 = arith.truncf %143 : vector<4x24x8xf32> to vector<4x24x8xbf16>
    %145 = vector.shape_cast %91 : vector<96x8xf32> to vector<4x24x8xf32>
    %146 = arith.truncf %145 : vector<4x24x8xf32> to vector<4x24x8xbf16>
    "tpu.trace_start"() <{level = 10 : i32, message = "hqd,hkd->hqk"}> : () -> ()
    %cst_34 = arith.constant dense<0.000000e+00> : vector<4x24x24xf32>
    %147 = tpu.matmul %142, %144, %cst_34 {dimension_numbers = #tpu.dot_dimension_numbers<[2], [2], [1], [1], [0, 0, 0, 1, 1, 1], [0], [0]>} : vector<4x24x8xbf16>, vector<4x24x8xbf16>, vector<4x24x24xf32> -> vector<4x24x24xf32>
    "tpu.trace_stop"() : () -> ()
    %cst_35 = arith.constant dense<0xFF800000> : vector<4x24xf32>
    %148 = vector.multi_reduction <maximumf>, %147, %cst_35 [2] : vector<4x24x24xf32> to vector<4x24xf32>
    %149 = vector.shape_cast %148 : vector<4x24xf32> to vector<4x24x1xf32>
    %150 = vector.broadcast %149 : vector<4x24x1xf32> to vector<4x24x24xf32>
    %151 = arith.subf %147, %150 : vector<4x24x24xf32>
    %152 = math.exp %151 : vector<4x24x24xf32>
    %cst_36 = arith.constant dense<0.000000e+00> : vector<4x24xf32>
    %153 = vector.multi_reduction <add>, %152, %cst_36 [2] : vector<4x24x24xf32> to vector<4x24xf32>
    %154 = vector.shape_cast %153 : vector<4x24xf32> to vector<4x24x1xf32>
    %155 = tpu.reciprocal %154 {approx = true} : vector<4x24x1xf32> -> vector<4x24x1xf32>
    %156 = vector.broadcast %155 : vector<4x24x1xf32> to vector<4x24x24xf32>
    %157 = arith.mulf %152, %156 : vector<4x24x24xf32>
    %158 = arith.truncf %157 : vector<4x24x24xf32> to vector<4x24x24xbf16>
    "tpu.trace_start"() <{level = 10 : i32, message = "hqk,hkd->hqd"}> : () -> ()
    %cst_37 = arith.constant dense<0.000000e+00> : vector<4x24x8xf32>
    %159 = tpu.matmul %158, %146, %cst_37 {dimension_numbers = #tpu.dot_dimension_numbers<[2], [1], [1], [2], [0, 0, 0, 1, 1, 2], [0], [0]>} : vector<4x24x24xbf16>, vector<4x24x8xbf16>, vector<4x24x8xf32> -> vector<4x24x8xf32>
    %cst_38 = arith.constant 0.000000e+00 : f32
    "tpu.trace_stop"() : () -> ()
    %160 = vector.broadcast %cst_38 : f32 to vector<24x32xf32>
    %161 = vector.extract_strided_slice %159 {offsets = [0, 0, 0], sizes = [1, 24, 8], strides = [1, 1, 1]} : vector<4x24x8xf32> to vector<1x24x8xf32>
    %162 = vector.shape_cast %161 : vector<1x24x8xf32> to vector<24x8xf32>
    %163 = arith.truncf %162 : vector<24x8xf32> to vector<24x8xbf16>
    %c0_39 = arith.constant 0 : index
    %c0_40 = arith.constant 0 : index
    %c0_41 = arith.constant 0 : index
    %164 = vector.load %arg5[%c0_39, %c0_40, %c0_41] : memref<4x8x32xbf16, #tpu.memory_space<vmem>>, vector<1x8x32xbf16>
    %165 = vector.shape_cast %164 : vector<1x8x32xbf16> to vector<8x32xbf16>
    %cst_42 = arith.constant dense<0.000000e+00> : vector<24x32xf32>
    %166 = tpu.matmul %163, %165, %cst_42 {dimension_numbers = #tpu.dot_dimension_numbers<[1], [0], [0], [1], [0, 0, 1, 1], [], []>} : vector<24x8xbf16>, vector<8x32xbf16>, vector<24x32xf32> -> vector<24x32xf32>
    %167 = arith.addf %160, %166 : vector<24x32xf32>
    %168 = vector.extract_strided_slice %159 {offsets = [1, 0, 0], sizes = [1, 24, 8], strides = [1, 1, 1]} : vector<4x24x8xf32> to vector<1x24x8xf32>
    %169 = vector.shape_cast %168 : vector<1x24x8xf32> to vector<24x8xf32>
    %170 = arith.truncf %169 : vector<24x8xf32> to vector<24x8xbf16>
    %c1 = arith.constant 1 : index
    %c0_43 = arith.constant 0 : index
    %c0_44 = arith.constant 0 : index
    %171 = vector.load %arg5[%c1, %c0_43, %c0_44] : memref<4x8x32xbf16, #tpu.memory_space<vmem>>, vector<1x8x32xbf16>
    %172 = vector.shape_cast %171 : vector<1x8x32xbf16> to vector<8x32xbf16>
    %cst_45 = arith.constant dense<0.000000e+00> : vector<24x32xf32>
    %173 = tpu.matmul %170, %172, %cst_45 {dimension_numbers = #tpu.dot_dimension_numbers<[1], [0], [0], [1], [0, 0, 1, 1], [], []>} : vector<24x8xbf16>, vector<8x32xbf16>, vector<24x32xf32> -> vector<24x32xf32>
    %174 = arith.addf %167, %173 : vector<24x32xf32>
    %175 = vector.extract_strided_slice %159 {offsets = [2, 0, 0], sizes = [1, 24, 8], strides = [1, 1, 1]} : vector<4x24x8xf32> to vector<1x24x8xf32>
    %176 = vector.shape_cast %175 : vector<1x24x8xf32> to vector<24x8xf32>
    %177 = arith.truncf %176 : vector<24x8xf32> to vector<24x8xbf16>
    %c2 = arith.constant 2 : index
    %c0_46 = arith.constant 0 : index
    %c0_47 = arith.constant 0 : index
    %178 = vector.load %arg5[%c2, %c0_46, %c0_47] : memref<4x8x32xbf16, #tpu.memory_space<vmem>>, vector<1x8x32xbf16>
    %179 = vector.shape_cast %178 : vector<1x8x32xbf16> to vector<8x32xbf16>
    %cst_48 = arith.constant dense<0.000000e+00> : vector<24x32xf32>
    %180 = tpu.matmul %177, %179, %cst_48 {dimension_numbers = #tpu.dot_dimension_numbers<[1], [0], [0], [1], [0, 0, 1, 1], [], []>} : vector<24x8xbf16>, vector<8x32xbf16>, vector<24x32xf32> -> vector<24x32xf32>
    %181 = arith.addf %174, %180 : vector<24x32xf32>
    %182 = vector.extract_strided_slice %159 {offsets = [3, 0, 0], sizes = [1, 24, 8], strides = [1, 1, 1]} : vector<4x24x8xf32> to vector<1x24x8xf32>
    %183 = vector.shape_cast %182 : vector<1x24x8xf32> to vector<24x8xf32>
    %184 = arith.truncf %183 : vector<24x8xf32> to vector<24x8xbf16>
    %c3 = arith.constant 3 : index
    %c0_49 = arith.constant 0 : index
    %c0_50 = arith.constant 0 : index
    %185 = vector.load %arg5[%c3, %c0_49, %c0_50] : memref<4x8x32xbf16, #tpu.memory_space<vmem>>, vector<1x8x32xbf16>
    %186 = vector.shape_cast %185 : vector<1x8x32xbf16> to vector<8x32xbf16>
    %cst_51 = arith.constant dense<0.000000e+00> : vector<24x32xf32>
    %187 = tpu.matmul %184, %186, %cst_51 {dimension_numbers = #tpu.dot_dimension_numbers<[1], [0], [0], [1], [0, 0, 1, 1], [], []>} : vector<24x8xbf16>, vector<8x32xbf16>, vector<24x32xf32> -> vector<24x32xf32>
    %188 = arith.addf %181, %187 : vector<24x32xf32>
    %c0_52 = arith.constant 0 : index
    %c0_53 = arith.constant 0 : index
    %189 = vector.load %arg6[%c0_52, %c0_53] : memref<1x32xf32, #tpu.memory_space<vmem>>, vector<1x32xf32>
    %190 = vector.broadcast %189 : vector<1x32xf32> to vector<24x32xf32>
    %191 = arith.addf %188, %190 : vector<24x32xf32>
    %192 = arith.mulf %191, %27 : vector<24x32xf32>
    %193 = arith.addf %1, %192 : vector<24x32xf32>
    %cst_54 = arith.constant dense<0.000000e+00> : vector<24xf32>
    %194 = vector.multi_reduction <add>, %193, %cst_54 [1] : vector<24x32xf32> to vector<24xf32>
    %195 = vector.shape_cast %194 : vector<24xf32> to vector<24x1xf32>
    %cst_55 = arith.constant 3.200000e+01 : f32
    %196 = vector.broadcast %cst_55 : f32 to vector<24x1xf32>
    %197 = arith.divf %195, %196 : vector<24x1xf32>
    %198 = vector.broadcast %197 : vector<24x1xf32> to vector<24x32xf32>
    %199 = arith.subf %193, %198 : vector<24x32xf32>
    %200 = arith.mulf %199, %199 : vector<24x32xf32>
    %cst_56 = arith.constant dense<0.000000e+00> : vector<24xf32>
    %201 = vector.multi_reduction <add>, %200, %cst_56 [1] : vector<24x32xf32> to vector<24xf32>
    %202 = vector.shape_cast %201 : vector<24xf32> to vector<24x1xf32>
    %cst_57 = arith.constant 3.200000e+01 : f32
    %203 = vector.broadcast %cst_57 : f32 to vector<24x1xf32>
    %204 = arith.divf %202, %203 : vector<24x1xf32>
    %205 = vector.broadcast %197 : vector<24x1xf32> to vector<24x32xf32>
    %206 = arith.subf %193, %205 : vector<24x32xf32>
    %cst_58 = arith.constant 9.99999974E-6 : f32
    %207 = vector.broadcast %cst_58 : f32 to vector<24x1xf32>
    %208 = arith.addf %204, %207 : vector<24x1xf32>
    %209 = math.rsqrt %208 : vector<24x1xf32>
    %210 = vector.broadcast %209 : vector<24x1xf32> to vector<24x32xf32>
    %211 = arith.mulf %206, %210 : vector<24x32xf32>
    %cst_59 = arith.constant 1.000000e+00 : f32
    %212 = vector.broadcast %cst_59 : f32 to vector<24x32xf32>
    %213 = arith.addf %212, %41 : vector<24x32xf32>
    %214 = arith.mulf %211, %213 : vector<24x32xf32>
    %215 = arith.addf %214, %34 : vector<24x32xf32>
    %c0_60 = arith.constant 0 : index
    %c0_61 = arith.constant 0 : index
    %216 = vector.load %arg10[%c0_60, %c0_61] : memref<32x128xbf16, #tpu.memory_space<vmem>>, vector<32x128xbf16>
    %217 = arith.truncf %215 : vector<24x32xf32> to vector<24x32xbf16>
    %cst_62 = arith.constant dense<0.000000e+00> : vector<24x128xf32>
    %218 = tpu.matmul %217, %216, %cst_62 {dimension_numbers = #tpu.dot_dimension_numbers<[1], [0], [0], [1], [0, 0, 1, 1], [], []>} : vector<24x32xbf16>, vector<32x128xbf16>, vector<24x128xf32> -> vector<24x128xf32>
    %c0_63 = arith.constant 0 : index
    %c0_64 = arith.constant 0 : index
    %219 = vector.load %arg11[%c0_63, %c0_64] : memref<1x128xf32, #tpu.memory_space<vmem>>, vector<1x128xf32>
    %220 = vector.broadcast %219 : vector<1x128xf32> to vector<24x128xf32>
    %221 = arith.addf %218, %220 : vector<24x128xf32>
    %222 = arith.mulf %221, %221 : vector<24x128xf32>
    %223 = arith.mulf %221, %222 : vector<24x128xf32>
    %cst_65 = arith.constant 4.471500e-02 : f32
    %224 = vector.broadcast %cst_65 : f32 to vector<24x128xf32>
    %225 = arith.mulf %224, %223 : vector<24x128xf32>
    %226 = arith.addf %221, %225 : vector<24x128xf32>
    %cst_66 = arith.constant 0.797884583 : f32
    %227 = vector.broadcast %cst_66 : f32 to vector<24x128xf32>
    %228 = arith.mulf %227, %226 : vector<24x128xf32>
    %229 = math.tanh %228 : vector<24x128xf32>
    %cst_67 = arith.constant 1.000000e+00 : f32
    %230 = vector.broadcast %cst_67 : f32 to vector<24x128xf32>
    %231 = arith.addf %230, %229 : vector<24x128xf32>
    %cst_68 = arith.constant 5.000000e-01 : f32
    %232 = vector.broadcast %cst_68 : f32 to vector<24x128xf32>
    %233 = arith.mulf %232, %231 : vector<24x128xf32>
    %234 = arith.mulf %221, %233 : vector<24x128xf32>
    %c0_69 = arith.constant 0 : index
    %c0_70 = arith.constant 0 : index
    %235 = vector.load %arg12[%c0_69, %c0_70] : memref<128x32xbf16, #tpu.memory_space<vmem>>, vector<128x32xbf16>
    %236 = arith.truncf %234 : vector<24x128xf32> to vector<24x128xbf16>
    %cst_71 = arith.constant dense<0.000000e+00> : vector<24x32xf32>
    %237 = tpu.matmul %236, %235, %cst_71 {dimension_numbers = #tpu.dot_dimension_numbers<[1], [0], [0], [1], [0, 0, 1, 1], [], []>} : vector<24x128xbf16>, vector<128x32xbf16>, vector<24x32xf32> -> vector<24x32xf32>
    %c0_72 = arith.constant 0 : index
    %c0_73 = arith.constant 0 : index
    %238 = vector.load %arg13[%c0_72, %c0_73] : memref<1x32xf32, #tpu.memory_space<vmem>>, vector<1x32xf32>
    %239 = vector.broadcast %238 : vector<1x32xf32> to vector<24x32xf32>
    %240 = arith.addf %237, %239 : vector<24x32xf32>
    %241 = arith.mulf %240, %48 : vector<24x32xf32>
    %242 = arith.addf %193, %241 : vector<24x32xf32>
    %c0_74 = arith.constant 0 : index
    %c0_75 = arith.constant 0 : index
    %c0_76 = arith.constant 0 : index
    %243 = vector.load %arg14[%c0_74, %c0_75, %c0_76] : memref<1x24x32xf32, #tpu.memory_space<vmem>>, vector<1x24x32xf32>
    %244 = vector.shape_cast %243 : vector<1x24x32xf32> to vector<24x32xf32>
    %245 = vector.shape_cast %242 : vector<24x32xf32> to vector<1x24x32xf32>
    tpu.vector_store %arg14[%c0_74, %c0_75, %c0_76], %245 {strides = array<i32>} : memref<1x24x32xf32, #tpu.memory_space<vmem>>, vector<1x24x32xf32>,
    return
  }
  func.func @transform_0(%arg0: i32) -> (i32, i32, i32) {
    %c0_i32 = arith.constant 0 : i32
    %c0_i32_0 = arith.constant 0 : i32
    %c0_i32_1 = arith.constant 0 : i32
    return %arg0, %c0_i32, %c0_i32_0 : i32, i32, i32
  }
  func.func @transform_1(%arg0: i32) -> (i32, i32, i32) {
    %c0_i32 = arith.constant 0 : i32
    %c0_i32_0 = arith.constant 0 : i32
    %c0_i32_1 = arith.constant 0 : i32
    return %arg0, %c0_i32, %c0_i32_0 : i32, i32, i32
  }
  func.func @transform_2(%arg0: i32) -> (i32, i32) {
    %c0_i32 = arith.constant 0 : i32
    %c0_i32_0 = arith.constant 0 : i32
    %c0_i32_1 = arith.constant 0 : i32
    return %c0_i32, %c0_i32_0 : i32, i32
  }
  func.func @transform_3(%arg0: i32) -> (i32, i32) {
    %c0_i32 = arith.constant 0 : i32
    %c0_i32_0 = arith.constant 0 : i32
    %c0_i32_1 = arith.constant 0 : i32
    return %c0_i32, %c0_i32_0 : i32, i32
  }
  func.func @transform_4(%arg0: i32) -> (i32, i32, i32) {
    %c0_i32 = arith.constant 0 : i32
    %c0_i32_0 = arith.constant 0 : i32
    %c0_i32_1 = arith.constant 0 : i32
    %c0_i32_2 = arith.constant 0 : i32
    return %c0_i32, %c0_i32_0, %c0_i32_1 : i32, i32, i32
  }
  func.func @transform_5(%arg0: i32) -> (i32, i32) {
    %c0_i32 = arith.constant 0 : i32
    %c0_i32_0 = arith.constant 0 : i32
    %c0_i32_1 = arith.constant 0 : i32
    return %c0_i32, %c0_i32_0 : i32, i32
  }
  func.func @transform_6(%arg0: i32) -> (i32, i32) {
    %c0_i32 = arith.constant 0 : i32
    %c0_i32_0 = arith.constant 0 : i32
    %c0_i32_1 = arith.constant 0 : i32
    return %c0_i32, %c0_i32_0 : i32, i32
  }
  func.func @transform_7(%arg0: i32) -> (i32, i32) {
    %c0_i32 = arith.constant 0 : i32
    %c0_i32_0 = arith.constant 0 : i32
    %c0_i32_1 = arith.constant 0 : i32
    return %c0_i32, %c0_i32_0 : i32, i32
  }
  func.func @transform_8(%arg0: i32) -> (i32, i32) {
    %c0_i32 = arith.constant 0 : i32
    %c0_i32_0 = arith.constant 0 : i32
    %c0_i32_1 = arith.constant 0 : i32
    return %c0_i32, %c0_i32_0 : i32, i32
  }
  func.func @transform_9(%arg0: i32) -> (i32, i32) {
    %c0_i32 = arith.constant 0 : i32
    %c0_i32_0 = arith.constant 0 : i32
    %c0_i32_1 = arith.constant 0 : i32
    return %c0_i32, %c0_i32_0 : i32, i32
  }
  func.func @transform_10(%arg0: i32) -> (i32, i32) {
    %c0_i32 = arith.constant 0 : i32
    %c0_i32_0 = arith.constant 0 : i32
    %c0_i32_1 = arith.constant 0 : i32
    return %c0_i32, %c0_i32_0 : i32, i32
  }
  func.func @transform_11(%arg0: i32) -> (i32, i32) {
    %c0_i32 = arith.constant 0 : i32
    %c0_i32_0 = arith.constant 0 : i32
    %c0_i32_1 = arith.constant 0 : i32
    return %c0_i32, %c0_i32_0 : i32, i32
  }
  func.func @transform_12(%arg0: i32) -> (i32, i32) {
    %c0_i32 = arith.constant 0 : i32
    %c0_i32_0 = arith.constant 0 : i32
    %c0_i32_1 = arith.constant 0 : i32
    return %c0_i32, %c0_i32_0 : i32, i32
  }
  func.func @transform_13(%arg0: i32) -> (i32, i32, i32) {
    %c0_i32 = arith.constant 0 : i32
    %c0_i32_0 = arith.constant 0 : i32
    %c0_i32_1 = arith.constant 0 : i32
    return %arg0, %c0_i32, %c0_i32_0 : i32, i32, i32
  }
}

</mosaic_0001>

<llo_original>
// kernel: transformer_block.1
$region0: #{transformer_block.1}
  #allocation0 [shape = 'u32[]', space=smem, size = 0x4, offset = 0x4, fixed_abs, tag = 'smem constant byte address 0x4 - core index']
  #allocation1 [shape = 'u32[144,128]{1,0:T(1,128)}', space=vmem, size = 0x12000, scoped, tag = 'internal scratch']
  %s0 = inlined_call_operand.vmem [shape: f32[2,24,32], index: 0, kind: input, shape index: {}]
  %s1 = inlined_call_operand.vmem [shape: f32[2,12,32], index: 1, kind: input, shape index: {}]
  %s2 = inlined_call_operand.vmem [shape: bf16[32,96], index: 2, kind: input, shape index: {}]
  %s3 = inlined_call_operand.vmem [shape: f32[1,96], index: 3, kind: input, shape index: {}]
  %s4 = inlined_call_operand.vmem [shape: bf16[4,8,32], index: 4, kind: input, shape index: {}]
  %s5 = inlined_call_operand.vmem [shape: f32[1,32], index: 5, kind: input, shape index: {}]
  %s6 = inlined_call_operand.vmem [shape: f32[8,8], index: 6, kind: input, shape index: {}]
  %s7 = inlined_call_operand.vmem [shape: f32[96,8], index: 7, kind: input, shape index: {}]
  %s8 = inlined_call_operand.vmem [shape: f32[96,8], index: 8, kind: input, shape index: {}]
  %s9 = inlined_call_operand.vmem [shape: bf16[32,128], index: 9, kind: input, shape index: {}]
  %s10 = inlined_call_operand.vmem [shape: f32[1,128], index: 10, kind: input, shape index: {}]
  %s11 = inlined_call_operand.vmem [shape: bf16[128,32], index: 11, kind: input, shape index: {}]
  %s12 = inlined_call_operand.vmem [shape: f32[1,32], index: 12, kind: input, shape index: {}]
  %s13 = inlined_call_operand.vmem [shape: f32[2,24,32], index: 13, kind: output, shape index: {}]
  %s14 = sld [smem:[#allocation0]]
  $region85: #{transformer_block.1} parent=0
    _
  %s16 = ssub.s32 1, %s14
  %s17 = scalar_select 0, %s16, %s14
  loop: start=0, step=1, limit=4
  $region2: #{transformer_block.1} parent=0 // loop_pre_header
    _
  $region3: #{transformer_block.1} parent=0 // loop_header
    %s19 = sphi 0, %s23
    %p20 = scmp.ge.s32.totalorder %s19, 4
    %s29 = sphi 0, %s31
    %s32 = sphi 0, %s29
    %s33 = sphi 0, %s32
    %s49 = sphi 0, %s33
    %s55 = sphi 0, %s57
    %s58 = sphi 0, %s55
    %s59 = sphi 0, %s58
    %s75 = sphi 0, %s59
    %s79 = sphi 0, %s79
    %s81 = sphi 0, %s79
    %s82 = sphi 0, %s81
    %s96 = sphi 0, %s82
    %s100 = sphi 0, %s100
    %s102 = sphi 0, %s100
    %s103 = sphi 0, %s102
    %s117 = sphi 0, %s103
    %s121 = sphi 0, %s121
    %s123 = sphi 0, %s121
    %s124 = sphi 0, %s123
    %s138 = sphi 0, %s124
    %s142 = sphi 0, %s142
    %s144 = sphi 0, %s142
    %s145 = sphi 0, %s144
    %s159 = sphi 0, %s145
    %s163 = sphi 0, %s163
    %s165 = sphi 0, %s163
    %s166 = sphi 0, %s165
    %s180 = sphi 0, %s166
    %s184 = sphi 0, %s184
    %s186 = sphi 0, %s184
    %s187 = sphi 0, %s186
    %s201 = sphi 0, %s187
    %s205 = sphi 0, %s205
    %s207 = sphi 0, %s205
    %s208 = sphi 0, %s207
    %s222 = sphi 0, %s208
    %s226 = sphi 0, %s226
    %s228 = sphi 0, %s226
    %s229 = sphi 0, %s228
    %s243 = sphi 0, %s229
    %s247 = sphi 0, %s247
    %s249 = sphi 0, %s247
    %s250 = sphi 0, %s249
    %s264 = sphi 0, %s250
    %s268 = sphi 0, %s268
    %s270 = sphi 0, %s268
    %s271 = sphi 0, %s270
    %s285 = sphi 0, %s271
    %s289 = sphi 0, %s289
    %s291 = sphi 0, %s289
    %s292 = sphi 0, %s291
    %s306 = sphi 0, %s292
    %s312 = sphi 0, %s314
    %s315 = sphi 0, %s312
    %s316 = sphi 0, %s315
    %s332 = sphi 0, %s316
  $region4: #{transformer_block.1} parent=0 // loop_header_branch
    %22 = sbr.rel (%p20) target = $region8
  $region5: #{transformer_block.1} parent=0 // loop_body
    %s24 = ssub.s32 %s19, 1
    %s25 = ssub.s32 %s19, 2
    %s26 = sadd.s32 %s19, 1
    %s27 = ssub.s32 %s19, %s26
    %p28 = scmp.eq.s32.totalorder %s27, 0
    %s30 = sadd.s32 %s29, 1
    %s31 = scalar_select %p28, %s29, %s30
    %p34 = pneg %p28
    %p35 = scmp.eq.s32.totalorder %s19, 1
    %p36 = por %p34, %p35
    %p37 = scmp.ne.s32.totalorder %s29, %s32
    %p38 = scmp.eq.s32.totalorder %s19, 0
    %p39 = por %p37, %p38
    %p40 = scmp.ne.s32.totalorder %s29, %s32
    %p41 = scmp.eq.s32.totalorder %s24, 1
    %p42 = por %p40, %p41
    %p43 = scmp.ne.s32.totalorder %s32, %s33
    %p44 = scmp.eq.s32.totalorder %s24, 0
    %p45 = por %p43, %p44
    %p46 = scmp.ne.s32.totalorder %s32, %s33
    %p47 = scmp.eq.s32.totalorder %s25, 1
    %p48 = por %p46, %p47
    %p50 = scmp.ne.s32.totalorder %s33, %s49
    %p51 = scmp.eq.s32.totalorder %s25, 0
    %p52 = por %p50, %p51
    %s53 = ssub.s32 %s19, %s26
    %p54 = scmp.eq.s32.totalorder %s53, 0
    %s56 = sadd.s32 %s55, 1
    %s57 = scalar_select %p54, %s55, %s56
    %p60 = pneg %p54
    %p61 = scmp.eq.s32.totalorder %s19, 1
    %p62 = por %p60, %p61
    %p63 = scmp.ne.s32.totalorder %s55, %s58
    %p64 = scmp.eq.s32.totalorder %s19, 0
    %p65 = por %p63, %p64
    %p66 = scmp.ne.s32.totalorder %s55, %s58
    %p67 = scmp.eq.s32.totalorder %s24, 1
    %p68 = por %p66, %p67
    %p69 = scmp.ne.s32.totalorder %s58, %s59
    %p70 = scmp.eq.s32.totalorder %s24, 0
    %p71 = por %p69, %p70
    %p72 = scmp.ne.s32.totalorder %s58, %s59
    %p73 = scmp.eq.s32.totalorder %s25, 1
    %p74 = por %p72, %p73
    %p76 = scmp.ne.s32.totalorder %s59, %s75
    %p77 = scmp.eq.s32.totalorder %s25, 0
    %p78 = por %p76, %p77
    %s80 = sadd.s32 %s79, 1
    %p83 = scmp.eq.s32.totalorder %s19, 1
    %p84 = scmp.ne.s32.totalorder %s79, %s81
    %p85 = scmp.eq.s32.totalorder %s19, 0
    %p86 = por %p84, %p85
    %p87 = scmp.ne.s32.totalorder %s79, %s81
    %p88 = scmp.eq.s32.totalorder %s24, 1
    %p89 = por %p87, %p88
    %p90 = scmp.ne.s32.totalorder %s81, %s82
    %p91 = scmp.eq.s32.totalorder %s24, 0
    %p92 = por %p90, %p91
    %p93 = scmp.ne.s32.totalorder %s81, %s82
    %p94 = scmp.eq.s32.totalorder %s25, 1
    %p95 = por %p93, %p94
    %p97 = scmp.ne.s32.totalorder %s82, %s96
    %p98 = scmp.eq.s32.totalorder %s25, 0
    %p99 = por %p97, %p98
    %s101 = sadd.s32 %s100, 1
    %p104 = scmp.eq.s32.totalorder %s19, 1
    %p105 = scmp.ne.s32.totalorder %s100, %s102
    %p106 = scmp.eq.s32.totalorder %s19, 0
    %p107 = por %p105, %p106
    %p108 = scmp.ne.s32.totalorder %s100, %s102
    %p109 = scmp.eq.s32.totalorder %s24, 1
    %p110 = por %p108, %p109
    %p111 = scmp.ne.s32.totalorder %s102, %s103
    %p112 = scmp.eq.s32.totalorder %s24, 0
    %p113 = por %p111, %p112
    %p114 = scmp.ne.s32.totalorder %s102, %s103
    %p115 = scmp.eq.s32.totalorder %s25, 1
    %p116 = por %p114, %p115
    %p118 = scmp.ne.s32.totalorder %s103, %s117
    %p119 = scmp.eq.s32.totalorder %s25, 0
    %p120 = por %p118, %p119
    %s122 = sadd.s32 %s121, 1
    %p125 = scmp.eq.s32.totalorder %s19, 1
    %p126 = scmp.ne.s32.totalorder %s121, %s123
    %p127 = scmp.eq.s32.totalorder %s19, 0
    %p128 = por %p126, %p127
    %p129 = scmp.ne.s32.totalorder %s121, %s123
    %p130 = scmp.eq.s32.totalorder %s24, 1
    %p131 = por %p129, %p130
    %p132 = scmp.ne.s32.totalorder %s123, %s124
    %p133 = scmp.eq.s32.totalorder %s24, 0
    %p134 = por %p132, %p133
    %p135 = scmp.ne.s32.totalorder %s123, %s124
    %p136 = scmp.eq.s32.totalorder %s25, 1
    %p137 = por %p135, %p136
    %p139 = scmp.ne.s32.totalorder %s124, %s138
    %p140 = scmp.eq.s32.totalorder %s25, 0
    %p141 = por %p139, %p140
    %s143 = sadd.s32 %s142, 1
    %p146 = scmp.eq.s32.totalorder %s19, 1
    %p147 = scmp.ne.s32.totalorder %s142, %s144
    %p148 = scmp.eq.s32.totalorder %s19, 0
    %p149 = por %p147, %p148
    %p150 = scmp.ne.s32.totalorder %s142, %s144
    %p151 = scmp.eq.s32.totalorder %s24, 1
    %p152 = por %p150, %p151
    %p153 = scmp.ne.s32.totalorder %s144, %s145
    %p154 = scmp.eq.s32.totalorder %s24, 0
    %p155 = por %p153, %p154
    %p156 = scmp.ne.s32.totalorder %s144, %s145
    %p157 = scmp.eq.s32.totalorder %s25, 1
    %p158 = por %p156, %p157
    %p160 = scmp.ne.s32.totalorder %s145, %s159
    %p161 = scmp.eq.s32.totalorder %s25, 0
    %p162 = por %p160, %p161
    %s164 = sadd.s32 %s163, 1
    %p167 = scmp.eq.s32.totalorder %s19, 1
    %p168 = scmp.ne.s32.totalorder %s163, %s165
    %p169 = scmp.eq.s32.totalorder %s19, 0
    %p170 = por %p168, %p169
    %p171 = scmp.ne.s32.totalorder %s163, %s165
    %p172 = scmp.eq.s32.totalorder %s24, 1
    %p173 = por %p171, %p172
    %p174 = scmp.ne.s32.totalorder %s165, %s166
    %p175 = scmp.eq.s32.totalorder %s24, 0
    %p176 = por %p174, %p175
    %p177 = scmp.ne.s32.totalorder %s165, %s166
    %p178 = scmp.eq.s32.totalorder %s25, 1
    %p179 = por %p177, %p178
    %p181 = scmp.ne.s32.totalorder %s166, %s180
    %p182 = scmp.eq.s32.totalorder %s25, 0
    %p183 = por %p181, %p182
    %s185 = sadd.s32 %s184, 1
    %p188 = scmp.eq.s32.totalorder %s19, 1
    %p189 = scmp.ne.s32.totalorder %s184, %s186
    %p190 = scmp.eq.s32.totalorder %s19, 0
    %p191 = por %p189, %p190
    %p192 = scmp.ne.s32.totalorder %s184, %s186
    %p193 = scmp.eq.s32.totalorder %s24, 1
    %p194 = por %p192, %p193
    %p195 = scmp.ne.s32.totalorder %s186, %s187
    %p196 = scmp.eq.s32.totalorder %s24, 0
    %p197 = por %p195, %p196
    %p198 = scmp.ne.s32.totalorder %s186, %s187
    %p199 = scmp.eq.s32.totalorder %s25, 1
    %p200 = por %p198, %p199
    %p202 = scmp.ne.s32.totalorder %s187, %s201
    %p203 = scmp.eq.s32.totalorder %s25, 0
    %p204 = por %p202, %p203
    %s206 = sadd.s32 %s205, 1
    %p209 = scmp.eq.s32.totalorder %s19, 1
    %p210 = scmp.ne.s32.totalorder %s205, %s207
    %p211 = scmp.eq.s32.totalorder %s19, 0
    %p212 = por %p210, %p211
    %p213 = scmp.ne.s32.totalorder %s205, %s207
    %p214 = scmp.eq.s32.totalorder %s24, 1
    %p215 = por %p213, %p214
    %p216 = scmp.ne.s32.totalorder %s207, %s208
    %p217 = scmp.eq.s32.totalorder %s24, 0
    %p218 = por %p216, %p217
    %p219 = scmp.ne.s32.totalorder %s207, %s208
    %p220 = scmp.eq.s32.totalorder %s25, 1
    %p221 = por %p219, %p220
    %p223 = scmp.ne.s32.totalorder %s208, %s222
    %p224 = scmp.eq.s32.totalorder %s25, 0
    %p225 = por %p223, %p224
    %s227 = sadd.s32 %s226, 1
    %p230 = scmp.eq.s32.totalorder %s19, 1
    %p231 = scmp.ne.s32.totalorder %s226, %s228
    %p232 = scmp.eq.s32.totalorder %s19, 0
    %p233 = por %p231, %p232
    %p234 = scmp.ne.s32.totalorder %s226, %s228
    %p235 = scmp.eq.s32.totalorder %s24, 1
    %p236 = por %p234, %p235
    %p237 = scmp.ne.s32.totalorder %s228, %s229
    %p238 = scmp.eq.s32.totalorder %s24, 0
    %p239 = por %p237, %p238
    %p240 = scmp.ne.s32.totalorder %s228, %s229
    %p241 = scmp.eq.s32.totalorder %s25, 1
    %p242 = por %p240, %p241
    %p244 = scmp.ne.s32.totalorder %s229, %s243
    %p245 = scmp.eq.s32.totalorder %s25, 0
    %p246 = por %p244, %p245
    %s248 = sadd.s32 %s247, 1
    %p251 = scmp.eq.s32.totalorder %s19, 1
    %p252 = scmp.ne.s32.totalorder %s247, %s249
    %p253 = scmp.eq.s32.totalorder %s19, 0
    %p254 = por %p252, %p253
    %p255 = scmp.ne.s32.totalorder %s247, %s249
    %p256 = scmp.eq.s32.totalorder %s24, 1
    %p257 = por %p255, %p256
    %p258 = scmp.ne.s32.totalorder %s249, %s250
    %p259 = scmp.eq.s32.totalorder %s24, 0
    %p260 = por %p258, %p259
    %p261 = scmp.ne.s32.totalorder %s249, %s250
    %p262 = scmp.eq.s32.totalorder %s25, 1
    %p263 = por %p261, %p262
    %p265 = scmp.ne.s32.totalorder %s250, %s264
    %p266 = scmp.eq.s32.totalorder %s25, 0
    %p267 = por %p265, %p266
    %s269 = sadd.s32 %s268, 1
    %p272 = scmp.eq.s32.totalorder %s19, 1
    %p273 = scmp.ne.s32.totalorder %s268, %s270
    %p274 = scmp.eq.s32.totalorder %s19, 0
    %p275 = por %p273, %p274
    %p276 = scmp.ne.s32.totalorder %s268, %s270
    %p277 = scmp.eq.s32.totalorder %s24, 1
    %p278 = por %p276, %p277
    %p279 = scmp.ne.s32.totalorder %s270, %s271
    %p280 = scmp.eq.s32.totalorder %s24, 0
    %p281 = por %p279, %p280
    %p282 = scmp.ne.s32.totalorder %s270, %s271
    %p283 = scmp.eq.s32.totalorder %s25, 1
    %p284 = por %p282, %p283
    %p286 = scmp.ne.s32.totalorder %s271, %s285
    %p287 = scmp.eq.s32.totalorder %s25, 0
    %p288 = por %p286, %p287
    %s290 = sadd.s32 %s289, 1
    %p293 = scmp.eq.s32.totalorder %s19, 1
    %p294 = scmp.ne.s32.totalorder %s289, %s291
    %p295 = scmp.eq.s32.totalorder %s19, 0
    %p296 = por %p294, %p295
    %p297 = scmp.ne.s32.totalorder %s289, %s291
    %p298 = scmp.eq.s32.totalorder %s24, 1
    %p299 = por %p297, %p298
    %p300 = scmp.ne.s32.totalorder %s291, %s292
    %p301 = scmp.eq.s32.totalorder %s24, 0
    %p302 = por %p300, %p301
    %p303 = scmp.ne.s32.totalorder %s291, %s292
    %p304 = scmp.eq.s32.totalorder %s25, 1
    %p305 = por %p303, %p304
    %p307 = scmp.ne.s32.totalorder %s292, %s306
    %p308 = scmp.eq.s32.totalorder %s25, 0
    %p309 = por %p307, %p308
    %s310 = ssub.s32 %s19, %s26
    %p311 = scmp.eq.s32.totalorder %s310, 0
    %s313 = sadd.s32 %s312, 1
    %s314 = scalar_select %p311, %s312, %s313
    %p317 = pneg %p311
    %p318 = scmp.eq.s32.totalorder %s19, 1
    %p319 = por %p317, %p318
    %p320 = scmp.ne.s32.totalorder %s312, %s315
    %p321 = scmp.eq.s32.totalorder %s19, 0
    %p322 = por %p320, %p321
    %p323 = scmp.ne.s32.totalorder %s312, %s315
    %p324 = scmp.eq.s32.totalorder %s24, 1
    %p325 = por %p323, %p324
    %p326 = scmp.ne.s32.totalorder %s315, %s316
    %p327 = scmp.eq.s32.totalorder %s24, 0
    %p328 = por %p326, %p327
    %p329 = scmp.ne.s32.totalorder %s315, %s316
    %p330 = scmp.eq.s32.totalorder %s25, 1
    %p331 = por %p329, %p330
    %p333 = scmp.ne.s32.totalorder %s316, %s332
    %p334 = scmp.eq.s32.totalorder %s25, 0
    %p335 = por %p333, %p334
    %p336 = scmp.le.s32.totalorder 1, %s19
    %p337 = scmp.lt.s32.totalorder %s19, 3
    %p338 = pnand %p336, %p337
    %p339 = pneg %p338
    // Predicated region
    $region9: #{transformer_block.1} parent=5 // pred_check
      _
    $region10: #{transformer_block.1} parent=5 // pred_check_branch
      %341 = sbr.rel (%p338) target = $region12
    $region11: #{transformer_block.1} parent=5 // pred_region
      %s342 = ssub.s32 %s19, 1
      // Predicated region
      $region13: #{transformer_block.1} parent=11 // pred_check
        %p343 = pneg %p92
      $region14: #{transformer_block.1} parent=11 // pred_check_branch
        %345 = sbr.rel (%p343) target = $region16
      $region15: #{transformer_block.1} parent=11 // pred_region
        _
      $region16: #{transformer_block.1} parent=11 // pred_fallthru
        _
      // Predicated region
      $region17: #{transformer_block.1} parent=11 // pred_check
        %p346 = pneg %p113
      $region18: #{transformer_block.1} parent=11 // pred_check_branch
        %348 = sbr.rel (%p346) target = $region20
      $region19: #{transformer_block.1} parent=11 // pred_region
        _
      $region20: #{transformer_block.1} parent=11 // pred_fallthru
        _
      // Predicated region
      $region21: #{transformer_block.1} parent=11 // pred_check
        %p349 = pneg %p134
      $region22: #{transformer_block.1} parent=11 // pred_check_branch
        %351 = sbr.rel (%p349) target = $region24
      $region23: #{transformer_block.1} parent=11 // pred_region
        _
      $region24: #{transformer_block.1} parent=11 // pred_fallthru
        _
      // Predicated region
      $region25: #{transformer_block.1} parent=11 // pred_check
        %p352 = pneg %p155
      $region26: #{transformer_block.1} parent=11 // pred_check_branch
        %354 = sbr.rel (%p352) target = $region28
      $region27: #{transformer_block.1} parent=11 // pred_region
        _
      $region28: #{transformer_block.1} parent=11 // pred_fallthru
        _
      // Predicated region
      $region29: #{transformer_block.1} parent=11 // pred_check
        %p355 = pneg %p176
      $region30: #{transformer_block.1} parent=11 // pred_check_branch
        %357 = sbr.rel (%p355) target = $region32
      $region31: #{transformer_block.1} parent=11 // pred_region
        _
      $region32: #{transformer_block.1} parent=11 // pred_fallthru
        _
      // Predicated region
      $region33: #{transformer_block.1} parent=11 // pred_check
        %p358 = pneg %p197
      $region34: #{transformer_block.1} parent=11 // pred_check_branch
        %360 = sbr.rel (%p358) target = $region36
      $region35: #{transformer_block.1} parent=11 // pred_region
        _
      $region36: #{transformer_block.1} parent=11 // pred_fallthru
        _
      // Predicated region
      $region37: #{transformer_block.1} parent=11 // pred_check
        %p361 = pneg %p218
      $region38: #{transformer_block.1} parent=11 // pred_check_branch
        %363 = sbr.rel (%p361) target = $region40
      $region39: #{transformer_block.1} parent=11 // pred_region
        _
      $region40: #{transformer_block.1} parent=11 // pred_fallthru
        _
      // Predicated region
      $region41: #{transformer_block.1} parent=11 // pred_check
        %p364 = pneg %p239
      $region42: #{transformer_block.1} parent=11 // pred_check_branch
        %366 = sbr.rel (%p364) target = $region44
      $region43: #{transformer_block.1} parent=11 // pred_region
        _
      $region44: #{transformer_block.1} parent=11 // pred_fallthru
        _
      // Predicated region
      $region45: #{transformer_block.1} parent=11 // pred_check
        %p367 = pneg %p260
      $region46: #{transformer_block.1} parent=11 // pred_check_branch
        %369 = sbr.rel (%p367) target = $region48
      $region47: #{transformer_block.1} parent=11 // pred_region
        _
      $region48: #{transformer_block.1} parent=11 // pred_fallthru
        _
      // Predicated region
      $region49: #{transformer_block.1} parent=11 // pred_check
        %p370 = pneg %p281
      $region50: #{transformer_block.1} parent=11 // pred_check_branch
        %372 = sbr.rel (%p370) target = $region52
      $region51: #{transformer_block.1} parent=11 // pred_region
        _
      $region52: #{transformer_block.1} parent=11 // pred_fallthru
        _
      // Predicated region
      $region53: #{transformer_block.1} parent=11 // pred_check
        %p373 = pneg %p302
      $region54: #{transformer_block.1} parent=11 // pred_check_branch
        %375 = sbr.rel (%p373) target = $region56
      $region55: #{transformer_block.1} parent=11 // pred_region
        _
      $region56: #{transformer_block.1} parent=11 // pred_fallthru
        _
    $region12: #{transformer_block.1} parent=5 // pred_fallthru
      _
    %p376 = scmp.lt.s32.totalorder %s19, 2
    // Predicated region
    $region57: #{transformer_block.1} parent=5 // pred_check
      %p377 = pneg %p376
    $region58: #{transformer_block.1} parent=5 // pred_check_branch
      %379 = sbr.rel (%p377) target = $region60
    $region59: #{transformer_block.1} parent=5 // pred_region
      // Predicated region
      $region61: #{transformer_block.1} parent=59 // pred_check
        %p380 = pneg %p39
      $region62: #{transformer_block.1} parent=59 // pred_check_branch
        %382 = sbr.rel (%p380) target = $region64
      $region63: #{transformer_block.1} parent=59 // pred_region
        %p383 = scmp.lt.s32.totalorder %s19, 1
        %s384 = scalar_select %p383, %s19, 1
        %s385 = smul.addr %s384, 3
        %s386 = smul.addr %s385, 8
        %s387 = scalar_lea.vmem %s0, %s386
      $region64: #{transformer_block.1} parent=59 // pred_fallthru
        _
      // Predicated region
      $region65: #{transformer_block.1} parent=59 // pred_check
        %p388 = pneg %p65
      $region66: #{transformer_block.1} parent=59 // pred_check_branch
        %390 = sbr.rel (%p388) target = $region68
      $region67: #{transformer_block.1} parent=59 // pred_region
        %p391 = scmp.lt.s32.totalorder %s19, 1
        %s392 = scalar_select %p391, %s19, 1
        %s393 = smul.addr %s392, 2
        %s394 = smul.addr %s393, 8
        %s395 = scalar_lea.vmem %s1, %s394
      $region68: #{transformer_block.1} parent=59 // pred_fallthru
        _
    $region60: #{transformer_block.1} parent=5 // pred_fallthru
      _
    %p396 = scmp.le.s32.totalorder 1, %s19
    %p397 = scmp.lt.s32.totalorder %s19, 3
    %p398 = pnand %p396, %p397
    %p399 = pneg %p398
    // Predicated region
    $region69: #{transformer_block.1} parent=5 // pred_check
      _
    $region70: #{transformer_block.1} parent=5 // pred_check_branch
      %401 = sbr.rel (%p398) target = $region72
    $region71: #{transformer_block.1} parent=5 // pred_region
      %s402 = ssub.s32 %s19, 1
      %p403 = scmp.lt.s32.totalorder %s24, 1
      %s404 = scalar_select %p403, %s24, 1
      %s405 = smul.addr %s404, 3
      %s406 = smul.addr %s405, 8
      %s407 = scalar_lea.vmem %s0, %s406
      %p408 = pneg %p45
      %p409 = pneg %p42
      %p410 = scmp.lt.s32.totalorder %s24, 1
      %s411 = scalar_select %p410, %s24, 1
      %s412 = smul.addr %s411, 2
      %s413 = smul.addr %s412, 8
      %s414 = scalar_lea.vmem %s1, %s413
      %p415 = pneg %p71
      %p416 = pneg %p68
      %p417 = pneg %p92
      %p418 = pneg %p89
      %p419 = pneg %p113
      %p420 = pneg %p110
      %p421 = pneg %p134
      %p422 = pneg %p131
      %p423 = pneg %p155
      %p424 = pneg %p152
      %p425 = pneg %p176
      %p426 = pneg %p173
      %p427 = pneg %p197
      %p428 = pneg %p194
      %p429 = pneg %p218
      %p430 = pneg %p215
      %p431 = pneg %p239
      %p432 = pneg %p236
      %p433 = pneg %p260
      %p434 = pneg %p257
      %p435 = pneg %p281
      %p436 = pneg %p278
      %p437 = pneg %p302
      %p438 = pneg %p299
      %p439 = pneg %p328
      %p440 = pneg %p325
      %p441 = scmp.lt.s32.totalorder %s24, 1
      %s442 = scalar_select %p441, %s24, 1
      %s443 = smul.addr %s442, 3
      %s444 = smul.addr %s443, 8
      %s445 = scalar_lea.vmem %s13, %s444
      %p446 = scmp.lt.s32.totalorder %s24, 1
      %s447 = scalar_select %p446, %s24, 1
      %s448 = smul.addr %s447, 3
      %s449 = smul.addr %s448, 8
      %s450 = scalar_lea.vmem %s0, %s449
      %p451 = scmp.lt.s32.totalorder %s24, 1
      %s452 = scalar_select %p451, %s24, 1
      %s453 = smul.addr %s452, 2
      %s454 = smul.addr %s453, 8
      %s455 = scalar_lea.vmem %s1, %s454
      %p456 = scmp.lt.s32.totalorder %s24, 1
      %s457 = scalar_select %p456, %s24, 1
      %s458 = smul.addr %s457, 3
      %s459 = smul.addr %s458, 8
      %s460 = scalar_lea.vmem %s13, %s459
      %v462 = vld [vmem:[%s450] sm:$0xff]
      %v463 = vld [vmem:[%s450 + $0x8] sm:$0xff]
      %v464 = vld [vmem:[%s450 + $0x10] sm:$0xff]
      %v465 = vld [vmem:[%s455] sm:$0xff]
      %v466 = vld [vmem:[%s455 + $0x8] sm:$0xf]
      %v467 = vlaneseq
      %v468 = vshrl.u32 %v467, 7
      %v469 = vadd.s32 %v468, 8
      %v470 = vadd.s32 %v468, 16
      %vm471 = vcmp.lt.s32.totalorder %v468, 8
      %vm472 = vcmp.lt.s32.totalorder %v469, 8
      %vm473 = vcmp.lt.s32.totalorder %v470, 8
      %v474 = vlaneseq
      %v475 = vshrl.u32 %v474, 7
      %v476 = vsub.s32 1, %v475
      %v477 = vrot.slane %v465, %v476
      %v478 = vlaneseq
      %v479 = vshrl.u32 %v478, 7
      %v480 = vsub.s32 0, %v479
      %v481 = vrot.slane %v465, %v480
      %v482 = vsel %vm471, %v477, %v481
      %v483 = vsel %vm472, %v477, %v481
      %v484 = vsel %vm473, %v477, %v481
      %v485 = vlaneseq
      %v486 = vshrl.u32 %v485, 7
      %v487 = vsub.s32 3, %v486
      %v488 = vrot.slane %v465, %v487
      %v489 = vlaneseq
      %v490 = vshrl.u32 %v489, 7
      %v491 = vsub.s32 2, %v490
      %v492 = vrot.slane %v465, %v491
      %v493 = vsel %vm471, %v488, %v492
      %v494 = vsel %vm472, %v488, %v492
      %v495 = vsel %vm473, %v488, %v492
      %v496 = vlaneseq
      %v497 = vshrl.u32 %v496, 7
      %v498 = vsub.s32 5, %v497
      %v499 = vrot.slane %v465, %v498
      %v500 = vlaneseq
      %v501 = vshrl.u32 %v500, 7
      %v502 = vsub.s32 4, %v501
      %v503 = vrot.slane %v465, %v502
      %v504 = vsel %vm471, %v499, %v503
      %v505 = vsel %vm472, %v499, %v503
      %v506 = vsel %vm473, %v499, %v503
      %v507 = vlaneseq
      %v508 = vshrl.u32 %v507, 7
      %v509 = vsub.s32 7, %v508
      %v510 = vrot.slane %v465, %v509
      %v511 = vlaneseq
      %v512 = vshrl.u32 %v511, 7
      %v513 = vsub.s32 6, %v512
      %v514 = vrot.slane %v465, %v513
      %v515 = vsel %vm471, %v510, %v514
      %v516 = vsel %vm472, %v510, %v514
      %v517 = vsel %vm473, %v510, %v514
      %v518 = vlaneseq
      %v519 = vshrl.u32 %v518, 7
      %v520 = vsub.s32 1, %v519
      %v521 = vrot.slane %v466, %v520
      %v522 = vlaneseq
      %v523 = vshrl.u32 %v522, 7
      %v524 = vsub.s32 0, %v523
      %v525 = vrot.slane %v466, %v524
      %v526 = vsel %vm471, %v521, %v525
      %v527 = vsel %vm472, %v521, %v525
      %v528 = vsel %vm473, %v521, %v525
      %v529 = vlaneseq
      %v530 = vshrl.u32 %v529, 7
      %v531 = vsub.s32 3, %v530
      %v532 = vrot.slane %v466, %v531
      %v533 = vlaneseq
      %v534 = vshrl.u32 %v533, 7
      %v535 = vsub.s32 2, %v534
      %v536 = vrot.slane %v466, %v535
      %v537 = vsel %vm471, %v532, %v536
      %v538 = vsel %vm472, %v532, %v536
      %v539 = vsel %vm473, %v532, %v536
      %vm540 = vcmask 261120
      %v541 = vsel %vm540, %v462, 0.0
      %542 = vadd.xlane.f32.xlu0 %v541
      %v543 = vpop.xlane.xlu0 %542
      %v544 = vsel %vm540, %v463, 0.0
      %545 = vadd.xlane.f32.xlu0 %v544
      %v546 = vpop.xlane.xlu0 %545
      %v547 = vsel %vm540, %v464, 0.0
      %548 = vadd.xlane.f32.xlu0 %v547
      %v549 = vpop.xlane.xlu0 %548
      %v550 = vrcp.pop 32.0
      %v551 = vmul.f32 %v543, %v550
      %v552 = vmul.f32 %v546, %v550
      %v553 = vmul.f32 %v549, %v550
      %v554 = vsub.f32 %v462, %v551
      %v555 = vsub.f32 %v463, %v552
      %v556 = vsub.f32 %v464, %v553
      %v557 = vmul.f32 %v554, %v554
      %v558 = vmul.f32 %v555, %v555
      %v559 = vmul.f32 %v556, %v556
      %v560 = vsel %vm540, %v557, 0.0
      %561 = vadd.xlane.f32.xlu0 %v560
      %v562 = vpop.xlane.xlu0 %561
      %v563 = vsel %vm540, %v558, 0.0
      %564 = vadd.xlane.f32.xlu0 %v563
      %v565 = vpop.xlane.xlu0 %564
      %v566 = vsel %vm540, %v559, 0.0
      %567 = vadd.xlane.f32.xlu0 %v566
      %v568 = vpop.xlane.xlu0 %567
      %v569 = vmul.f32 %v562, %v550
      %v570 = vmul.f32 %v565, %v550
      %v571 = vmul.f32 %v568, %v550
      %v572 = vadd.f32 %v569, 1e-05
      %v573 = vadd.f32 %v570, 1e-05
      %v574 = vadd.f32 %v571, 1e-05
      %v575 = vrsqrt.pop %v572
      %v576 = vrsqrt.pop %v573
      %v577 = vrsqrt.pop %v574
      %v578 = vmul.f32 %v554, %v575
      %v579 = vmul.f32 %v555, %v576
      %v580 = vmul.f32 %v556, %v577
      %v581 = vadd.f32 %v493, 1.0
      %v582 = vadd.f32 %v494, 1.0
      %v583 = vadd.f32 %v495, 1.0
      %v584 = vmul.f32 %v578, %v581
      %v585 = vmul.f32 %v579, %v582
      %v586 = vmul.f32 %v580, %v583
      %v587 = vadd.f32 %v584, %v482
      %v588 = vadd.f32 %v585, %v483
      %v589 = vadd.f32 %v586, %v484
      %v590 = vld [vmem:[%s2] sm:$0xf]
      %v591 = vld [vmem:[%s2 + $0x4] sm:$0xf]
      %v592 = vld [vmem:[%s2 + $0x8] sm:$0xf]
      %v593 = vld [vmem:[%s2 + $0xc] sm:$0xf]
      %v594 = vpack.c.bf16 %v588, %v587
      %v595 = vpack.c.bf16 %v589, %v589
      %v596 = vld [vmem:[%s3] sm:$0x1]
      %v598 = vlaneseq
      %v599 = vshrl.u32 %v598, 7
      %v600 = vsub.s32 0, %v599
      %v601 = vrot.slane %v596, %v600
      %v607 = vunpack.c.l.b16 %v590
      %v608 = vunpack.c.l.b16 %v591
      %v609 = vunpack.c.l.b16 %v592
      %v610 = vunpack.c.l.b16 %v593
      %v611 = vpack.c.b16 %v608, %v607
      %v612 = vpack.c.b16 %v610, %v609
      %v616 = vsel %vm540, %v594, 0
      %v619 = vsel %vm540, %v595, 0
      %621 = vmatprep.subr.bf16.mxu0 0
      %622 = vmatpush1.bf16.msra.mxu0 0
      %623 = vmatprep.subr.bf16.mxu0 0
      %624 = vmatpush1.bf16.msra.mxu0 0
      %625 = vmatprep.subr.bf16.mxu0 0
      %626 = vmatpush1.bf16.msra.mxu0 0
      %627 = vmatprep.subr.bf16.mxu0 0
      %628 = vmatpush1.bf16.msra.mxu0 0
      %629 = vmatprep.subr.bf16.mxu0 0
      %630 = vmatpush1.bf16.msra.mxu0 0
      %631 = vmatprep.subr.bf16.mxu0 0
      %632 = vmatpush1.bf16.msra.mxu0 0
      %633 = vmatprep.subr.bf16.mxu0 0
      %634 = vmatpush1.bf16.msra.mxu0 %v612
      %635 = vmatprep.subr.bf16.mxu0 0
      %636 = vmatpush1.bf16.msra.mxu0 %v611
      %637 = vmatprep.subr.bf16.mxu0 0
      %638 = vmatpush2.bf16.msra.mxu0 0
      %639 = vmatprep.subr.bf16.mxu0 0
      %640 = vmatpush2.bf16.msra.mxu0 0
      %641 = vmatprep.subr.bf16.mxu0 0
      %642 = vmatpush2.bf16.msra.mxu0 0
      %643 = vmatprep.subr.bf16.mxu0 0
      %644 = vmatpush2.bf16.msra.mxu0 0
      %645 = vmatprep.subr.bf16.mxu0 0
      %646 = vmatpush2.bf16.msra.mxu0 0
      %647 = vmatprep.subr.bf16.mxu0 0
      %648 = vmatpush2.bf16.msra.mxu0 0
      %649 = vmatprep.subr.bf16.mxu0 0
      %650 = vmatpush2.bf16.msra.mxu0 0
      %651 = vmatprep.subr.bf16.mxu0 0
      %652 = vmatpush2.bf16.msra.mxu0 0
      %653 = vmatprep.mubr.bf16.mxu0 0
      %654 = vmatmul.mubr.bf16.gmra.mxu0 %v616
      %v655 = vpop.f32.mrf.mxu0
      %v656 = vadd.f32 %v601, %v655
      %v657 = vpop.f32.mrf.mxu0
      %v658 = vpop.f32.mrf.mxu0
      %v659 = vadd.f32 %v601, %v658
      %v660 = vpop.f32.mrf.mxu0
      %661 = vmatprep.mubr.bf16.mxu0 0
      %662 = vmatmul.mubr.bf16.gmra.mxu0 %v619
      %v663 = vpop.f32.mrf.mxu0
      %v664 = vadd.f32 %v601, %v663
      %v665 = vpop.f32.mrf.mxu0
      %v666 = vpop.f32.mrf.mxu0
      %v667 = vpop.f32.mrf.mxu0
      %668 = vdwg.mxu0
      %672 = vrot.lane.b32.xlu0 %v656, 120
      %v673 = vpop.permute.xlu0 %672
      %674 = vrot.lane.b32.xlu0 %v659, 120
      %v675 = vpop.permute.xlu0 %674
      %676 = vrot.lane.b32.xlu0 %v664, 120
      %v677 = vpop.permute.xlu0 %676
      %681 = vrot.lane.b32.xlu0 %v656, 112
      %v682 = vpop.permute.xlu0 %681
      %683 = vrot.lane.b32.xlu0 %v659, 112
      %v684 = vpop.permute.xlu0 %683
      %685 = vrot.lane.b32.xlu0 %v664, 112
      %v686 = vpop.permute.xlu0 %685
      %690 = vrot.lane.b32.xlu0 %v656, 104
      %v691 = vpop.permute.xlu0 %690
      %692 = vrot.lane.b32.xlu0 %v659, 104
      %v693 = vpop.permute.xlu0 %692
      %694 = vrot.lane.b32.xlu0 %v664, 104
      %v695 = vpop.permute.xlu0 %694
      %vm699 = vcmask 64512
      %v700 = vsel %vm699, %v656, 0.0
      %701 = vadd.xlane.f32.xlu0 %v700
      %v702 = vpop.xlane.xlu0 %701
      %v703 = vsel %vm699, %v659, 0.0
      %704 = vadd.xlane.f32.xlu0 %v703
      %v705 = vpop.xlane.xlu0 %704
      %v706 = vsel %vm699, %v664, 0.0
      %707 = vadd.xlane.f32.xlu0 %v706
      %v708 = vpop.xlane.xlu0 %707
      %v709 = vsel %vm699, %v673, 0.0
      %710 = vadd.xlane.f32.xlu0 %v709
      %v711 = vpop.xlane.xlu0 %710
      %v712 = vsel %vm699, %v675, 0.0
      %713 = vadd.xlane.f32.xlu0 %v712
      %v714 = vpop.xlane.xlu0 %713
      %v715 = vsel %vm699, %v677, 0.0
      %716 = vadd.xlane.f32.xlu0 %v715
      %v717 = vpop.xlane.xlu0 %716
      %v718 = vsel %vm699, %v682, 0.0
      %719 = vadd.xlane.f32.xlu0 %v718
      %v720 = vpop.xlane.xlu0 %719
      %v721 = vsel %vm699, %v684, 0.0
      %722 = vadd.xlane.f32.xlu0 %v721
      %v723 = vpop.xlane.xlu0 %722
      %v724 = vsel %vm699, %v686, 0.0
      %725 = vadd.xlane.f32.xlu0 %v724
      %v726 = vpop.xlane.xlu0 %725
      %v727 = vsel %vm699, %v691, 0.0
      %728 = vadd.xlane.f32.xlu0 %v727
      %v729 = vpop.xlane.xlu0 %728
      %v730 = vsel %vm699, %v693, 0.0
      %731 = vadd.xlane.f32.xlu0 %v730
      %v732 = vpop.xlane.xlu0 %731
      %v733 = vsel %vm699, %v695, 0.0
      %734 = vadd.xlane.f32.xlu0 %v733
      %v735 = vpop.xlane.xlu0 %734
      %v736 = vrcp.pop 8.0
      %v737 = vmul.f32 %v702, %v736
      %v738 = vmul.f32 %v705, %v736
      %v739 = vmul.f32 %v708, %v736
      %v740 = vmul.f32 %v711, %v736
      %v741 = vmul.f32 %v714, %v736
      %v742 = vmul.f32 %v717, %v736
      %v743 = vmul.f32 %v720, %v736
      %v744 = vmul.f32 %v723, %v736
      %v745 = vmul.f32 %v726, %v736
      %v746 = vmul.f32 %v729, %v736
      %v747 = vmul.f32 %v732, %v736
      %v748 = vmul.f32 %v735, %v736
      %v749 = vsub.f32 %v656, %v737
      %v750 = vsub.f32 %v659, %v738
      %v751 = vsub.f32 %v664, %v739
      %v752 = vsub.f32 %v673, %v740
      %v753 = vsub.f32 %v675, %v741
      %v754 = vsub.f32 %v677, %v742
      %v755 = vsub.f32 %v682, %v743
      %v756 = vsub.f32 %v684, %v744
      %v757 = vsub.f32 %v686, %v745
      %v758 = vsub.f32 %v691, %v746
      %v759 = vsub.f32 %v693, %v747
      %v760 = vsub.f32 %v695, %v748
      %v761 = vmul.f32 %v749, %v749
      %v762 = vmul.f32 %v750, %v750
      %v763 = vmul.f32 %v751, %v751
      %v764 = vmul.f32 %v752, %v752
      %v765 = vmul.f32 %v753, %v753
      %v766 = vmul.f32 %v754, %v754
      %v767 = vmul.f32 %v755, %v755
      %v768 = vmul.f32 %v756, %v756
      %v769 = vmul.f32 %v757, %v757
      %v770 = vmul.f32 %v758, %v758
      %v771 = vmul.f32 %v759, %v759
      %v772 = vmul.f32 %v760, %v760
      %v773 = vsel %vm699, %v761, 0.0
      %774 = vadd.xlane.f32.xlu0 %v773
      %v775 = vpop.xlane.xlu0 %774
      %v776 = vsel %vm699, %v762, 0.0
      %777 = vadd.xlane.f32.xlu0 %v776
      %v778 = vpop.xlane.xlu0 %777
      %v779 = vsel %vm699, %v763, 0.0
      %780 = vadd.xlane.f32.xlu0 %v779
      %v781 = vpop.xlane.xlu0 %780
      %v782 = vsel %vm699, %v764, 0.0
      %783 = vadd.xlane.f32.xlu0 %v782
      %v784 = vpop.xlane.xlu0 %783
      %v785 = vsel %vm699, %v765, 0.0
      %786 = vadd.xlane.f32.xlu0 %v785
      %v787 = vpop.xlane.xlu0 %786
      %v788 = vsel %vm699, %v766, 0.0
      %789 = vadd.xlane.f32.xlu0 %v788
      %v790 = vpop.xlane.xlu0 %789
      %v791 = vsel %vm699, %v767, 0.0
      %792 = vadd.xlane.f32.xlu0 %v791
      %v793 = vpop.xlane.xlu0 %792
      %v794 = vsel %vm699, %v768, 0.0
      %795 = vadd.xlane.f32.xlu0 %v794
      %v796 = vpop.xlane.xlu0 %795
      %v797 = vsel %vm699, %v769, 0.0
      %798 = vadd.xlane.f32.xlu0 %v797
      %v799 = vpop.xlane.xlu0 %798
      %v800 = vsel %vm699, %v770, 0.0
      %801 = vadd.xlane.f32.xlu0 %v800
      %v802 = vpop.xlane.xlu0 %801
      %v803 = vsel %vm699, %v771, 0.0
      %804 = vadd.xlane.f32.xlu0 %v803
      %v805 = vpop.xlane.xlu0 %804
      %v806 = vsel %vm699, %v772, 0.0
      %807 = vadd.xlane.f32.xlu0 %v806
      %v808 = vpop.xlane.xlu0 %807
      %v809 = vmul.f32 %v775, %v736
      %v810 = vmul.f32 %v778, %v736
      %v811 = vmul.f32 %v781, %v736
      %v812 = vmul.f32 %v784, %v736
      %v813 = vmul.f32 %v787, %v736
      %v814 = vmul.f32 %v790, %v736
      %v815 = vmul.f32 %v793, %v736
      %v816 = vmul.f32 %v796, %v736
      %v817 = vmul.f32 %v799, %v736
      %v818 = vmul.f32 %v802, %v736
      %v819 = vmul.f32 %v805, %v736
      %v820 = vmul.f32 %v808, %v736
      %v821 = vadd.f32 %v809, 1e-05
      %v822 = vadd.f32 %v810, 1e-05
      %v823 = vadd.f32 %v811, 1e-05
      %v824 = vadd.f32 %v812, 1e-05
      %v825 = vadd.f32 %v813, 1e-05
      %v826 = vadd.f32 %v814, 1e-05
      %v827 = vadd.f32 %v815, 1e-05
      %v828 = vadd.f32 %v816, 1e-05
      %v829 = vadd.f32 %v817, 1e-05
      %v830 = vadd.f32 %v818, 1e-05
      %v831 = vadd.f32 %v819, 1e-05
      %v832 = vadd.f32 %v820, 1e-05
      %v833 = vrsqrt.pop %v821
      %v834 = vrsqrt.pop %v822
      %v835 = vrsqrt.pop %v823
      %v836 = vrsqrt.pop %v824
      %v837 = vrsqrt.pop %v825
      %v838 = vrsqrt.pop %v826
      %v839 = vrsqrt.pop %v827
      %v840 = vrsqrt.pop %v828
      %v841 = vrsqrt.pop %v829
      %v842 = vrsqrt.pop %v830
      %v843 = vrsqrt.pop %v831
      %v844 = vrsqrt.pop %v832
      %v845 = vmul.f32 %v749, %v833
      %v846 = vmul.f32 %v750, %v834
      %v847 = vmul.f32 %v751, %v835
      %v848 = vmul.f32 %v752, %v836
      %v849 = vmul.f32 %v753, %v837
      %v850 = vmul.f32 %v754, %v838
      %v851 = vmul.f32 %v755, %v839
      %v852 = vmul.f32 %v756, %v840
      %v853 = vmul.f32 %v757, %v841
      %v854 = vmul.f32 %v758, %v842
      %v855 = vmul.f32 %v759, %v843
      %v856 = vmul.f32 %v760, %v844
      %857 = vrot.lane.b32.xlu0 %v656, 96
      %v858 = vpop.permute.xlu0 %857
      %859 = vrot.lane.b32.xlu0 %v659, 96
      %v860 = vpop.permute.xlu0 %859
      %861 = vrot.lane.b32.xlu0 %v664, 96
      %v862 = vpop.permute.xlu0 %861
      %863 = vrot.lane.b32.xlu0 %v673, 96
      %v864 = vpop.permute.xlu0 %863
      %865 = vrot.lane.b32.xlu0 %v675, 96
      %v866 = vpop.permute.xlu0 %865
      %867 = vrot.lane.b32.xlu0 %v677, 96
      %v868 = vpop.permute.xlu0 %867
      %869 = vrot.lane.b32.xlu0 %v682, 96
      %v870 = vpop.permute.xlu0 %869
      %871 = vrot.lane.b32.xlu0 %v684, 96
      %v872 = vpop.permute.xlu0 %871
      %873 = vrot.lane.b32.xlu0 %v686, 96
      %v874 = vpop.permute.xlu0 %873
      %875 = vrot.lane.b32.xlu0 %v691, 96
      %v876 = vpop.permute.xlu0 %875
      %877 = vrot.lane.b32.xlu0 %v693, 96
      %v878 = vpop.permute.xlu0 %877
      %879 = vrot.lane.b32.xlu0 %v695, 96
      %v880 = vpop.permute.xlu0 %879
      %v893 = vsel %vm699, %v858, 0.0
      %894 = vadd.xlane.f32.xlu0 %v893
      %v895 = vpop.xlane.xlu0 %894
      %v896 = vsel %vm699, %v860, 0.0
      %897 = vadd.xlane.f32.xlu0 %v896
      %v898 = vpop.xlane.xlu0 %897
      %v899 = vsel %vm699, %v862, 0.0
      %900 = vadd.xlane.f32.xlu0 %v899
      %v901 = vpop.xlane.xlu0 %900
      %v902 = vsel %vm699, %v864, 0.0
      %903 = vadd.xlane.f32.xlu0 %v902
      %v904 = vpop.xlane.xlu0 %903
      %v905 = vsel %vm699, %v866, 0.0
      %906 = vadd.xlane.f32.xlu0 %v905
      %v907 = vpop.xlane.xlu0 %906
      %v908 = vsel %vm699, %v868, 0.0
      %909 = vadd.xlane.f32.xlu0 %v908
      %v910 = vpop.xlane.xlu0 %909
      %v911 = vsel %vm699, %v870, 0.0
      %912 = vadd.xlane.f32.xlu0 %v911
      %v913 = vpop.xlane.xlu0 %912
      %v914 = vsel %vm699, %v872, 0.0
      %915 = vadd.xlane.f32.xlu0 %v914
      %v916 = vpop.xlane.xlu0 %915
      %v917 = vsel %vm699, %v874, 0.0
      %918 = vadd.xlane.f32.xlu0 %v917
      %v919 = vpop.xlane.xlu0 %918
      %v920 = vsel %vm699, %v876, 0.0
      %921 = vadd.xlane.f32.xlu0 %v920
      %v922 = vpop.xlane.xlu0 %921
      %v923 = vsel %vm699, %v878, 0.0
      %924 = vadd.xlane.f32.xlu0 %v923
      %v925 = vpop.xlane.xlu0 %924
      %v926 = vsel %vm699, %v880, 0.0
      %927 = vadd.xlane.f32.xlu0 %v926
      %v928 = vpop.xlane.xlu0 %927
      %v929 = vmul.f32 %v895, %v736
      %v930 = vmul.f32 %v898, %v736
      %v931 = vmul.f32 %v901, %v736
      %v932 = vmul.f32 %v904, %v736
      %v933 = vmul.f32 %v907, %v736
      %v934 = vmul.f32 %v910, %v736
      %v935 = vmul.f32 %v913, %v736
      %v936 = vmul.f32 %v916, %v736
      %v937 = vmul.f32 %v919, %v736
      %v938 = vmul.f32 %v922, %v736
      %v939 = vmul.f32 %v925, %v736
      %v940 = vmul.f32 %v928, %v736
      %v941 = vsub.f32 %v656, %v929
      %v942 = vsub.f32 %v659, %v930
      %v943 = vsub.f32 %v664, %v931
      %v944 = vsub.f32 %v673, %v932
      %v945 = vsub.f32 %v675, %v933
      %v946 = vsub.f32 %v677, %v934
      %v947 = vsub.f32 %v682, %v935
      %v948 = vsub.f32 %v684, %v936
      %v949 = vsub.f32 %v686, %v937
      %v950 = vsub.f32 %v691, %v938
      %v951 = vsub.f32 %v693, %v939
      %v952 = vsub.f32 %v695, %v940
      %v953 = vmul.f32 %v941, %v941
      %v954 = vmul.f32 %v942, %v942
      %v955 = vmul.f32 %v943, %v943
      %v956 = vmul.f32 %v944, %v944
      %v957 = vmul.f32 %v945, %v945
      %v958 = vmul.f32 %v946, %v946
      %v959 = vmul.f32 %v947, %v947
      %v960 = vmul.f32 %v948, %v948
      %v961 = vmul.f32 %v949, %v949
      %v962 = vmul.f32 %v950, %v950
      %v963 = vmul.f32 %v951, %v951
      %v964 = vmul.f32 %v952, %v952
      %977 = vrot.lane.b32.xlu0 %v953, 96
      %v978 = vpop.permute.xlu0 %977
      %979 = vrot.lane.b32.xlu0 %v954, 96
      %v980 = vpop.permute.xlu0 %979
      %981 = vrot.lane.b32.xlu0 %v955, 96
      %v982 = vpop.permute.xlu0 %981
      %983 = vrot.lane.b32.xlu0 %v956, 96
      %v984 = vpop.permute.xlu0 %983
      %985 = vrot.lane.b32.xlu0 %v957, 96
      %v986 = vpop.permute.xlu0 %985
      %987 = vrot.lane.b32.xlu0 %v958, 96
      %v988 = vpop.permute.xlu0 %987
      %989 = vrot.lane.b32.xlu0 %v959, 96
      %v990 = vpop.permute.xlu0 %989
      %991 = vrot.lane.b32.xlu0 %v960, 96
      %v992 = vpop.permute.xlu0 %991
      %993 = vrot.lane.b32.xlu0 %v961, 96
      %v994 = vpop.permute.xlu0 %993
      %995 = vrot.lane.b32.xlu0 %v962, 96
      %v996 = vpop.permute.xlu0 %995
      %997 = vrot.lane.b32.xlu0 %v963, 96
      %v998 = vpop.permute.xlu0 %997
      %999 = vrot.lane.b32.xlu0 %v964, 96
      %v1000 = vpop.permute.xlu0 %999
      %v1013 = vsel %vm699, %v978, 0.0
      %1014 = vadd.xlane.f32.xlu0 %v1013
      %v1015 = vpop.xlane.xlu0 %1014
      %v1016 = vsel %vm699, %v980, 0.0
      %1017 = vadd.xlane.f32.xlu0 %v1016
      %v1018 = vpop.xlane.xlu0 %1017
      %v1019 = vsel %vm699, %v982, 0.0
      %1020 = vadd.xlane.f32.xlu0 %v1019
      %v1021 = vpop.xlane.xlu0 %1020
      %v1022 = vsel %vm699, %v984, 0.0
      %1023 = vadd.xlane.f32.xlu0 %v1022
      %v1024 = vpop.xlane.xlu0 %1023
      %v1025 = vsel %vm699, %v986, 0.0
      %1026 = vadd.xlane.f32.xlu0 %v1025
      %v1027 = vpop.xlane.xlu0 %1026
      %v1028 = vsel %vm699, %v988, 0.0
      %1029 = vadd.xlane.f32.xlu0 %v1028
      %v1030 = vpop.xlane.xlu0 %1029
      %v1031 = vsel %vm699, %v990, 0.0
      %1032 = vadd.xlane.f32.xlu0 %v1031
      %v1033 = vpop.xlane.xlu0 %1032
      %v1034 = vsel %vm699, %v992, 0.0
      %1035 = vadd.xlane.f32.xlu0 %v1034
      %v1036 = vpop.xlane.xlu0 %1035
      %v1037 = vsel %vm699, %v994, 0.0
      %1038 = vadd.xlane.f32.xlu0 %v1037
      %v1039 = vpop.xlane.xlu0 %1038
      %v1040 = vsel %vm699, %v996, 0.0
      %1041 = vadd.xlane.f32.xlu0 %v1040
      %v1042 = vpop.xlane.xlu0 %1041
      %v1043 = vsel %vm699, %v998, 0.0
      %1044 = vadd.xlane.f32.xlu0 %v1043
      %v1045 = vpop.xlane.xlu0 %1044
      %v1046 = vsel %vm699, %v1000, 0.0
      %1047 = vadd.xlane.f32.xlu0 %v1046
      %v1048 = vpop.xlane.xlu0 %1047
      %v1049 = vmul.f32 %v1015, %v736
      %v1050 = vmul.f32 %v1018, %v736
      %v1051 = vmul.f32 %v1021, %v736
      %v1052 = vmul.f32 %v1024, %v736
      %v1053 = vmul.f32 %v1027, %v736
      %v1054 = vmul.f32 %v1030, %v736
      %v1055 = vmul.f32 %v1033, %v736
      %v1056 = vmul.f32 %v1036, %v736
      %v1057 = vmul.f32 %v1039, %v736
      %v1058 = vmul.f32 %v1042, %v736
      %v1059 = vmul.f32 %v1045, %v736
      %v1060 = vmul.f32 %v1048, %v736
      %v1061 = vadd.f32 %v1049, 1e-05
      %v1062 = vadd.f32 %v1050, 1e-05
      %v1063 = vadd.f32 %v1051, 1e-05
      %v1064 = vadd.f32 %v1052, 1e-05
      %v1065 = vadd.f32 %v1053, 1e-05
      %v1066 = vadd.f32 %v1054, 1e-05
      %v1067 = vadd.f32 %v1055, 1e-05
      %v1068 = vadd.f32 %v1056, 1e-05
      %v1069 = vadd.f32 %v1057, 1e-05
      %v1070 = vadd.f32 %v1058, 1e-05
      %v1071 = vadd.f32 %v1059, 1e-05
      %v1072 = vadd.f32 %v1060, 1e-05
      %v1073 = vrsqrt.pop %v1061
      %v1074 = vrsqrt.pop %v1062
      %v1075 = vrsqrt.pop %v1063
      %v1076 = vrsqrt.pop %v1064
      %v1077 = vrsqrt.pop %v1065
      %v1078 = vrsqrt.pop %v1066
      %v1079 = vrsqrt.pop %v1067
      %v1080 = vrsqrt.pop %v1068
      %v1081 = vrsqrt.pop %v1069
      %v1082 = vrsqrt.pop %v1070
      %v1083 = vrsqrt.pop %v1071
      %v1084 = vrsqrt.pop %v1072
      %v1085 = vmul.f32 %v941, %v1073
      %v1086 = vmul.f32 %v942, %v1074
      %v1087 = vmul.f32 %v943, %v1075
      %v1088 = vmul.f32 %v944, %v1076
      %v1089 = vmul.f32 %v945, %v1077
      %v1090 = vmul.f32 %v946, %v1078
      %v1091 = vmul.f32 %v947, %v1079
      %v1092 = vmul.f32 %v948, %v1080
      %v1093 = vmul.f32 %v949, %v1081
      %v1094 = vmul.f32 %v950, %v1082
      %v1095 = vmul.f32 %v951, %v1083
      %v1096 = vmul.f32 %v952, %v1084
      %v1097 = vld [vmem:[%s7] sm:$0xff]
      %v1098 = vld [vmem:[%s7 + $0x8] sm:$0xff]
      %v1099 = vld [vmem:[%s7 + $0x10] sm:$0xff]
      %v1100 = vld [vmem:[%s7 + $0x18] sm:$0xff]
      %v1101 = vld [vmem:[%s7 + $0x20] sm:$0xff]
      %v1102 = vld [vmem:[%s7 + $0x28] sm:$0xff]
      %v1103 = vld [vmem:[%s7 + $0x30] sm:$0xff]
      %v1104 = vld [vmem:[%s7 + $0x38] sm:$0xff]
      %v1105 = vld [vmem:[%s7 + $0x40] sm:$0xff]
      %v1106 = vld [vmem:[%s7 + $0x48] sm:$0xff]
      %v1107 = vld [vmem:[%s7 + $0x50] sm:$0xff]
      %v1108 = vld [vmem:[%s7 + $0x58] sm:$0xff]
      %v1109 = vld [vmem:[%s8] sm:$0xff]
      %v1110 = vld [vmem:[%s8 + $0x8] sm:$0xff]
      %v1111 = vld [vmem:[%s8 + $0x10] sm:$0xff]
      %v1112 = vld [vmem:[%s8 + $0x18] sm:$0xff]
      %v1113 = vld [vmem:[%s8 + $0x20] sm:$0xff]
      %v1114 = vld [vmem:[%s8 + $0x28] sm:$0xff]
      %v1115 = vld [vmem:[%s8 + $0x30] sm:$0xff]
      %v1116 = vld [vmem:[%s8 + $0x38] sm:$0xff]
      %v1117 = vld [vmem:[%s8 + $0x40] sm:$0xff]
      %v1118 = vld [vmem:[%s8 + $0x48] sm:$0xff]
      %v1119 = vld [vmem:[%s8 + $0x50] sm:$0xff]
      %v1120 = vld [vmem:[%s8 + $0x58] sm:$0xff]
      %v1121 = vld [vmem:[%s6] sm:$0xff]
      %v1122 = vmul.f32 %v845, %v1097
      %v1123 = vmul.f32 %v846, %v1098
      %v1124 = vmul.f32 %v847, %v1099
      %v1125 = vmul.f32 %v848, %v1100
      %v1126 = vmul.f32 %v849, %v1101
      %v1127 = vmul.f32 %v850, %v1102
      %v1128 = vmul.f32 %v851, %v1103
      %v1129 = vmul.f32 %v852, %v1104
      %v1130 = vmul.f32 %v853, %v1105
      %v1131 = vmul.f32 %v854, %v1106
      %v1132 = vmul.f32 %v855, %v1107
      %v1133 = vmul.f32 %v856, %v1108
      %v1135 = vsel %vm699, %v845, 0
      %v1138 = vsel %vm699, %v846, 0
      %v1141 = vsel %vm699, %v847, 0
      %v1144 = vsel %vm699, %v848, 0
      %v1147 = vsel %vm699, %v849, 0
      %v1150 = vsel %vm699, %v850, 0
      %v1153 = vsel %vm699, %v851, 0
      %v1156 = vsel %vm699, %v852, 0
      %v1159 = vsel %vm699, %v853, 0
      %v1162 = vsel %vm699, %v854, 0
      %v1165 = vsel %vm699, %v855, 0
      %v1168 = vsel %vm699, %v856, 0
      %1170 = vmatprep.subr.mxu0 0.0
      %1171 = vmatpush1.msra.mxu0 0.0
      %1172 = vmatprep.subr.mxu0 0.0
      %1173 = vmatpush1.msra.mxu0 0.0
      %1174 = vmatprep.subr.mxu0 0.0
      %1175 = vmatpush1.msra.mxu0 0.0
      %1176 = vmatprep.subr.mxu0 0.0
      %1177 = vmatpush1.msra.mxu0 0.0
      %1178 = vmatprep.subr.mxu0 0.0
      %1179 = vmatpush1.msra.mxu0 0.0
      %1180 = vmatprep.subr.mxu0 0.0
      %1181 = vmatpush1.msra.mxu0 0.0
      %1182 = vmatprep.subr.mxu0 0.0
      %1183 = vmatpush1.msra.mxu0 0.0
      %1184 = vmatprep.subr.mxu0 0.0
      %1185 = vmatpush1.msra.mxu0 0.0
      %1186 = vmatprep.subr.mxu0 0.0
      %1187 = vmatpush1.msra.mxu0 0.0
      %1188 = vmatprep.subr.mxu0 0.0
      %1189 = vmatpush1.msra.mxu0 0.0
      %1190 = vmatprep.subr.mxu0 0.0
      %1191 = vmatpush1.msra.mxu0 0.0
      %1192 = vmatprep.subr.mxu0 0.0
      %1193 = vmatpush1.msra.mxu0 0.0
      %1194 = vmatprep.subr.mxu0 0.0
      %1195 = vmatpush1.msra.mxu0 0.0
      %1196 = vmatprep.subr.mxu0 0.0
      %1197 = vmatpush1.msra.mxu0 0.0
      %1198 = vmatprep.subr.mxu0 0.0
      %1199 = vmatpush1.msra.mxu0 0.0
      %1200 = vmatprep.subr.mxu0 0.0
      %1201 = vmatpush1.msra.mxu0 %v1121
      %1202 = vmatprep.subr.mxu0 0.0
      %1203 = vmatpush2.msra.mxu0 0.0
      %1204 = vmatprep.subr.mxu0 0.0
      %1205 = vmatpush2.msra.mxu0 0.0
      %1206 = vmatprep.subr.mxu0 0.0
      %1207 = vmatpush2.msra.mxu0 0.0
      %1208 = vmatprep.subr.mxu0 0.0
      %1209 = vmatpush2.msra.mxu0 0.0
      %1210 = vmatprep.subr.mxu0 0.0
      %1211 = vmatpush2.msra.mxu0 0.0
      %1212 = vmatprep.subr.mxu0 0.0
      %1213 = vmatpush2.msra.mxu0 0.0
      %1214 = vmatprep.subr.mxu0 0.0
      %1215 = vmatpush2.msra.mxu0 0.0
      %1216 = vmatprep.subr.mxu0 0.0
      %1217 = vmatpush2.msra.mxu0 0.0
      %1218 = vmatprep.subr.mxu0 0.0
      %1219 = vmatpush2.msra.mxu0 0.0
      %1220 = vmatprep.subr.mxu0 0.0
      %1221 = vmatpush2.msra.mxu0 0.0
      %1222 = vmatprep.subr.mxu0 0.0
      %1223 = vmatpush2.msra.mxu0 0.0
      %1224 = vmatprep.subr.mxu0 0.0
      %1225 = vmatpush2.msra.mxu0 0.0
      %1226 = vmatprep.subr.mxu0 0.0
      %1227 = vmatpush2.msra.mxu0 0.0
      %1228 = vmatprep.subr.mxu0 0.0
      %1229 = vmatpush2.msra.mxu0 0.0
      %1230 = vmatprep.subr.mxu0 0.0
      %1231 = vmatpush2.msra.mxu0 0.0
      %1232 = vmatprep.subr.mxu0 0.0
      %1233 = vmatpush2.msra.mxu0 0.0
      %1234 = vmatprep.mubr.f32.mxu0 0.0
      %1235 = vmatmul.mubr.f32.gmra.mxu0 %v1135
      %v1236 = vpop.f32.mrf.mxu0
      %v1237 = vadd.f32 0.0, %v1236
      %v1238 = vpop.f32.mrf.mxu0
      %1239 = vmatprep.mubr.f32.mxu0 0.0
      %1240 = vmatmul.mubr.f32.gmra.mxu0 %v1138
      %v1241 = vpop.f32.mrf.mxu0
      %v1242 = vadd.f32 0.0, %v1241
      %v1243 = vpop.f32.mrf.mxu0
      %1244 = vmatprep.mubr.f32.mxu0 0.0
      %1245 = vmatmul.mubr.f32.gmra.mxu0 %v1141
      %v1246 = vpop.f32.mrf.mxu0
      %v1247 = vadd.f32 0.0, %v1246
      %v1248 = vpop.f32.mrf.mxu0
      %1249 = vmatprep.mubr.f32.mxu0 0.0
      %1250 = vmatmul.mubr.f32.gmra.mxu0 %v1144
      %v1251 = vpop.f32.mrf.mxu0
      %v1252 = vadd.f32 0.0, %v1251
      %v1253 = vpop.f32.mrf.mxu0
      %1254 = vmatprep.mubr.f32.mxu0 0.0
      %1255 = vmatmul.mubr.f32.gmra.mxu0 %v1147
      %v1256 = vpop.f32.mrf.mxu0
      %v1257 = vadd.f32 0.0, %v1256
      %v1258 = vpop.f32.mrf.mxu0
      %1259 = vmatprep.mubr.f32.mxu0 0.0
      %1260 = vmatmul.mubr.f32.gmra.mxu0 %v1150
      %v1261 = vpop.f32.mrf.mxu0
      %v1262 = vadd.f32 0.0, %v1261
      %v1263 = vpop.f32.mrf.mxu0
      %1264 = vmatprep.mubr.f32.mxu0 0.0
      %1265 = vmatmul.mubr.f32.gmra.mxu0 %v1153
      %v1266 = vpop.f32.mrf.mxu0
      %v1267 = vadd.f32 0.0, %v1266
      %v1268 = vpop.f32.mrf.mxu0
      %1269 = vmatprep.mubr.f32.mxu0 0.0
      %1270 = vmatmul.mubr.f32.gmra.mxu0 %v1156
      %v1271 = vpop.f32.mrf.mxu0
      %v1272 = vadd.f32 0.0, %v1271
      %v1273 = vpop.f32.mrf.mxu0
      %1274 = vmatprep.mubr.f32.mxu0 0.0
      %1275 = vmatmul.mubr.f32.gmra.mxu0 %v1159
      %v1276 = vpop.f32.mrf.mxu0
      %v1277 = vadd.f32 0.0, %v1276
      %v1278 = vpop.f32.mrf.mxu0
      %1279 = vmatprep.mubr.f32.mxu0 0.0
      %1280 = vmatmul.mubr.f32.gmra.mxu0 %v1162
      %v1281 = vpop.f32.mrf.mxu0
      %v1282 = vadd.f32 0.0, %v1281
      %v1283 = vpop.f32.mrf.mxu0
      %1284 = vmatprep.mubr.f32.mxu0 0.0
      %1285 = vmatmul.mubr.f32.gmra.mxu0 %v1165
      %v1286 = vpop.f32.mrf.mxu0
      %v1287 = vadd.f32 0.0, %v1286
      %v1288 = vpop.f32.mrf.mxu0
      %1289 = vmatprep.mubr.f32.mxu0 0.0
      %1290 = vmatmul.mubr.f32.gmra.mxu0 %v1168
      %v1291 = vpop.f32.mrf.mxu0
      %v1292 = vadd.f32 0.0, %v1291
      %v1293 = vpop.f32.mrf.mxu0
      %1294 = vdwg.mxu0
      %v1295 = vmul.f32 %v1237, %v1109
      %v1296 = vmul.f32 %v1242, %v1110
      %v1297 = vmul.f32 %v1247, %v1111
      %v1298 = vmul.f32 %v1252, %v1112
      %v1299 = vmul.f32 %v1257, %v1113
      %v1300 = vmul.f32 %v1262, %v1114
      %v1301 = vmul.f32 %v1267, %v1115
      %v1302 = vmul.f32 %v1272, %v1116
      %v1303 = vmul.f32 %v1277, %v1117
      %v1304 = vmul.f32 %v1282, %v1118
      %v1305 = vmul.f32 %v1287, %v1119
      %v1306 = vmul.f32 %v1292, %v1120
      %v1307 = vadd.f32 %v1122, %v1295
      %v1308 = vadd.f32 %v1123, %v1296
      %v1309 = vadd.f32 %v1124, %v1297
      %v1310 = vadd.f32 %v1125, %v1298
      %v1311 = vadd.f32 %v1126, %v1299
      %v1312 = vadd.f32 %v1127, %v1300
      %v1313 = vadd.f32 %v1128, %v1301
      %v1314 = vadd.f32 %v1129, %v1302
      %v1315 = vadd.f32 %v1130, %v1303
      %v1316 = vadd.f32 %v1131, %v1304
      %v1317 = vadd.f32 %v1132, %v1305
      %v1318 = vadd.f32 %v1133, %v1306
      %1331 = vrot.lane.b32.xlu0 %v1097, 32
      %v1332 = vpop.permute.xlu0 %1331
      %1333 = vrot.lane.b32.xlu0 %v1098, 32
      %v1334 = vpop.permute.xlu0 %1333
      %1335 = vrot.lane.b32.xlu0 %v1099, 32
      %v1336 = vpop.permute.xlu0 %1335
      %1337 = vrot.lane.b32.xlu0 %v1100, 32
      %v1338 = vpop.permute.xlu0 %1337
      %1339 = vrot.lane.b32.xlu0 %v1101, 32
      %v1340 = vpop.permute.xlu0 %1339
      %1341 = vrot.lane.b32.xlu0 %v1102, 32
      %v1342 = vpop.permute.xlu0 %1341
      %1343 = vrot.lane.b32.xlu0 %v1103, 32
      %v1344 = vpop.permute.xlu0 %1343
      %1345 = vrot.lane.b32.xlu0 %v1104, 32
      %v1346 = vpop.permute.xlu0 %1345
      %1347 = vrot.lane.b32.xlu0 %v1105, 32
      %v1348 = vpop.permute.xlu0 %1347
      %1349 = vrot.lane.b32.xlu0 %v1106, 32
      %v1350 = vpop.permute.xlu0 %1349
      %1351 = vrot.lane.b32.xlu0 %v1107, 32
      %v1352 = vpop.permute.xlu0 %1351
      %1353 = vrot.lane.b32.xlu0 %v1108, 32
      %v1354 = vpop.permute.xlu0 %1353
      %v1367 = vmul.f32 %v1085, %v1332
      %v1368 = vmul.f32 %v1086, %v1334
      %v1369 = vmul.f32 %v1087, %v1336
      %v1370 = vmul.f32 %v1088, %v1338
      %v1371 = vmul.f32 %v1089, %v1340
      %v1372 = vmul.f32 %v1090, %v1342
      %v1373 = vmul.f32 %v1091, %v1344
      %v1374 = vmul.f32 %v1092, %v1346
      %v1375 = vmul.f32 %v1093, %v1348
      %v1376 = vmul.f32 %v1094, %v1350
      %v1377 = vmul.f32 %v1095, %v1352
      %v1378 = vmul.f32 %v1096, %v1354
      %1391 = vrot.lane.b32.xlu0 %v1085, 96
      %v1392 = vpop.permute.xlu0 %1391
      %1393 = vrot.lane.b32.xlu0 %v1086, 96
      %v1394 = vpop.permute.xlu0 %1393
      %1395 = vrot.lane.b32.xlu0 %v1087, 96
      %v1396 = vpop.permute.xlu0 %1395
      %1397 = vrot.lane.b32.xlu0 %v1088, 96
      %v1398 = vpop.permute.xlu0 %1397
      %1399 = vrot.lane.b32.xlu0 %v1089, 96
      %v1400 = vpop.permute.xlu0 %1399
      %1401 = vrot.lane.b32.xlu0 %v1090, 96
      %v1402 = vpop.permute.xlu0 %1401
      %1403 = vrot.lane.b32.xlu0 %v1091, 96
      %v1404 = vpop.permute.xlu0 %1403
      %1405 = vrot.lane.b32.xlu0 %v1092, 96
      %v1406 = vpop.permute.xlu0 %1405
      %1407 = vrot.lane.b32.xlu0 %v1093, 96
      %v1408 = vpop.permute.xlu0 %1407
      %1409 = vrot.lane.b32.xlu0 %v1094, 96
      %v1410 = vpop.permute.xlu0 %1409
      %1411 = vrot.lane.b32.xlu0 %v1095, 96
      %v1412 = vpop.permute.xlu0 %1411
      %1413 = vrot.lane.b32.xlu0 %v1096, 96
      %v1414 = vpop.permute.xlu0 %1413
      %v1415 = vsel %vm699, %v1392, 0
      %v1417 = vsel %vm699, %v1394, 0
      %v1419 = vsel %vm699, %v1396, 0
      %v1421 = vsel %vm699, %v1398, 0
      %v1423 = vsel %vm699, %v1400, 0
      %v1425 = vsel %vm699, %v1402, 0
      %v1427 = vsel %vm699, %v1404, 0
      %v1429 = vsel %vm699, %v1406, 0
      %v1431 = vsel %vm699, %v1408, 0
      %v1433 = vsel %vm699, %v1410, 0
      %v1435 = vsel %vm699, %v1412, 0
      %v1437 = vsel %vm699, %v1414, 0
      %1439 = vmatprep.subr.mxu0 0.0
      %1440 = vmatpush1.msra.mxu0 0.0
      %1441 = vmatprep.subr.mxu0 0.0
      %1442 = vmatpush1.msra.mxu0 0.0
      %1443 = vmatprep.subr.mxu0 0.0
      %1444 = vmatpush1.msra.mxu0 0.0
      %1445 = vmatprep.subr.mxu0 0.0
      %1446 = vmatpush1.msra.mxu0 0.0
      %1447 = vmatprep.subr.mxu0 0.0
      %1448 = vmatpush1.msra.mxu0 0.0
      %1449 = vmatprep.subr.mxu0 0.0
      %1450 = vmatpush1.msra.mxu0 0.0
      %1451 = vmatprep.subr.mxu0 0.0
      %1452 = vmatpush1.msra.mxu0 0.0
      %1453 = vmatprep.subr.mxu0 0.0
      %1454 = vmatpush1.msra.mxu0 0.0
      %1455 = vmatprep.subr.mxu0 0.0
      %1456 = vmatpush1.msra.mxu0 0.0
      %1457 = vmatprep.subr.mxu0 0.0
      %1458 = vmatpush1.msra.mxu0 0.0
      %1459 = vmatprep.subr.mxu0 0.0
      %1460 = vmatpush1.msra.mxu0 0.0
      %1461 = vmatprep.subr.mxu0 0.0
      %1462 = vmatpush1.msra.mxu0 0.0
      %1463 = vmatprep.subr.mxu0 0.0
      %1464 = vmatpush1.msra.mxu0 0.0
      %1465 = vmatprep.subr.mxu0 0.0
      %1466 = vmatpush1.msra.mxu0 0.0
      %1467 = vmatprep.subr.mxu0 0.0
      %1468 = vmatpush1.msra.mxu0 0.0
      %1469 = vmatprep.subr.mxu0 0.0
      %1470 = vmatpush1.msra.mxu0 %v1121
      %1471 = vmatprep.subr.mxu0 0.0
      %1472 = vmatpush2.msra.mxu0 0.0
      %1473 = vmatprep.subr.mxu0 0.0
      %1474 = vmatpush2.msra.mxu0 0.0
      %1475 = vmatprep.subr.mxu0 0.0
      %1476 = vmatpush2.msra.mxu0 0.0
      %1477 = vmatprep.subr.mxu0 0.0
      %1478 = vmatpush2.msra.mxu0 0.0
      %1479 = vmatprep.subr.mxu0 0.0
      %1480 = vmatpush2.msra.mxu0 0.0
      %1481 = vmatprep.subr.mxu0 0.0
      %1482 = vmatpush2.msra.mxu0 0.0
      %1483 = vmatprep.subr.mxu0 0.0
      %1484 = vmatpush2.msra.mxu0 0.0
      %1485 = vmatprep.subr.mxu0 0.0
      %1486 = vmatpush2.msra.mxu0 0.0
      %1487 = vmatprep.subr.mxu0 0.0
      %1488 = vmatpush2.msra.mxu0 0.0
      %1489 = vmatprep.subr.mxu0 0.0
      %1490 = vmatpush2.msra.mxu0 0.0
      %1491 = vmatprep.subr.mxu0 0.0
      %1492 = vmatpush2.msra.mxu0 0.0
      %1493 = vmatprep.subr.mxu0 0.0
      %1494 = vmatpush2.msra.mxu0 0.0
      %1495 = vmatprep.subr.mxu0 0.0
      %1496 = vmatpush2.msra.mxu0 0.0
      %1497 = vmatprep.subr.mxu0 0.0
      %1498 = vmatpush2.msra.mxu0 0.0
      %1499 = vmatprep.subr.mxu0 0.0
      %1500 = vmatpush2.msra.mxu0 0.0
      %1501 = vmatprep.subr.mxu0 0.0
      %1502 = vmatpush2.msra.mxu0 0.0
      %1503 = vmatprep.mubr.f32.mxu0 0.0
      %1504 = vmatmul.mubr.f32.gmra.mxu0 %v1415
      %v1505 = vpop.f32.mrf.mxu0
      %v1506 = vadd.f32 0.0, %v1505
      %v1507 = vpop.f32.mrf.mxu0
      %1508 = vmatprep.mubr.f32.mxu0 0.0
      %1509 = vmatmul.mubr.f32.gmra.mxu0 %v1417
      %v1510 = vpop.f32.mrf.mxu0
      %v1511 = vadd.f32 0.0, %v1510
      %v1512 = vpop.f32.mrf.mxu0
      %1513 = vmatprep.mubr.f32.mxu0 0.0
      %1514 = vmatmul.mubr.f32.gmra.mxu0 %v1419
      %v1515 = vpop.f32.mrf.mxu0
      %v1516 = vadd.f32 0.0, %v1515
      %v1517 = vpop.f32.mrf.mxu0
      %1518 = vmatprep.mubr.f32.mxu0 0.0
      %1519 = vmatmul.mubr.f32.gmra.mxu0 %v1421
      %v1520 = vpop.f32.mrf.mxu0
      %v1521 = vadd.f32 0.0, %v1520
      %v1522 = vpop.f32.mrf.mxu0
      %1523 = vmatprep.mubr.f32.mxu0 0.0
      %1524 = vmatmul.mubr.f32.gmra.mxu0 %v1423
      %v1525 = vpop.f32.mrf.mxu0
      %v1526 = vadd.f32 0.0, %v1525
      %v1527 = vpop.f32.mrf.mxu0
      %1528 = vmatprep.mubr.f32.mxu0 0.0
      %1529 = vmatmul.mubr.f32.gmra.mxu0 %v1425
      %v1530 = vpop.f32.mrf.mxu0
      %v1531 = vadd.f32 0.0, %v1530
      %v1532 = vpop.f32.mrf.mxu0
      %1533 = vmatprep.mubr.f32.mxu0 0.0
      %1534 = vmatmul.mubr.f32.gmra.mxu0 %v1427
      %v1535 = vpop.f32.mrf.mxu0
      %v1536 = vadd.f32 0.0, %v1535
      %v1537 = vpop.f32.mrf.mxu0
      %1538 = vmatprep.mubr.f32.mxu0 0.0
      %1539 = vmatmul.mubr.f32.gmra.mxu0 %v1429
      %v1540 = vpop.f32.mrf.mxu0
      %v1541 = vadd.f32 0.0, %v1540
      %v1542 = vpop.f32.mrf.mxu0
      %1543 = vmatprep.mubr.f32.mxu0 0.0
      %1544 = vmatmul.mubr.f32.gmra.mxu0 %v1431
      %v1545 = vpop.f32.mrf.mxu0
      %v1546 = vadd.f32 0.0, %v1545
      %v1547 = vpop.f32.mrf.mxu0
      %1548 = vmatprep.mubr.f32.mxu0 0.0
      %1549 = vmatmul.mubr.f32.gmra.mxu0 %v1433
      %v1550 = vpop.f32.mrf.mxu0
      %v1551 = vadd.f32 0.0, %v1550
      %v1552 = vpop.f32.mrf.mxu0
      %1553 = vmatprep.mubr.f32.mxu0 0.0
      %1554 = vmatmul.mubr.f32.gmra.mxu0 %v1435
      %v1555 = vpop.f32.mrf.mxu0
      %v1556 = vadd.f32 0.0, %v1555
      %v1557 = vpop.f32.mrf.mxu0
      %1558 = vmatprep.mubr.f32.mxu0 0.0
      %1559 = vmatmul.mubr.f32.gmra.mxu0 %v1437
      %v1560 = vpop.f32.mrf.mxu0
      %v1561 = vadd.f32 0.0, %v1560
      %v1562 = vpop.f32.mrf.mxu0
      %1563 = vdwg.mxu0
      %v1564 = vmul.f32 %v1506, %v1109
      %v1565 = vmul.f32 %v1511, %v1110
      %v1566 = vmul.f32 %v1516, %v1111
      %v1567 = vmul.f32 %v1521, %v1112
      %v1568 = vmul.f32 %v1526, %v1113
      %v1569 = vmul.f32 %v1531, %v1114
      %v1570 = vmul.f32 %v1536, %v1115
      %v1571 = vmul.f32 %v1541, %v1116
      %v1572 = vmul.f32 %v1546, %v1117
      %v1573 = vmul.f32 %v1551, %v1118
      %v1574 = vmul.f32 %v1556, %v1119
      %v1575 = vmul.f32 %v1561, %v1120
      %1588 = vrot.lane.b32.xlu0 %v1564, 32
      %v1589 = vpop.permute.xlu0 %1588
      %1590 = vrot.lane.b32.xlu0 %v1565, 32
      %v1591 = vpop.permute.xlu0 %1590
      %1592 = vrot.lane.b32.xlu0 %v1566, 32
      %v1593 = vpop.permute.xlu0 %1592
      %1594 = vrot.lane.b32.xlu0 %v1567, 32
      %v1595 = vpop.permute.xlu0 %1594
      %1596 = vrot.lane.b32.xlu0 %v1568, 32
      %v1597 = vpop.permute.xlu0 %1596
      %1598 = vrot.lane.b32.xlu0 %v1569, 32
      %v1599 = vpop.permute.xlu0 %1598
      %1600 = vrot.lane.b32.xlu0 %v1570, 32
      %v1601 = vpop.permute.xlu0 %1600
      %1602 = vrot.lane.b32.xlu0 %v1571, 32
      %v1603 = vpop.permute.xlu0 %1602
      %1604 = vrot.lane.b32.xlu0 %v1572, 32
      %v1605 = vpop.permute.xlu0 %1604
      %1606 = vrot.lane.b32.xlu0 %v1573, 32
      %v1607 = vpop.permute.xlu0 %1606
      %1608 = vrot.lane.b32.xlu0 %v1574, 32
      %v1609 = vpop.permute.xlu0 %1608
      %1610 = vrot.lane.b32.xlu0 %v1575, 32
      %v1611 = vpop.permute.xlu0 %1610
      %v1624 = vadd.f32 %v1367, %v1589
      %v1625 = vadd.f32 %v1368, %v1591
      %v1626 = vadd.f32 %v1369, %v1593
      %v1627 = vadd.f32 %v1370, %v1595
      %v1628 = vadd.f32 %v1371, %v1597
      %v1629 = vadd.f32 %v1372, %v1599
      %v1630 = vadd.f32 %v1373, %v1601
      %v1631 = vadd.f32 %v1374, %v1603
      %v1632 = vadd.f32 %v1375, %v1605
      %v1633 = vadd.f32 %v1376, %v1607
      %v1634 = vadd.f32 %v1377, %v1609
      %v1635 = vadd.f32 %v1378, %v1611
      %v1636 = vmul.f32 %v1307, 0.35355338
      %v1637 = vmul.f32 %v1308, 0.35355338
      %v1638 = vmul.f32 %v1309, 0.35355338
      %v1639 = vmul.f32 %v1310, 0.35355338
      %v1640 = vmul.f32 %v1311, 0.35355338
      %v1641 = vmul.f32 %v1312, 0.35355338
      %v1642 = vmul.f32 %v1313, 0.35355338
      %v1643 = vmul.f32 %v1314, 0.35355338
      %v1644 = vmul.f32 %v1315, 0.35355338
      %v1645 = vmul.f32 %v1316, 0.35355338
      %v1646 = vmul.f32 %v1317, 0.35355338
      %v1647 = vmul.f32 %v1318, 0.35355338
      %v1648 = vpack.c.bf16 %v1637, %v1636
      %v1649 = vpack.c.bf16 %v1638, %v1638
      %v1650 = vpack.c.bf16 %v1640, %v1639
      %v1651 = vpack.c.bf16 %v1641, %v1641
      %v1652 = vpack.c.bf16 %v1643, %v1642
      %v1653 = vpack.c.bf16 %v1644, %v1644
      %v1654 = vpack.c.bf16 %v1646, %v1645
      %v1655 = vpack.c.bf16 %v1647, %v1647
      %v1656 = vpack.c.bf16 %v1625, %v1624
      %v1657 = vpack.c.bf16 %v1626, %v1626
      %v1658 = vpack.c.bf16 %v1628, %v1627
      %v1659 = vpack.c.bf16 %v1629, %v1629
      %v1660 = vpack.c.bf16 %v1631, %v1630
      %v1661 = vpack.c.bf16 %v1632, %v1632
      %v1662 = vpack.c.bf16 %v1634, %v1633
      %v1663 = vpack.c.bf16 %v1635, %v1635
      %v1664 = vpack.c.bf16 %v659, %v656
      %v1665 = vpack.c.bf16 %v664, %v664
      %v1666 = vpack.c.bf16 %v675, %v673
      %v1667 = vpack.c.bf16 %v677, %v677
      %v1668 = vpack.c.bf16 %v684, %v682
      %v1669 = vpack.c.bf16 %v686, %v686
      %v1670 = vpack.c.bf16 %v693, %v691
      %v1671 = vpack.c.bf16 %v695, %v695
      %1674 = vrot.lane.b32.xlu0 %v1656, 96
      %v1675 = vpop.permute.xlu0 %1674
      %1676 = vrot.lane.b32.xlu0 %v1657, 96
      %v1677 = vpop.permute.xlu0 %1676
      %v1679 = vsel %vm699, %v1648, 0
      %v1682 = vsel %vm699, %v1649, 0
      %v1685 = vsel %vm699, %v1675, 0
      %v1688 = vsel %vm699, %v1677, 0
      %1690 = vmatprep.subr.bf16.mxu0 0
      %1691 = vmatpush1.bf16.xpose.msra.mxu0 0
      %1692 = vmatprep.subr.bf16.mxu0 0
      %1693 = vmatpush1.bf16.xpose.msra.mxu0 0
      %1694 = vmatprep.subr.bf16.mxu0 0
      %1695 = vmatpush1.bf16.xpose.msra.mxu0 0
      %1696 = vmatprep.subr.bf16.mxu0 0
      %1697 = vmatpush1.bf16.xpose.msra.mxu0 0
      %1698 = vmatprep.subr.bf16.mxu0 0
      %1699 = vmatpush1.bf16.xpose.msra.mxu0 0
      %1700 = vmatprep.subr.bf16.mxu0 0
      %1701 = vmatpush1.bf16.xpose.msra.mxu0 0
      %1702 = vmatprep.subr.bf16.mxu0 0
      %1703 = vmatpush1.bf16.xpose.msra.mxu0 %v1688
      %1704 = vmatprep.subr.bf16.mxu0 0
      %1705 = vmatpush1.bf16.xpose.msra.mxu0 %v1685
      %1706 = vmatprep.subr.bf16.mxu0 0
      %1707 = vmatpush2.bf16.xpose.msra.mxu0 0
      %1708 = vmatprep.subr.bf16.mxu0 0
      %1709 = vmatpush2.bf16.xpose.msra.mxu0 0
      %1710 = vmatprep.subr.bf16.mxu0 0
      %1711 = vmatpush2.bf16.xpose.msra.mxu0 0
      %1712 = vmatprep.subr.bf16.mxu0 0
      %1713 = vmatpush2.bf16.xpose.msra.mxu0 0
      %1714 = vmatprep.subr.bf16.mxu0 0
      %1715 = vmatpush2.bf16.xpose.msra.mxu0 0
      %1716 = vmatprep.subr.bf16.mxu0 0
      %1717 = vmatpush2.bf16.xpose.msra.mxu0 0
      %1718 = vmatprep.subr.bf16.mxu0 0
      %1719 = vmatpush2.bf16.xpose.msra.mxu0 0
      %1720 = vmatprep.subr.bf16.mxu0 0
      %1721 = vmatpush2.bf16.xpose.msra.mxu0 0
      %1722 = vmatprep.mubr.bf16.mxu0 0
      %1723 = vmatmul.mubr.bf16.gmra.mxu0 %v1679
      %v1724 = vpop.f32.mrf.mxu0
      %v1725 = vadd.f32 0.0, %v1724
      %v1726 = vpop.f32.mrf.mxu0
      %v1727 = vpop.f32.mrf.mxu0
      %v1728 = vadd.f32 0.0, %v1727
      %v1729 = vpop.f32.mrf.mxu0
      %1730 = vmatprep.mubr.bf16.mxu0 0
      %1731 = vmatmul.mubr.bf16.gmra.mxu0 %v1682
      %v1732 = vpop.f32.mrf.mxu0
      %v1733 = vadd.f32 0.0, %v1732
      %v1734 = vpop.f32.mrf.mxu0
      %v1735 = vpop.f32.mrf.mxu0
      %v1736 = vpop.f32.mrf.mxu0
      %1737 = vdwg.mxu0
      %1740 = vrot.lane.b32.xlu0 %v1658, 96
      %v1741 = vpop.permute.xlu0 %1740
      %1742 = vrot.lane.b32.xlu0 %v1659, 96
      %v1743 = vpop.permute.xlu0 %1742
      %v1745 = vsel %vm699, %v1650, 0
      %v1748 = vsel %vm699, %v1651, 0
      %v1751 = vsel %vm699, %v1741, 0
      %v1754 = vsel %vm699, %v1743, 0
      %1756 = vmatprep.subr.bf16.mxu0 0
      %1757 = vmatpush1.bf16.xpose.msra.mxu0 0
      %1758 = vmatprep.subr.bf16.mxu0 0
      %1759 = vmatpush1.bf16.xpose.msra.mxu0 0
      %1760 = vmatprep.subr.bf16.mxu0 0
      %1761 = vmatpush1.bf16.xpose.msra.mxu0 0
      %1762 = vmatprep.subr.bf16.mxu0 0
      %1763 = vmatpush1.bf16.xpose.msra.mxu0 0
      %1764 = vmatprep.subr.bf16.mxu0 0
      %1765 = vmatpush1.bf16.xpose.msra.mxu0 0
      %1766 = vmatprep.subr.bf16.mxu0 0
      %1767 = vmatpush1.bf16.xpose.msra.mxu0 0
      %1768 = vmatprep.subr.bf16.mxu0 0
      %1769 = vmatpush1.bf16.xpose.msra.mxu0 %v1754
      %1770 = vmatprep.subr.bf16.mxu0 0
      %1771 = vmatpush1.bf16.xpose.msra.mxu0 %v1751
      %1772 = vmatprep.subr.bf16.mxu0 0
      %1773 = vmatpush2.bf16.xpose.msra.mxu0 0
      %1774 = vmatprep.subr.bf16.mxu0 0
      %1775 = vmatpush2.bf16.xpose.msra.mxu0 0
      %1776 = vmatprep.subr.bf16.mxu0 0
      %1777 = vmatpush2.bf16.xpose.msra.mxu0 0
      %1778 = vmatprep.subr.bf16.mxu0 0
      %1779 = vmatpush2.bf16.xpose.msra.mxu0 0
      %1780 = vmatprep.subr.bf16.mxu0 0
      %1781 = vmatpush2.bf16.xpose.msra.mxu0 0
      %1782 = vmatprep.subr.bf16.mxu0 0
      %1783 = vmatpush2.bf16.xpose.msra.mxu0 0
      %1784 = vmatprep.subr.bf16.mxu0 0
      %1785 = vmatpush2.bf16.xpose.msra.mxu0 0
      %1786 = vmatprep.subr.bf16.mxu0 0
      %1787 = vmatpush2.bf16.xpose.msra.mxu0 0
      %1788 = vmatprep.mubr.bf16.mxu0 0
      %1789 = vmatmul.mubr.bf16.gmra.mxu0 %v1745
      %v1790 = vpop.f32.mrf.mxu0
      %v1791 = vadd.f32 0.0, %v1790
      %v1792 = vpop.f32.mrf.mxu0
      %v1793 = vpop.f32.mrf.mxu0
      %v1794 = vadd.f32 0.0, %v1793
      %v1795 = vpop.f32.mrf.mxu0
      %1796 = vmatprep.mubr.bf16.mxu0 0
      %1797 = vmatmul.mubr.bf16.gmra.mxu0 %v1748
      %v1798 = vpop.f32.mrf.mxu0
      %v1799 = vadd.f32 0.0, %v1798
      %v1800 = vpop.f32.mrf.mxu0
      %v1801 = vpop.f32.mrf.mxu0
      %v1802 = vpop.f32.mrf.mxu0
      %1803 = vdwg.mxu0
      %1806 = vrot.lane.b32.xlu0 %v1660, 96
      %v1807 = vpop.permute.xlu0 %1806
      %1808 = vrot.lane.b32.xlu0 %v1661, 96
      %v1809 = vpop.permute.xlu0 %1808
      %v1811 = vsel %vm699, %v1652, 0
      %v1814 = vsel %vm699, %v1653, 0
      %v1817 = vsel %vm699, %v1807, 0
      %v1820 = vsel %vm699, %v1809, 0
      %1822 = vmatprep.subr.bf16.mxu0 0
      %1823 = vmatpush1.bf16.xpose.msra.mxu0 0
      %1824 = vmatprep.subr.bf16.mxu0 0
      %1825 = vmatpush1.bf16.xpose.msra.mxu0 0
      %1826 = vmatprep.subr.bf16.mxu0 0
      %1827 = vmatpush1.bf16.xpose.msra.mxu0 0
      %1828 = vmatprep.subr.bf16.mxu0 0
      %1829 = vmatpush1.bf16.xpose.msra.mxu0 0
      %1830 = vmatprep.subr.bf16.mxu0 0
      %1831 = vmatpush1.bf16.xpose.msra.mxu0 0
      %1832 = vmatprep.subr.bf16.mxu0 0
      %1833 = vmatpush1.bf16.xpose.msra.mxu0 0
      %1834 = vmatprep.subr.bf16.mxu0 0
      %1835 = vmatpush1.bf16.xpose.msra.mxu0 %v1820
      %1836 = vmatprep.subr.bf16.mxu0 0
      %1837 = vmatpush1.bf16.xpose.msra.mxu0 %v1817
      %1838 = vmatprep.subr.bf16.mxu0 0
      %1839 = vmatpush2.bf16.xpose.msra.mxu0 0
      %1840 = vmatprep.subr.bf16.mxu0 0
      %1841 = vmatpush2.bf16.xpose.msra.mxu0 0
      %1842 = vmatprep.subr.bf16.mxu0 0
      %1843 = vmatpush2.bf16.xpose.msra.mxu0 0
      %1844 = vmatprep.subr.bf16.mxu0 0
      %1845 = vmatpush2.bf16.xpose.msra.mxu0 0
      %1846 = vmatprep.subr.bf16.mxu0 0
      %1847 = vmatpush2.bf16.xpose.msra.mxu0 0
      %1848 = vmatprep.subr.bf16.mxu0 0
      %1849 = vmatpush2.bf16.xpose.msra.mxu0 0
      %1850 = vmatprep.subr.bf16.mxu0 0
      %1851 = vmatpush2.bf16.xpose.msra.mxu0 0
      %1852 = vmatprep.subr.bf16.mxu0 0
      %1853 = vmatpush2.bf16.xpose.msra.mxu0 0
      %1854 = vmatprep.mubr.bf16.mxu0 0
      %1855 = vmatmul.mubr.bf16.gmra.mxu0 %v1811
      %v1856 = vpop.f32.mrf.mxu0
      %v1857 = vadd.f32 0.0, %v1856
      %v1858 = vpop.f32.mrf.mxu0
      %v1859 = vpop.f32.mrf.mxu0
      %v1860 = vadd.f32 0.0, %v1859
      %v1861 = vpop.f32.mrf.mxu0
      %1862 = vmatprep.mubr.bf16.mxu0 0
      %1863 = vmatmul.mubr.bf16.gmra.mxu0 %v1814
      %v1864 = vpop.f32.mrf.mxu0
      %v1865 = vadd.f32 0.0, %v1864
      %v1866 = vpop.f32.mrf.mxu0
      %v1867 = vpop.f32.mrf.mxu0
      %v1868 = vpop.f32.mrf.mxu0
      %1869 = vdwg.mxu0
      %1872 = vrot.lane.b32.xlu0 %v1662, 96
      %v1873 = vpop.permute.xlu0 %1872
      %1874 = vrot.lane.b32.xlu0 %v1663, 96
      %v1875 = vpop.permute.xlu0 %1874
      %v1877 = vsel %vm699, %v1654, 0
      %v1880 = vsel %vm699, %v1655, 0
      %v1883 = vsel %vm699, %v1873, 0
      %v1886 = vsel %vm699, %v1875, 0
      %1888 = vmatprep.subr.bf16.mxu0 0
      %1889 = vmatpush1.bf16.xpose.msra.mxu0 0
      %1890 = vmatprep.subr.bf16.mxu0 0
      %1891 = vmatpush1.bf16.xpose.msra.mxu0 0
      %1892 = vmatprep.subr.bf16.mxu0 0
      %1893 = vmatpush1.bf16.xpose.msra.mxu0 0
      %1894 = vmatprep.subr.bf16.mxu0 0
      %1895 = vmatpush1.bf16.xpose.msra.mxu0 0
      %1896 = vmatprep.subr.bf16.mxu0 0
      %1897 = vmatpush1.bf16.xpose.msra.mxu0 0
      %1898 = vmatprep.subr.bf16.mxu0 0
      %1899 = vmatpush1.bf16.xpose.msra.mxu0 0
      %1900 = vmatprep.subr.bf16.mxu0 0
      %1901 = vmatpush1.bf16.xpose.msra.mxu0 %v1886
      %1902 = vmatprep.subr.bf16.mxu0 0
      %1903 = vmatpush1.bf16.xpose.msra.mxu0 %v1883
      %1904 = vmatprep.subr.bf16.mxu0 0
      %1905 = vmatpush2.bf16.xpose.msra.mxu0 0
      %1906 = vmatprep.subr.bf16.mxu0 0
      %1907 = vmatpush2.bf16.xpose.msra.mxu0 0
      %1908 = vmatprep.subr.bf16.mxu0 0
      %1909 = vmatpush2.bf16.xpose.msra.mxu0 0
      %1910 = vmatprep.subr.bf16.mxu0 0
      %1911 = vmatpush2.bf16.xpose.msra.mxu0 0
      %1912 = vmatprep.subr.bf16.mxu0 0
      %1913 = vmatpush2.bf16.xpose.msra.mxu0 0
      %1914 = vmatprep.subr.bf16.mxu0 0
      %1915 = vmatpush2.bf16.xpose.msra.mxu0 0
      %1916 = vmatprep.subr.bf16.mxu0 0
      %1917 = vmatpush2.bf16.xpose.msra.mxu0 0
      %1918 = vmatprep.subr.bf16.mxu0 0
      %1919 = vmatpush2.bf16.xpose.msra.mxu0 0
      %1920 = vmatprep.mubr.bf16.mxu0 0
      %1921 = vmatmul.mubr.bf16.gmra.mxu0 %v1877
      %v1922 = vpop.f32.mrf.mxu0
      %v1923 = vadd.f32 0.0, %v1922
      %v1924 = vpop.f32.mrf.mxu0
      %v1925 = vpop.f32.mrf.mxu0
      %v1926 = vadd.f32 0.0, %v1925
      %v1927 = vpop.f32.mrf.mxu0
      %1928 = vmatprep.mubr.bf16.mxu0 0
      %1929 = vmatmul.mubr.bf16.gmra.mxu0 %v1880
      %v1930 = vpop.f32.mrf.mxu0
      %v1931 = vadd.f32 0.0, %v1930
      %v1932 = vpop.f32.mrf.mxu0
      %v1933 = vpop.f32.mrf.mxu0
      %v1934 = vpop.f32.mrf.mxu0
      %1935 = vdwg.mxu0
      %vm1936 = vcmask 195584
      %v1937 = vsel %vm1936, %v1725, -inf
      %1938 = vmax.xlane.f32.xlu0 %v1937
      %v1939 = vpop.xlane.xlu0 %1938
      %v1940 = vsel %vm1936, %v1728, -inf
      %1941 = vmax.xlane.f32.xlu0 %v1940
      %v1942 = vpop.xlane.xlu0 %1941
      %v1943 = vsel %vm1936, %v1733, -inf
      %1944 = vmax.xlane.f32.xlu0 %v1943
      %v1945 = vpop.xlane.xlu0 %1944
      %v1946 = vsel %vm1936, %v1791, -inf
      %1947 = vmax.xlane.f32.xlu0 %v1946
      %v1948 = vpop.xlane.xlu0 %1947
      %v1949 = vsel %vm1936, %v1794, -inf
      %1950 = vmax.xlane.f32.xlu0 %v1949
      %v1951 = vpop.xlane.xlu0 %1950
      %v1952 = vsel %vm1936, %v1799, -inf
      %1953 = vmax.xlane.f32.xlu0 %v1952
      %v1954 = vpop.xlane.xlu0 %1953
      %v1955 = vsel %vm1936, %v1857, -inf
      %1956 = vmax.xlane.f32.xlu0 %v1955
      %v1957 = vpop.xlane.xlu0 %1956
      %v1958 = vsel %vm1936, %v1860, -inf
      %1959 = vmax.xlane.f32.xlu0 %v1958
      %v1960 = vpop.xlane.xlu0 %1959
      %v1961 = vsel %vm1936, %v1865, -inf
      %1962 = vmax.xlane.f32.xlu0 %v1961
      %v1963 = vpop.xlane.xlu0 %1962
      %v1964 = vsel %vm1936, %v1923, -inf
      %1965 = vmax.xlane.f32.xlu0 %v1964
      %v1966 = vpop.xlane.xlu0 %1965
      %v1967 = vsel %vm1936, %v1926, -inf
      %1968 = vmax.xlane.f32.xlu0 %v1967
      %v1969 = vpop.xlane.xlu0 %1968
      %v1970 = vsel %vm1936, %v1931, -inf
      %1971 = vmax.xlane.f32.xlu0 %v1970
      %v1972 = vpop.xlane.xlu0 %1971
      %v1973 = vsub.f32 %v1725, %v1939
      %v1974 = vsub.f32 %v1728, %v1942
      %v1975 = vsub.f32 %v1733, %v1945
      %v1976 = vsub.f32 %v1791, %v1948
      %v1977 = vsub.f32 %v1794, %v1951
      %v1978 = vsub.f32 %v1799, %v1954
      %v1979 = vsub.f32 %v1857, %v1957
      %v1980 = vsub.f32 %v1860, %v1960
      %v1981 = vsub.f32 %v1865, %v1963
      %v1982 = vsub.f32 %v1923, %v1966
      %v1983 = vsub.f32 %v1926, %v1969
      %v1984 = vsub.f32 %v1931, %v1972
      %v1985 = vmul.f32 %v1973, 1.442695
      %v1986 = vpow.pop %v1985
      %v1987 = vmul.f32 %v1974, 1.442695
      %v1988 = vpow.pop %v1987
      %v1989 = vmul.f32 %v1975, 1.442695
      %v1990 = vpow.pop %v1989
      %v1991 = vmul.f32 %v1976, 1.442695
      %v1992 = vpow.pop %v1991
      %v1993 = vmul.f32 %v1977, 1.442695
      %v1994 = vpow.pop %v1993
      %v1995 = vmul.f32 %v1978, 1.442695
      %v1996 = vpow.pop %v1995
      %v1997 = vmul.f32 %v1979, 1.442695
      %v1998 = vpow.pop %v1997
      %v1999 = vmul.f32 %v1980, 1.442695
      %v2000 = vpow.pop %v1999
      %v2001 = vmul.f32 %v1981, 1.442695
      %v2002 = vpow.pop %v2001
      %v2003 = vmul.f32 %v1982, 1.442695
      %v2004 = vpow.pop %v2003
      %v2005 = vmul.f32 %v1983, 1.442695
      %v2006 = vpow.pop %v2005
      %v2007 = vmul.f32 %v1984, 1.442695
      %v2008 = vpow.pop %v2007
      %v2009 = vsel %vm1936, %v1986, 0.0
      %2010 = vadd.xlane.f32.xlu0 %v2009
      %v2011 = vpop.xlane.xlu0 %2010
      %v2012 = vsel %vm1936, %v1988, 0.0
      %2013 = vadd.xlane.f32.xlu0 %v2012
      %v2014 = vpop.xlane.xlu0 %2013
      %v2015 = vsel %vm1936, %v1990, 0.0
      %2016 = vadd.xlane.f32.xlu0 %v2015
      %v2017 = vpop.xlane.xlu0 %2016
      %v2018 = vsel %vm1936, %v1992, 0.0
      %2019 = vadd.xlane.f32.xlu0 %v2018
      %v2020 = vpop.xlane.xlu0 %2019
      %v2021 = vsel %vm1936, %v1994, 0.0
      %2022 = vadd.xlane.f32.xlu0 %v2021
      %v2023 = vpop.xlane.xlu0 %2022
      %v2024 = vsel %vm1936, %v1996, 0.0
      %2025 = vadd.xlane.f32.xlu0 %v2024
      %v2026 = vpop.xlane.xlu0 %2025
      %v2027 = vsel %vm1936, %v1998, 0.0
      %2028 = vadd.xlane.f32.xlu0 %v2027
      %v2029 = vpop.xlane.xlu0 %2028
      %v2030 = vsel %vm1936, %v2000, 0.0
      %2031 = vadd.xlane.f32.xlu0 %v2030
      %v2032 = vpop.xlane.xlu0 %2031
      %v2033 = vsel %vm1936, %v2002, 0.0
      %2034 = vadd.xlane.f32.xlu0 %v2033
      %v2035 = vpop.xlane.xlu0 %2034
      %v2036 = vsel %vm1936, %v2004, 0.0
      %2037 = vadd.xlane.f32.xlu0 %v2036
      %v2038 = vpop.xlane.xlu0 %2037
      %v2039 = vsel %vm1936, %v2006, 0.0
      %2040 = vadd.xlane.f32.xlu0 %v2039
      %v2041 = vpop.xlane.xlu0 %2040
      %v2042 = vsel %vm1936, %v2008, 0.0
      %2043 = vadd.xlane.f32.xlu0 %v2042
      %v2044 = vpop.xlane.xlu0 %2043
      %v2045 = vrcp.pop %v2011
      %v2046 = vrcp.pop %v2014
      %v2047 = vrcp.pop %v2017
      %v2048 = vrcp.pop %v2020
      %v2049 = vrcp.pop %v2023
      %v2050 = vrcp.pop %v2026
      %v2051 = vrcp.pop %v2029
      %v2052 = vrcp.pop %v2032
      %v2053 = vrcp.pop %v2035
      %v2054 = vrcp.pop %v2038
      %v2055 = vrcp.pop %v2041
      %v2056 = vrcp.pop %v2044
      %v2057 = vmul.f32 %v1986, %v2045
      %v2058 = vmul.f32 %v1988, %v2046
      %v2059 = vmul.f32 %v1990, %v2047
      %v2060 = vmul.f32 %v1992, %v2048
      %v2061 = vmul.f32 %v1994, %v2049
      %v2062 = vmul.f32 %v1996, %v2050
      %v2063 = vmul.f32 %v1998, %v2051
      %v2064 = vmul.f32 %v2000, %v2052
      %v2065 = vmul.f32 %v2002, %v2053
      %v2066 = vmul.f32 %v2004, %v2054
      %v2067 = vmul.f32 %v2006, %v2055
      %v2068 = vmul.f32 %v2008, %v2056
      %v2069 = vpack.c.bf16 %v2058, %v2057
      %v2070 = vpack.c.bf16 %v2059, %v2059
      %v2071 = vpack.c.bf16 %v2061, %v2060
      %v2072 = vpack.c.bf16 %v2062, %v2062
      %v2073 = vpack.c.bf16 %v2064, %v2063
      %v2074 = vpack.c.bf16 %v2065, %v2065
      %v2075 = vpack.c.bf16 %v2067, %v2066
      %v2076 = vpack.c.bf16 %v2068, %v2068
      %2079 = vrot.lane.b32.xlu0 %v1664, 64
      %v2080 = vpop.permute.xlu0 %2079
      %2081 = vrot.lane.b32.xlu0 %v1665, 64
      %v2082 = vpop.permute.xlu0 %2081
      %v2085 = vsel %vm1936, %v2069, 0
      %v2088 = vsel %vm1936, %v2070, 0
      %vm2090 = vcmask 1043456
      %v2092 = vsel %vm2090, %v2082, 0
      %2094 = vmatprep.subr.bf16.mxu0 0
      %2095 = vmatpush1.bf16.msra.mxu0 0
      %2096 = vmatprep.subr.bf16.mxu0 0
      %2097 = vmatpush1.bf16.msra.mxu0 0
      %2098 = vmatprep.subr.bf16.mxu0 0
      %2099 = vmatpush1.bf16.msra.mxu0 0
      %2100 = vmatprep.subr.bf16.mxu0 0
      %2101 = vmatpush1.bf16.msra.mxu0 0
      %2102 = vmatprep.subr.bf16.mxu0 0
      %2103 = vmatpush1.bf16.msra.mxu0 0
      %2104 = vmatprep.subr.bf16.mxu0 0
      %2105 = vmatpush1.bf16.msra.mxu0 0
      %2106 = vmatprep.subr.bf16.mxu0 0
      %2107 = vmatpush1.bf16.msra.mxu0 %v2092
      %2108 = vmatprep.subr.bf16.mxu0 0
      %2109 = vmatpush1.bf16.msra.mxu0 %v2080
      %2110 = vmatprep.subr.bf16.mxu0 0
      %2111 = vmatpush2.bf16.msra.mxu0 0
      %2112 = vmatprep.subr.bf16.mxu0 0
      %2113 = vmatpush2.bf16.msra.mxu0 0
      %2114 = vmatprep.subr.bf16.mxu0 0
      %2115 = vmatpush2.bf16.msra.mxu0 0
      %2116 = vmatprep.subr.bf16.mxu0 0
      %2117 = vmatpush2.bf16.msra.mxu0 0
      %2118 = vmatprep.subr.bf16.mxu0 0
      %2119 = vmatpush2.bf16.msra.mxu0 0
      %2120 = vmatprep.subr.bf16.mxu0 0
      %2121 = vmatpush2.bf16.msra.mxu0 0
      %2122 = vmatprep.subr.bf16.mxu0 0
      %2123 = vmatpush2.bf16.msra.mxu0 0
      %2124 = vmatprep.subr.bf16.mxu0 0
      %2125 = vmatpush2.bf16.msra.mxu0 0
      %2126 = vmatprep.mubr.bf16.mxu0 0
      %2127 = vmatmul.mubr.bf16.gmra.mxu0 %v2085
      %v2128 = vpop.f32.mrf.mxu0
      %v2129 = vadd.f32 0.0, %v2128
      %v2130 = vpop.f32.mrf.mxu0
      %v2131 = vpop.f32.mrf.mxu0
      %v2132 = vadd.f32 0.0, %v2131
      %v2133 = vpop.f32.mrf.mxu0
      %2134 = vmatprep.mubr.bf16.mxu0 0
      %2135 = vmatmul.mubr.bf16.gmra.mxu0 %v2088
      %v2136 = vpop.f32.mrf.mxu0
      %v2137 = vadd.f32 0.0, %v2136
      %v2138 = vpop.f32.mrf.mxu0
      %v2139 = vpop.f32.mrf.mxu0
      %v2140 = vpop.f32.mrf.mxu0
      %2141 = vdwg.mxu0
      %2144 = vrot.lane.b32.xlu0 %v1666, 64
      %v2145 = vpop.permute.xlu0 %2144
      %2146 = vrot.lane.b32.xlu0 %v1667, 64
      %v2147 = vpop.permute.xlu0 %2146
      %v2150 = vsel %vm1936, %v2071, 0
      %v2153 = vsel %vm1936, %v2072, 0
      %v2156 = vsel %vm2090, %v2147, 0
      %2158 = vmatprep.subr.bf16.mxu0 0
      %2159 = vmatpush1.bf16.msra.mxu0 0
      %2160 = vmatprep.subr.bf16.mxu0 0
      %2161 = vmatpush1.bf16.msra.mxu0 0
      %2162 = vmatprep.subr.bf16.mxu0 0
      %2163 = vmatpush1.bf16.msra.mxu0 0
      %2164 = vmatprep.subr.bf16.mxu0 0
      %2165 = vmatpush1.bf16.msra.mxu0 0
      %2166 = vmatprep.subr.bf16.mxu0 0
      %2167 = vmatpush1.bf16.msra.mxu0 0
      %2168 = vmatprep.subr.bf16.mxu0 0
      %2169 = vmatpush1.bf16.msra.mxu0 0
      %2170 = vmatprep.subr.bf16.mxu0 0
      %2171 = vmatpush1.bf16.msra.mxu0 %v2156
      %2172 = vmatprep.subr.bf16.mxu0 0
      %2173 = vmatpush1.bf16.msra.mxu0 %v2145
      %2174 = vmatprep.subr.bf16.mxu0 0
      %2175 = vmatpush2.bf16.msra.mxu0 0
      %2176 = vmatprep.subr.bf16.mxu0 0
      %2177 = vmatpush2.bf16.msra.mxu0 0
      %2178 = vmatprep.subr.bf16.mxu0 0
      %2179 = vmatpush2.bf16.msra.mxu0 0
      %2180 = vmatprep.subr.bf16.mxu0 0
      %2181 = vmatpush2.bf16.msra.mxu0 0
      %2182 = vmatprep.subr.bf16.mxu0 0
      %2183 = vmatpush2.bf16.msra.mxu0 0
      %2184 = vmatprep.subr.bf16.mxu0 0
      %2185 = vmatpush2.bf16.msra.mxu0 0
      %2186 = vmatprep.subr.bf16.mxu0 0
      %2187 = vmatpush2.bf16.msra.mxu0 0
      %2188 = vmatprep.subr.bf16.mxu0 0
      %2189 = vmatpush2.bf16.msra.mxu0 0
      %2190 = vmatprep.mubr.bf16.mxu0 0
      %2191 = vmatmul.mubr.bf16.gmra.mxu0 %v2150
      %v2192 = vpop.f32.mrf.mxu0
      %v2193 = vadd.f32 0.0, %v2192
      %v2194 = vpop.f32.mrf.mxu0
      %v2195 = vpop.f32.mrf.mxu0
      %v2196 = vadd.f32 0.0, %v2195
      %v2197 = vpop.f32.mrf.mxu0
      %2198 = vmatprep.mubr.bf16.mxu0 0
      %2199 = vmatmul.mubr.bf16.gmra.mxu0 %v2153
      %v2200 = vpop.f32.mrf.mxu0
      %v2201 = vadd.f32 0.0, %v2200
      %v2202 = vpop.f32.mrf.mxu0
      %v2203 = vpop.f32.mrf.mxu0
      %v2204 = vpop.f32.mrf.mxu0
      %2205 = vdwg.mxu0
      %2208 = vrot.lane.b32.xlu0 %v1668, 64
      %v2209 = vpop.permute.xlu0 %2208
      %2210 = vrot.lane.b32.xlu0 %v1669, 64
      %v2211 = vpop.permute.xlu0 %2210
      %v2214 = vsel %vm1936, %v2073, 0
      %v2217 = vsel %vm1936, %v2074, 0
      %v2220 = vsel %vm2090, %v2211, 0
      %2222 = vmatprep.subr.bf16.mxu0 0
      %2223 = vmatpush1.bf16.msra.mxu0 0
      %2224 = vmatprep.subr.bf16.mxu0 0
      %2225 = vmatpush1.bf16.msra.mxu0 0
      %2226 = vmatprep.subr.bf16.mxu0 0
      %2227 = vmatpush1.bf16.msra.mxu0 0
      %2228 = vmatprep.subr.bf16.mxu0 0
      %2229 = vmatpush1.bf16.msra.mxu0 0
      %2230 = vmatprep.subr.bf16.mxu0 0
      %2231 = vmatpush1.bf16.msra.mxu0 0
      %2232 = vmatprep.subr.bf16.mxu0 0
      %2233 = vmatpush1.bf16.msra.mxu0 0
      %2234 = vmatprep.subr.bf16.mxu0 0
      %2235 = vmatpush1.bf16.msra.mxu0 %v2220
      %2236 = vmatprep.subr.bf16.mxu0 0
      %2237 = vmatpush1.bf16.msra.mxu0 %v2209
      %2238 = vmatprep.subr.bf16.mxu0 0
      %2239 = vmatpush2.bf16.msra.mxu0 0
      %2240 = vmatprep.subr.bf16.mxu0 0
      %2241 = vmatpush2.bf16.msra.mxu0 0
      %2242 = vmatprep.subr.bf16.mxu0 0
      %2243 = vmatpush2.bf16.msra.mxu0 0
      %2244 = vmatprep.subr.bf16.mxu0 0
      %2245 = vmatpush2.bf16.msra.mxu0 0
      %2246 = vmatprep.subr.bf16.mxu0 0
      %2247 = vmatpush2.bf16.msra.mxu0 0
      %2248 = vmatprep.subr.bf16.mxu0 0
      %2249 = vmatpush2.bf16.msra.mxu0 0
      %2250 = vmatprep.subr.bf16.mxu0 0
      %2251 = vmatpush2.bf16.msra.mxu0 0
      %2252 = vmatprep.subr.bf16.mxu0 0
      %2253 = vmatpush2.bf16.msra.mxu0 0
      %2254 = vmatprep.mubr.bf16.mxu0 0
      %2255 = vmatmul.mubr.bf16.gmra.mxu0 %v2214
      %v2256 = vpop.f32.mrf.mxu0
      %v2257 = vadd.f32 0.0, %v2256
      %v2258 = vpop.f32.mrf.mxu0
      %v2259 = vpop.f32.mrf.mxu0
      %v2260 = vadd.f32 0.0, %v2259
      %v2261 = vpop.f32.mrf.mxu0
      %2262 = vmatprep.mubr.bf16.mxu0 0
      %2263 = vmatmul.mubr.bf16.gmra.mxu0 %v2217
      %v2264 = vpop.f32.mrf.mxu0
      %v2265 = vadd.f32 0.0, %v2264
      %v2266 = vpop.f32.mrf.mxu0
      %v2267 = vpop.f32.mrf.mxu0
      %v2268 = vpop.f32.mrf.mxu0
      %2269 = vdwg.mxu0
      %2272 = vrot.lane.b32.xlu0 %v1670, 64
      %v2273 = vpop.permute.xlu0 %2272
      %2274 = vrot.lane.b32.xlu0 %v1671, 64
      %v2275 = vpop.permute.xlu0 %2274
      %v2278 = vsel %vm1936, %v2075, 0
      %v2281 = vsel %vm1936, %v2076, 0
      %v2284 = vsel %vm2090, %v2275, 0
      %2286 = vmatprep.subr.bf16.mxu0 0
      %2287 = vmatpush1.bf16.msra.mxu0 0
      %2288 = vmatprep.subr.bf16.mxu0 0
      %2289 = vmatpush1.bf16.msra.mxu0 0
      %2290 = vmatprep.subr.bf16.mxu0 0
      %2291 = vmatpush1.bf16.msra.mxu0 0
      %2292 = vmatprep.subr.bf16.mxu0 0
      %2293 = vmatpush1.bf16.msra.mxu0 0
      %2294 = vmatprep.subr.bf16.mxu0 0
      %2295 = vmatpush1.bf16.msra.mxu0 0
      %2296 = vmatprep.subr.bf16.mxu0 0
      %2297 = vmatpush1.bf16.msra.mxu0 0
      %2298 = vmatprep.subr.bf16.mxu0 0
      %2299 = vmatpush1.bf16.msra.mxu0 %v2284
      %2300 = vmatprep.subr.bf16.mxu0 0
      %2301 = vmatpush1.bf16.msra.mxu0 %v2273
      %2302 = vmatprep.subr.bf16.mxu0 0
      %2303 = vmatpush2.bf16.msra.mxu0 0
      %2304 = vmatprep.subr.bf16.mxu0 0
      %2305 = vmatpush2.bf16.msra.mxu0 0
      %2306 = vmatprep.subr.bf16.mxu0 0
      %2307 = vmatpush2.bf16.msra.mxu0 0
      %2308 = vmatprep.subr.bf16.mxu0 0
      %2309 = vmatpush2.bf16.msra.mxu0 0
      %2310 = vmatprep.subr.bf16.mxu0 0
      %2311 = vmatpush2.bf16.msra.mxu0 0
      %2312 = vmatprep.subr.bf16.mxu0 0
      %2313 = vmatpush2.bf16.msra.mxu0 0
      %2314 = vmatprep.subr.bf16.mxu0 0
      %2315 = vmatpush2.bf16.msra.mxu0 0
      %2316 = vmatprep.subr.bf16.mxu0 0
      %2317 = vmatpush2.bf16.msra.mxu0 0
      %2318 = vmatprep.mubr.bf16.mxu0 0
      %2319 = vmatmul.mubr.bf16.gmra.mxu0 %v2278
      %v2320 = vpop.f32.mrf.mxu0
      %v2321 = vadd.f32 0.0, %v2320
      %v2322 = vpop.f32.mrf.mxu0
      %v2323 = vpop.f32.mrf.mxu0
      %v2324 = vadd.f32 0.0, %v2323
      %v2325 = vpop.f32.mrf.mxu0
      %2326 = vmatprep.mubr.bf16.mxu0 0
      %2327 = vmatmul.mubr.bf16.gmra.mxu0 %v2281
      %v2328 = vpop.f32.mrf.mxu0
      %v2329 = vadd.f32 0.0, %v2328
      %v2330 = vpop.f32.mrf.mxu0
      %v2331 = vpop.f32.mrf.mxu0
      %v2332 = vpop.f32.mrf.mxu0
      %2333 = vdwg.mxu0
      %v2334 = vpack.c.bf16 %v2132, %v2129
      %v2335 = vpack.c.bf16 %v2137, %v2137
      %v2336 = vld [vmem:[%s4] sm:$0xf]
      %v2337 = vpack.c.bf16 %v2196, %v2193
      %v2338 = vpack.c.bf16 %v2201, %v2201
      %s2339 = scalar_lea.vmem %s4, 4
      %v2340 = vld [vmem:[%s2339] sm:$0xf]
      %v2342 = vsel %vm699, %v2337, 0
      %v2345 = vsel %vm699, %v2338, 0
      %v2348 = vsel %vm2090, %v2340, 0
      %2350 = vmatprep.subr.bf16.mxu0 0
      %2351 = vmatpush1.bf16.msra.mxu0 0
      %2352 = vmatprep.subr.bf16.mxu0 0
      %2353 = vmatpush1.bf16.msra.mxu0 0
      %2354 = vmatprep.subr.bf16.mxu0 0
      %2355 = vmatpush1.bf16.msra.mxu0 0
      %2356 = vmatprep.subr.bf16.mxu0 0
      %2357 = vmatpush1.bf16.msra.mxu0 0
      %2358 = vmatprep.subr.bf16.mxu0 0
      %2359 = vmatpush1.bf16.msra.mxu0 0
      %2360 = vmatprep.subr.bf16.mxu0 0
      %2361 = vmatpush1.bf16.msra.mxu0 0
      %2362 = vmatprep.subr.bf16.mxu0 0
      %2363 = vmatpush1.bf16.msra.mxu0 0
      %2364 = vmatprep.subr.bf16.mxu0 0
      %2365 = vmatpush1.bf16.msra.mxu0 %v2348
      %2366 = vmatprep.subr.bf16.mxu0 0
      %2367 = vmatpush2.bf16.msra.mxu0 0
      %2368 = vmatprep.subr.bf16.mxu0 0
      %2369 = vmatpush2.bf16.msra.mxu0 0
      %2370 = vmatprep.subr.bf16.mxu0 0
      %2371 = vmatpush2.bf16.msra.mxu0 0
      %2372 = vmatprep.subr.bf16.mxu0 0
      %2373 = vmatpush2.bf16.msra.mxu0 0
      %2374 = vmatprep.subr.bf16.mxu0 0
      %2375 = vmatpush2.bf16.msra.mxu0 0
      %2376 = vmatprep.subr.bf16.mxu0 0
      %2377 = vmatpush2.bf16.msra.mxu0 0
      %2378 = vmatprep.subr.bf16.mxu0 0
      %2379 = vmatpush2.bf16.msra.mxu0 0
      %2380 = vmatprep.subr.bf16.mxu0 0
      %2381 = vmatpush2.bf16.msra.mxu0 0
      %2382 = vmatprep.mubr.bf16.mxu0 0
      %2383 = vmatmul.mubr.bf16.gmra.mxu0 %v2342
      %v2384 = vpop.f32.mrf.mxu0
      %v2385 = vadd.f32 0.0, %v2384
      %v2386 = vpop.f32.mrf.mxu0
      %v2387 = vpop.f32.mrf.mxu0
      %v2388 = vadd.f32 0.0, %v2387
      %v2389 = vpop.f32.mrf.mxu0
      %2390 = vmatprep.mubr.bf16.mxu0 0
      %2391 = vmatmul.mubr.bf16.gmra.mxu0 %v2345
      %v2392 = vpop.f32.mrf.mxu0
      %v2393 = vadd.f32 0.0, %v2392
      %v2394 = vpop.f32.mrf.mxu0
      %v2395 = vpop.f32.mrf.mxu0
      %v2396 = vpop.f32.mrf.mxu0
      %2397 = vdwg.mxu0
      %v2399 = vsel %vm699, %v2334, 0
      %v2402 = vsel %vm699, %v2335, 0
      %v2405 = vsel %vm2090, %v2336, 0
      %2407 = vmatprep.subr.bf16.mxu0 0
      %2408 = vmatpush1.bf16.msra.mxu0 0
      %2409 = vmatprep.subr.bf16.mxu0 0
      %2410 = vmatpush1.bf16.msra.mxu0 0
      %2411 = vmatprep.subr.bf16.mxu0 0
      %2412 = vmatpush1.bf16.msra.mxu0 0
      %2413 = vmatprep.subr.bf16.mxu0 0
      %2414 = vmatpush1.bf16.msra.mxu0 0
      %2415 = vmatprep.subr.bf16.mxu0 0
      %2416 = vmatpush1.bf16.msra.mxu0 0
      %2417 = vmatprep.subr.bf16.mxu0 0
      %2418 = vmatpush1.bf16.msra.mxu0 0
      %2419 = vmatprep.subr.bf16.mxu0 0
      %2420 = vmatpush1.bf16.msra.mxu0 0
      %2421 = vmatprep.subr.bf16.mxu0 0
      %2422 = vmatpush1.bf16.msra.mxu0 %v2405
      %2423 = vmatprep.subr.bf16.mxu0 0
      %2424 = vmatpush2.bf16.msra.mxu0 0
      %2425 = vmatprep.subr.bf16.mxu0 0
      %2426 = vmatpush2.bf16.msra.mxu0 0
      %2427 = vmatprep.subr.bf16.mxu0 0
      %2428 = vmatpush2.bf16.msra.mxu0 0
      %2429 = vmatprep.subr.bf16.mxu0 0
      %2430 = vmatpush2.bf16.msra.mxu0 0
      %2431 = vmatprep.subr.bf16.mxu0 0
      %2432 = vmatpush2.bf16.msra.mxu0 0
      %2433 = vmatprep.subr.bf16.mxu0 0
      %2434 = vmatpush2.bf16.msra.mxu0 0
      %2435 = vmatprep.subr.bf16.mxu0 0
      %2436 = vmatpush2.bf16.msra.mxu0 0
      %2437 = vmatprep.subr.bf16.mxu0 0
      %2438 = vmatpush2.bf16.msra.mxu0 0
      %2439 = vmatprep.mubr.bf16.mxu0 0
      %2440 = vmatmul.mubr.bf16.gmra.mxu0 %v2399
      %v2441 = vpop.f32.mrf.mxu0
      %v2442 = vadd.f32 %v2385, %v2441
      %v2443 = vpop.f32.mrf.mxu0
      %v2444 = vpop.f32.mrf.mxu0
      %v2445 = vadd.f32 %v2388, %v2444
      %v2446 = vpop.f32.mrf.mxu0
      %2447 = vmatprep.mubr.bf16.mxu0 0
      %2448 = vmatmul.mubr.bf16.gmra.mxu0 %v2402
      %v2449 = vpop.f32.mrf.mxu0
      %v2450 = vadd.f32 %v2393, %v2449
      %v2451 = vpop.f32.mrf.mxu0
      %v2452 = vpop.f32.mrf.mxu0
      %v2453 = vpop.f32.mrf.mxu0
      %2454 = vdwg.mxu0
      %v2455 = vpack.c.bf16 %v2260, %v2257
      %v2456 = vpack.c.bf16 %v2265, %v2265
      %s2457 = scalar_lea.vmem %s4, 8
      %v2458 = vld [vmem:[%s2457] sm:$0xf]
      %v2460 = vsel %vm699, %v2455, 0
      %v2463 = vsel %vm699, %v2456, 0
      %v2466 = vsel %vm2090, %v2458, 0
      %2468 = vmatprep.subr.bf16.mxu0 0
      %2469 = vmatpush1.bf16.msra.mxu0 0
      %2470 = vmatprep.subr.bf16.mxu0 0
      %2471 = vmatpush1.bf16.msra.mxu0 0
      %2472 = vmatprep.subr.bf16.mxu0 0
      %2473 = vmatpush1.bf16.msra.mxu0 0
      %2474 = vmatprep.subr.bf16.mxu0 0
      %2475 = vmatpush1.bf16.msra.mxu0 0
      %2476 = vmatprep.subr.bf16.mxu0 0
      %2477 = vmatpush1.bf16.msra.mxu0 0
      %2478 = vmatprep.subr.bf16.mxu0 0
      %2479 = vmatpush1.bf16.msra.mxu0 0
      %2480 = vmatprep.subr.bf16.mxu0 0
      %2481 = vmatpush1.bf16.msra.mxu0 0
      %2482 = vmatprep.subr.bf16.mxu0 0
      %2483 = vmatpush1.bf16.msra.mxu0 %v2466
      %2484 = vmatprep.subr.bf16.mxu0 0
      %2485 = vmatpush2.bf16.msra.mxu0 0
      %2486 = vmatprep.subr.bf16.mxu0 0
      %2487 = vmatpush2.bf16.msra.mxu0 0
      %2488 = vmatprep.subr.bf16.mxu0 0
      %2489 = vmatpush2.bf16.msra.mxu0 0
      %2490 = vmatprep.subr.bf16.mxu0 0
      %2491 = vmatpush2.bf16.msra.mxu0 0
      %2492 = vmatprep.subr.bf16.mxu0 0
      %2493 = vmatpush2.bf16.msra.mxu0 0
      %2494 = vmatprep.subr.bf16.mxu0 0
      %2495 = vmatpush2.bf16.msra.mxu0 0
      %2496 = vmatprep.subr.bf16.mxu0 0
      %2497 = vmatpush2.bf16.msra.mxu0 0
      %2498 = vmatprep.subr.bf16.mxu0 0
      %2499 = vmatpush2.bf16.msra.mxu0 0
      %2500 = vmatprep.mubr.bf16.mxu0 0
      %2501 = vmatmul.mubr.bf16.gmra.mxu0 %v2460
      %v2502 = vpop.f32.mrf.mxu0
      %v2503 = vadd.f32 0.0, %v2502
      %v2504 = vpop.f32.mrf.mxu0
      %v2505 = vpop.f32.mrf.mxu0
      %v2506 = vadd.f32 0.0, %v2505
      %v2507 = vpop.f32.mrf.mxu0
      %2508 = vmatprep.mubr.bf16.mxu0 0
      %2509 = vmatmul.mubr.bf16.gmra.mxu0 %v2463
      %v2510 = vpop.f32.mrf.mxu0
      %v2511 = vadd.f32 0.0, %v2510
      %v2512 = vpop.f32.mrf.mxu0
      %v2513 = vpop.f32.mrf.mxu0
      %v2514 = vpop.f32.mrf.mxu0
      %2515 = vdwg.mxu0
      %v2516 = vadd.f32 %v2442, %v2503
      %v2517 = vadd.f32 %v2445, %v2506
      %v2518 = vadd.f32 %v2450, %v2511
      %v2519 = vpack.c.bf16 %v2324, %v2321
      %v2520 = vpack.c.bf16 %v2329, %v2329
      %s2521 = scalar_lea.vmem %s4, 12
      %v2522 = vld [vmem:[%s2521] sm:$0xf]
      %v2524 = vsel %vm699, %v2519, 0
      %v2527 = vsel %vm699, %v2520, 0
      %v2530 = vsel %vm2090, %v2522, 0
      %2532 = vmatprep.subr.bf16.mxu0 0
      %2533 = vmatpush1.bf16.msra.mxu0 0
      %2534 = vmatprep.subr.bf16.mxu0 0
      %2535 = vmatpush1.bf16.msra.mxu0 0
      %2536 = vmatprep.subr.bf16.mxu0 0
      %2537 = vmatpush1.bf16.msra.mxu0 0
      %2538 = vmatprep.subr.bf16.mxu0 0
      %2539 = vmatpush1.bf16.msra.mxu0 0
      %2540 = vmatprep.subr.bf16.mxu0 0
      %2541 = vmatpush1.bf16.msra.mxu0 0
      %2542 = vmatprep.subr.bf16.mxu0 0
      %2543 = vmatpush1.bf16.msra.mxu0 0
      %2544 = vmatprep.subr.bf16.mxu0 0
      %2545 = vmatpush1.bf16.msra.mxu0 0
      %2546 = vmatprep.subr.bf16.mxu0 0
      %2547 = vmatpush1.bf16.msra.mxu0 %v2530
      %2548 = vmatprep.subr.bf16.mxu0 0
      %2549 = vmatpush2.bf16.msra.mxu0 0
      %2550 = vmatprep.subr.bf16.mxu0 0
      %2551 = vmatpush2.bf16.msra.mxu0 0
      %2552 = vmatprep.subr.bf16.mxu0 0
      %2553 = vmatpush2.bf16.msra.mxu0 0
      %2554 = vmatprep.subr.bf16.mxu0 0
      %2555 = vmatpush2.bf16.msra.mxu0 0
      %2556 = vmatprep.subr.bf16.mxu0 0
      %2557 = vmatpush2.bf16.msra.mxu0 0
      %2558 = vmatprep.subr.bf16.mxu0 0
      %2559 = vmatpush2.bf16.msra.mxu0 0
      %2560 = vmatprep.subr.bf16.mxu0 0
      %2561 = vmatpush2.bf16.msra.mxu0 0
      %2562 = vmatprep.subr.bf16.mxu0 0
      %2563 = vmatpush2.bf16.msra.mxu0 0
      %2564 = vmatprep.mubr.bf16.mxu0 0
      %2565 = vmatmul.mubr.bf16.gmra.mxu0 %v2524
      %v2566 = vpop.f32.mrf.mxu0
      %v2567 = vadd.f32 0.0, %v2566
      %v2568 = vpop.f32.mrf.mxu0
      %v2569 = vpop.f32.mrf.mxu0
      %v2570 = vadd.f32 0.0, %v2569
      %v2571 = vpop.f32.mrf.mxu0
      %2572 = vmatprep.mubr.bf16.mxu0 0
      %2573 = vmatmul.mubr.bf16.gmra.mxu0 %v2527
      %v2574 = vpop.f32.mrf.mxu0
      %v2575 = vadd.f32 0.0, %v2574
      %v2576 = vpop.f32.mrf.mxu0
      %v2577 = vpop.f32.mrf.mxu0
      %v2578 = vpop.f32.mrf.mxu0
      %2579 = vdwg.mxu0
      %v2580 = vadd.f32 %v2516, %v2567
      %v2581 = vadd.f32 %v2517, %v2570
      %v2582 = vadd.f32 %v2518, %v2575
      %v2583 = vld [vmem:[%s5] sm:$0x1]
      %v2585 = vlaneseq
      %v2586 = vshrl.u32 %v2585, 7
      %v2587 = vsub.s32 0, %v2586
      %v2588 = vrot.slane %v2583, %v2587
      %v2590 = vadd.f32 %v2580, %v2588
      %v2591 = vadd.f32 %v2581, %v2588
      %v2592 = vadd.f32 %v2582, %v2588
      %v2593 = vmul.f32 %v2590, %v504
      %v2594 = vmul.f32 %v2591, %v505
      %v2595 = vmul.f32 %v2592, %v506
      %v2596 = vadd.f32 %v462, %v2593
      %v2597 = vadd.f32 %v463, %v2594
      %v2598 = vadd.f32 %v464, %v2595
      %v2599 = vsel %vm540, %v2596, 0.0
      %2600 = vadd.xlane.f32.xlu0 %v2599
      %v2601 = vpop.xlane.xlu0 %2600
      %v2602 = vsel %vm540, %v2597, 0.0
      %2603 = vadd.xlane.f32.xlu0 %v2602
      %v2604 = vpop.xlane.xlu0 %2603
      %v2605 = vsel %vm540, %v2598, 0.0
      %2606 = vadd.xlane.f32.xlu0 %v2605
      %v2607 = vpop.xlane.xlu0 %2606
      %v2608 = vmul.f32 %v2601, %v550
      %v2609 = vmul.f32 %v2604, %v550
      %v2610 = vmul.f32 %v2607, %v550
      %v2611 = vsub.f32 %v2596, %v2608
      %v2612 = vsub.f32 %v2597, %v2609
      %v2613 = vsub.f32 %v2598, %v2610
      %v2614 = vmul.f32 %v2611, %v2611
      %v2615 = vmul.f32 %v2612, %v2612
      %v2616 = vmul.f32 %v2613, %v2613
      %v2617 = vsel %vm540, %v2614, 0.0
      %2618 = vadd.xlane.f32.xlu0 %v2617
      %v2619 = vpop.xlane.xlu0 %2618
      %v2620 = vsel %vm540, %v2615, 0.0
      %2621 = vadd.xlane.f32.xlu0 %v2620
      %v2622 = vpop.xlane.xlu0 %2621
      %v2623 = vsel %vm540, %v2616, 0.0
      %2624 = vadd.xlane.f32.xlu0 %v2623
      %v2625 = vpop.xlane.xlu0 %2624
      %v2626 = vmul.f32 %v2619, %v550
      %v2627 = vmul.f32 %v2622, %v550
      %v2628 = vmul.f32 %v2625, %v550
      %v2629 = vadd.f32 %v2626, 1e-05
      %v2630 = vadd.f32 %v2627, 1e-05
      %v2631 = vadd.f32 %v2628, 1e-05
      %v2632 = vrsqrt.pop %v2629
      %v2633 = vrsqrt.pop %v2630
      %v2634 = vrsqrt.pop %v2631
      %v2635 = vmul.f32 %v2611, %v2632
      %v2636 = vmul.f32 %v2612, %v2633
      %v2637 = vmul.f32 %v2613, %v2634
      %v2638 = vadd.f32 %v526, 1.0
      %v2639 = vadd.f32 %v527, 1.0
      %v2640 = vadd.f32 %v528, 1.0
      %v2641 = vmul.f32 %v2635, %v2638
      %v2642 = vmul.f32 %v2636, %v2639
      %v2643 = vmul.f32 %v2637, %v2640
      %v2644 = vadd.f32 %v2641, %v515
      %v2645 = vadd.f32 %v2642, %v516
      %v2646 = vadd.f32 %v2643, %v517
      %v2647 = vld [vmem:[%s9] sm:$0xf]
      %v2648 = vld [vmem:[%s9 + $0x4] sm:$0xf]
      %v2649 = vld [vmem:[%s9 + $0x8] sm:$0xf]
      %v2650 = vld [vmem:[%s9 + $0xc] sm:$0xf]
      %v2651 = vpack.c.bf16 %v2645, %v2644
      %v2652 = vpack.c.bf16 %v2646, %v2646
      %v2653 = vld [vmem:[%s10] sm:$0x1]
      %v2655 = vlaneseq
      %v2656 = vshrl.u32 %v2655, 7
      %v2657 = vsub.s32 0, %v2656
      %v2658 = vrot.slane %v2653, %v2657
      %v2664 = vunpack.c.l.b16 %v2647
      %v2665 = vunpack.c.l.b16 %v2648
      %v2666 = vunpack.c.l.b16 %v2649
      %v2667 = vunpack.c.l.b16 %v2650
      %v2668 = vpack.c.b16 %v2665, %v2664
      %v2669 = vpack.c.b16 %v2667, %v2666
      %v2673 = vsel %vm540, %v2651, 0
      %v2676 = vsel %vm540, %v2652, 0
      %2678 = vmatprep.subr.bf16.mxu0 0
      %2679 = vmatpush1.bf16.msra.mxu0 0
      %2680 = vmatprep.subr.bf16.mxu0 0
      %2681 = vmatpush1.bf16.msra.mxu0 0
      %2682 = vmatprep.subr.bf16.mxu0 0
      %2683 = vmatpush1.bf16.msra.mxu0 0
      %2684 = vmatprep.subr.bf16.mxu0 0
      %2685 = vmatpush1.bf16.msra.mxu0 0
      %2686 = vmatprep.subr.bf16.mxu0 0
      %2687 = vmatpush1.bf16.msra.mxu0 0
      %2688 = vmatprep.subr.bf16.mxu0 0
      %2689 = vmatpush1.bf16.msra.mxu0 0
      %2690 = vmatprep.subr.bf16.mxu0 0
      %2691 = vmatpush1.bf16.msra.mxu0 %v2669
      %2692 = vmatprep.subr.bf16.mxu0 0
      %2693 = vmatpush1.bf16.msra.mxu0 %v2668
      %2694 = vmatprep.subr.bf16.mxu0 0
      %2695 = vmatpush2.bf16.msra.mxu0 0
      %2696 = vmatprep.subr.bf16.mxu0 0
      %2697 = vmatpush2.bf16.msra.mxu0 0
      %2698 = vmatprep.subr.bf16.mxu0 0
      %2699 = vmatpush2.bf16.msra.mxu0 0
      %2700 = vmatprep.subr.bf16.mxu0 0
      %2701 = vmatpush2.bf16.msra.mxu0 0
      %2702 = vmatprep.subr.bf16.mxu0 0
      %2703 = vmatpush2.bf16.msra.mxu0 0
      %2704 = vmatprep.subr.bf16.mxu0 0
      %2705 = vmatpush2.bf16.msra.mxu0 0
      %2706 = vmatprep.subr.bf16.mxu0 0
      %2707 = vmatpush2.bf16.msra.mxu0 0
      %2708 = vmatprep.subr.bf16.mxu0 0
      %2709 = vmatpush2.bf16.msra.mxu0 0
      %2710 = vmatprep.mubr.bf16.mxu0 0
      %2711 = vmatmul.mubr.bf16.gmra.mxu0 %v2673
      %v2712 = vpop.f32.mrf.mxu0
      %v2713 = vadd.f32 %v2658, %v2712
      %v2714 = vpop.f32.mrf.mxu0
      %v2715 = vpop.f32.mrf.mxu0
      %v2716 = vadd.f32 %v2658, %v2715
      %v2717 = vpop.f32.mrf.mxu0
      %2718 = vmatprep.mubr.bf16.mxu0 0
      %2719 = vmatmul.mubr.bf16.gmra.mxu0 %v2676
      %v2720 = vpop.f32.mrf.mxu0
      %v2721 = vadd.f32 %v2658, %v2720
      %v2722 = vpop.f32.mrf.mxu0
      %v2723 = vpop.f32.mrf.mxu0
      %v2724 = vpop.f32.mrf.mxu0
      %2725 = vdwg.mxu0
      %v2726 = vmul.f32 %v2713, %v2713
      %v2727 = vmul.f32 %v2716, %v2716
      %v2728 = vmul.f32 %v2721, %v2721
      %v2729 = vmul.f32 %v2713, %v2726
      %v2730 = vmul.f32 %v2716, %v2727
      %v2731 = vmul.f32 %v2721, %v2728
      %v2732 = vmul.f32 %v2729, 0.044715
      %v2733 = vmul.f32 %v2730, 0.044715
      %v2734 = vmul.f32 %v2731, 0.044715
      %v2735 = vadd.f32 %v2713, %v2732
      %v2736 = vadd.f32 %v2716, %v2733
      %v2737 = vadd.f32 %v2721, %v2734
      %v2738 = vmul.f32 %v2735, 0.7978846
      %v2739 = vmul.f32 %v2736, 0.7978846
      %v2740 = vmul.f32 %v2737, 0.7978846
      %v2741 = vtanh.pop %v2738
      %v2742 = vtanh.pop %v2739
      %v2743 = vtanh.pop %v2740
      %v2744 = vadd.f32 %v2741, 1.0
      %v2745 = vadd.f32 %v2742, 1.0
      %v2746 = vadd.f32 %v2743, 1.0
      %v2747 = vmul.f32 %v2744, 0.5
      %v2748 = vmul.f32 %v2745, 0.5
      %v2749 = vmul.f32 %v2746, 0.5
      %v2750 = vmul.f32 %v2713, %v2747
      %v2751 = vmul.f32 %v2716, %v2748
      %v2752 = vmul.f32 %v2721, %v2749
      %v2753 = vld [vmem:[%s11] sm:$0xf]
      %v2754 = vld [vmem:[%s11 + $0x4] sm:$0xf]
      %v2755 = vld [vmem:[%s11 + $0x8] sm:$0xf]
      %v2756 = vld [vmem:[%s11 + $0xc] sm:$0xf]
      %v2757 = vld [vmem:[%s11 + $0x10] sm:$0xf]
      %v2758 = vld [vmem:[%s11 + $0x14] sm:$0xf]
      %v2759 = vld [vmem:[%s11 + $0x18] sm:$0xf]
      %v2760 = vld [vmem:[%s11 + $0x1c] sm:$0xf]
      %v2761 = vld [vmem:[%s11 + $0x20] sm:$0xf]
      %v2762 = vld [vmem:[%s11 + $0x24] sm:$0xf]
      %v2763 = vld [vmem:[%s11 + $0x28] sm:$0xf]
      %v2764 = vld [vmem:[%s11 + $0x2c] sm:$0xf]
      %v2765 = vld [vmem:[%s11 + $0x30] sm:$0xf]
      %v2766 = vld [vmem:[%s11 + $0x34] sm:$0xf]
      %v2767 = vld [vmem:[%s11 + $0x38] sm:$0xf]
      %v2768 = vld [vmem:[%s11 + $0x3c] sm:$0xf]
      %v2769 = vpack.c.bf16 %v2751, %v2750
      %v2770 = vpack.c.bf16 %v2752, %v2752
      %v2771 = vld [vmem:[%s12] sm:$0x1]
      %v2773 = vlaneseq
      %v2774 = vshrl.u32 %v2773, 7
      %v2775 = vsub.s32 0, %v2774
      %v2776 = vrot.slane %v2771, %v2775
      %v2794 = vunpack.c.l.b16 %v2753
      %v2795 = vunpack.c.l.b16 %v2754
      %v2796 = vunpack.c.l.b16 %v2755
      %v2797 = vunpack.c.l.b16 %v2756
      %v2798 = vunpack.c.l.b16 %v2757
      %v2799 = vunpack.c.l.b16 %v2758
      %v2800 = vunpack.c.l.b16 %v2759
      %v2801 = vunpack.c.l.b16 %v2760
      %v2802 = vunpack.c.l.b16 %v2761
      %v2803 = vunpack.c.l.b16 %v2762
      %v2804 = vunpack.c.l.b16 %v2763
      %v2805 = vunpack.c.l.b16 %v2764
      %v2806 = vunpack.c.l.b16 %v2765
      %v2807 = vunpack.c.l.b16 %v2766
      %v2808 = vunpack.c.l.b16 %v2767
      %v2809 = vunpack.c.l.b16 %v2768
      %v2810 = vpack.c.b16 %v2795, %v2794
      %v2811 = vpack.c.b16 %v2797, %v2796
      %v2812 = vpack.c.b16 %v2799, %v2798
      %v2813 = vpack.c.b16 %v2801, %v2800
      %v2814 = vpack.c.b16 %v2803, %v2802
      %v2815 = vpack.c.b16 %v2805, %v2804
      %v2816 = vpack.c.b16 %v2807, %v2806
      %v2817 = vpack.c.b16 %v2809, %v2808
      %2826 = vmatprep.subr.bf16.mxu0 0
      %2827 = vmatpush1.bf16.msra.mxu0 %v2817
      %2828 = vmatprep.subr.bf16.mxu0 0
      %2829 = vmatpush1.bf16.msra.mxu0 %v2816
      %2830 = vmatprep.subr.bf16.mxu0 0
      %2831 = vmatpush1.bf16.msra.mxu0 %v2815
      %2832 = vmatprep.subr.bf16.mxu0 0
      %2833 = vmatpush1.bf16.msra.mxu0 %v2814
      %2834 = vmatprep.subr.bf16.mxu0 0
      %2835 = vmatpush1.bf16.msra.mxu0 %v2813
      %2836 = vmatprep.subr.bf16.mxu0 0
      %2837 = vmatpush1.bf16.msra.mxu0 %v2812
      %2838 = vmatprep.subr.bf16.mxu0 0
      %2839 = vmatpush1.bf16.msra.mxu0 %v2811
      %2840 = vmatprep.subr.bf16.mxu0 0
      %2841 = vmatpush1.bf16.msra.mxu0 %v2810
      %2842 = vmatprep.subr.bf16.mxu0 0
      %2843 = vmatpush2.bf16.msra.mxu0 0
      %2844 = vmatprep.subr.bf16.mxu0 0
      %2845 = vmatpush2.bf16.msra.mxu0 0
      %2846 = vmatprep.subr.bf16.mxu0 0
      %2847 = vmatpush2.bf16.msra.mxu0 0
      %2848 = vmatprep.subr.bf16.mxu0 0
      %2849 = vmatpush2.bf16.msra.mxu0 0
      %2850 = vmatprep.subr.bf16.mxu0 0
      %2851 = vmatpush2.bf16.msra.mxu0 0
      %2852 = vmatprep.subr.bf16.mxu0 0
      %2853 = vmatpush2.bf16.msra.mxu0 0
      %2854 = vmatprep.subr.bf16.mxu0 0
      %2855 = vmatpush2.bf16.msra.mxu0 0
      %2856 = vmatprep.subr.bf16.mxu0 0
      %2857 = vmatpush2.bf16.msra.mxu0 0
      %2858 = vmatprep.mubr.bf16.mxu0 0
      %2859 = vmatmul.mubr.bf16.gmra.mxu0 %v2769
      %v2860 = vpop.f32.mrf.mxu0
      %v2861 = vadd.f32 %v2776, %v2860
      %v2862 = vpop.f32.mrf.mxu0
      %v2863 = vpop.f32.mrf.mxu0
      %v2864 = vadd.f32 %v2776, %v2863
      %v2865 = vpop.f32.mrf.mxu0
      %2866 = vmatprep.mubr.bf16.mxu0 0
      %2867 = vmatmul.mubr.bf16.gmra.mxu0 %v2770
      %v2868 = vpop.f32.mrf.mxu0
      %v2869 = vadd.f32 %v2776, %v2868
      %v2870 = vpop.f32.mrf.mxu0
      %v2871 = vpop.f32.mrf.mxu0
      %v2872 = vpop.f32.mrf.mxu0
      %2873 = vdwg.mxu0
      %v2874 = vmul.f32 %v2861, %v537
      %v2875 = vmul.f32 %v2864, %v538
      %v2876 = vmul.f32 %v2869, %v539
      %v2877 = vadd.f32 %v2596, %v2874
      %v2878 = vadd.f32 %v2597, %v2875
      %v2879 = vadd.f32 %v2598, %v2876
      %2880 = vst.msk [vmem:[%s460] sm:$0xff] %vm540, %v2877
      %2881 = vst.msk [vmem:[%s460 + $0x8] sm:$0xff] %vm540, %v2878
      %2882 = vst.msk [vmem:[%s460 + $0x10] sm:$0xff] %vm540, %v2879
      %p2883 = scmp.lt.s32.totalorder %s24, 1
      %s2884 = scalar_select %p2883, %s24, 1
      %s2885 = smul.addr %s2884, 3
      %s2886 = smul.addr %s2885, 8
      %s2887 = scalar_lea.vmem %s13, %s2886
      // Predicated region
      $region73: #{transformer_block.1} parent=71 // pred_check
        %p2888 = pneg %p325
      $region74: #{transformer_block.1} parent=71 // pred_check_branch
        %2890 = sbr.rel (%p2888) target = $region76
      $region75: #{transformer_block.1} parent=71 // pred_region
        _
      $region76: #{transformer_block.1} parent=71 // pred_fallthru
        _
    $region72: #{transformer_block.1} parent=5 // pred_fallthru
      _
    %p2891 = scmp.le.s32.totalorder 2, %s19
    // Predicated region
    $region77: #{transformer_block.1} parent=5 // pred_check
      %p2892 = pneg %p2891
    $region78: #{transformer_block.1} parent=5 // pred_check_branch
      %2894 = sbr.rel (%p2892) target = $region80
    $region79: #{transformer_block.1} parent=5 // pred_region
      %s2895 = ssub.s32 %s19, 2
      // Predicated region
      $region81: #{transformer_block.1} parent=79 // pred_check
        %p2896 = pneg %p331
      $region82: #{transformer_block.1} parent=79 // pred_check_branch
        %2898 = sbr.rel (%p2896) target = $region84
      $region83: #{transformer_block.1} parent=79 // pred_region
        %p2899 = scmp.lt.s32.totalorder %s25, 1
        %s2900 = scalar_select %p2899, %s25, 1
        %s2901 = smul.addr %s2900, 3
        %s2902 = smul.addr %s2901, 8
        %s2903 = scalar_lea.vmem %s13, %s2902
      $region84: #{transformer_block.1} parent=79 // pred_fallthru
        _
    $region80: #{transformer_block.1} parent=5 // pred_fallthru
      _
  $region6: #{transformer_block.1} parent=0 // loop_footer
    %s23 = sadd.s32 1, %s19
  $region7: #{transformer_block.1} parent=0 // loop_footer_branch
    %18 = sbr.rel target = $region3
  $region8: #{transformer_block.1} parent=0 // loop_exit
    _

</llo_original>
